<compile_context>
chip_gen: v7x
topology: tpu7x:2x2x1
jax: 0.10.0
libtpu: 0.0.40
codegen_flags: <defaults>
</compile_context>

<pallas_src>
import functools
import math

import numpy as np
import jax
import jax.numpy as jnp
from jax.experimental import pallas as pl
from jax.experimental.pallas import tpu as pltpu


def _bessel_kernel(x_ref, sel_ref, roots_ref, o_ref, *,
                   inv_c, eps, scale, apply_scale, max_cutoff, normalize):
    # x_ref:     (TILE_R, F)       lane-dense folded input block (f32)
    # sel_ref:   (3*F, F*dim)      bf16 0/1 selection matrix, stacked 3x along K
    # roots_ref: (1, F*dim)        f32 interleaved bessel-roots row
    # o_ref:     (TILE_R, F*dim)   lane-dense output block (row-major == (M, dim))
    x = x_ref[...].astype(jnp.float32)                               # (T, F)
    x_div_c = jnp.maximum(x * jnp.float32(inv_c), jnp.float32(eps))

    # Exact 3-chunk bf16 split of the f32 values (narrow width, cheap VPU work).
    x0 = x_div_c.astype(jnp.bfloat16)
    r1 = x_div_c - x0.astype(jnp.float32)                            # exact (Sterbenz)
    x1 = r1.astype(jnp.bfloat16)
    x2 = (r1 - x1.astype(jnp.float32)).astype(jnp.bfloat16)
    lhs = jnp.concatenate([x0, x1, x2], axis=1)                      # (T, 3F) bf16

    # Single bf16 MXU matmul.  sel is exact 0/1 in bf16, so
    #   xw[r, f*dim + d] == x_div_c[r, f]   (reconstructed in the f32 accumulator).
    xw = jnp.dot(lhs, sel_ref[...], preferred_element_type=jnp.float32)  # (T, F*dim)

    # Exact f32 roots multiply on the VPU (k*pi never rides the MXU).
    arg = xw * roots_ref[...]                                        # (T, F*dim)

    # Wide coefficient derived in-register (no second matmul / wide temporary).
    denom = arg if normalize else xw
    coeff = pl.reciprocal(denom, approx=False)                       # exact; EUP-heavy
    if apply_scale:
        coeff = coeff * jnp.float32(scale)

    out = jnp.sin(arg) * coeff
    if max_cutoff:
        out = jnp.where(xw < jnp.float32(1.0), out, jnp.float32(0.0))
    o_ref[...] = out.astype(o_ref.dtype)


def _round_up(a, b):
    return ((a + b - 1) // b) * b


def _default_fold():
    # 256-lane fold matches the 256-wide MXU on v6e/v7x; 128 on v5e and earlier.
    try:
        kind = jax.devices()[0].device_kind.lower()
    except Exception:
        return 128
    if any(t in kind for t in ("v2", "v3", "v4", "v5")):
        return 128
    return 256


def bessel_basis_encoder(x, *, dim, max_val, min_val=0.0, max_cutoff=False,
                         dimensionless=True, normalize=False, eps=1e-3,
                         fold=None, tile_r=256, out_dtype=jnp.float32):
    if float(min_val) != 0.0:
        raise NotImplementedError("min_val != 0.0 not supported (matches PyTorch module)")
    if dim > 10:
        raise ValueError(f"Too many dims for bessel is unstable. Current dim {dim}")

    c = float(max_val) - float(min_val)
    scale = math.sqrt(2.0 / c ** 3)

    F = int(fold) if fold is not None else _default_fold()

    orig_shape = x.shape
    xf = jnp.reshape(x, (-1,)).astype(jnp.float32)
    m = xf.shape[0]

    # Fold to (R, F); pick tile rows so (a) the block satisfies the (8,128) rule,
    # (b) the grid has >=2 steps whenever R allows it (v7x dual-TC), and
    # (c) the grid divides R exactly (pad rows with zeros, sliced off at the end).
    R0 = max(1, pl.cdiv(m, F))
    if R0 <= 8:
        tile = R0                                  # single full-extent block
    else:
        tile = min(int(tile_r), _round_up(pl.cdiv(R0, 2), 8))
        tile = max(tile, 8)
    R = _round_up(R0, tile)
    m_pad = R * F
    if m_pad != m:
        xf = jnp.pad(xf, (0, m_pad - m))
    x2 = xf.reshape(R, F)
    grid_r = R // tile

    # Host-side (numpy) constants.  Column j = f*dim + d  <->  (x row f, root d+1).
    j = np.arange(F * dim)
    sel = (np.arange(F)[:, None] == (j // dim)[None, :]).astype(np.float32)  # (F, F*dim)
    sel3 = jnp.asarray(np.concatenate([sel, sel, sel], axis=0),
                       dtype=jnp.bfloat16)                                   # (3F, F*dim)
    roots_row = jnp.asarray(
        ((j % dim) + 1).astype(np.float32)[None, :] * np.float32(np.pi))     # (1, F*dim)

    kernel = functools.partial(
        _bessel_kernel,
        inv_c=1.0 / c,
        eps=float(eps),
        scale=scale,
        apply_scale=(not dimensionless),
        max_cutoff=bool(max_cutoff),
        normalize=bool(normalize),
    )

    out = pl.pallas_call(
        kernel,
        out_shape=jax.ShapeDtypeStruct((R, F * dim), out_dtype),
        grid_spec=pltpu.PrefetchScalarGridSpec(
            num_scalar_prefetch=0,
            grid=(grid_r,),
            in_specs=[
                pl.BlockSpec((tile, F), lambda i: (i, 0)),
                pl.BlockSpec((3 * F, F * dim), lambda i: (0, 0)),   # resident constant
                pl.BlockSpec((1, F * dim), lambda i: (0, 0)),       # resident constant
            ],
            out_specs=pl.BlockSpec((tile, F * dim), lambda i: (i, 0)),
        ),
        compiler_params=pltpu.CompilerParams(
            dimension_semantics=("parallel",)),
    )(x2, sel3, roots_row)

    # (R, F*dim) row-major is byte-identical to (m_pad, dim): reshape is free.
    out = out.reshape(m_pad, dim)
    if m_pad != m:
        out = out[:m]
    return out.reshape(*orig_shape, dim)


def _reference(x, *, dim, max_val, min_val=0.0, max_cutoff=False,
               dimensionless=True, normalize=False, eps=1e-3):
    c = float(max_val) - float(min_val)
    roots = jnp.arange(1, dim + 1, dtype=jnp.float32) * jnp.float32(math.pi)
    xd = x[..., None].astype(jnp.float32) - float(min_val)
    x_div_c = jnp.maximum(xd / c, jnp.float32(eps))
    if normalize:
        arg = roots * x_div_c
        out = jnp.sin(arg) / arg
    else:
        out = jnp.sin(roots * x_div_c) / x_div_c
    if not dimensionless:
        out = jnp.float32(math.sqrt(2.0 / c ** 3)) * out
    if max_cutoff:
        out = out * (x_div_c < 1.0).astype(out.dtype)
    return out


if __name__ == "__main__":
    # Module config (deterministic, in-script; bessel_roots / eps buffers are
    # derived from these scalars — nothing to load from disk).
    DIM = 8
    MAX_VAL = 5.0
    MIN_VAL = 0.0
    EPS = 1e-3

    key = jax.random.PRNGKey(0)
    # Small distance-like input; BesselBasisEncoder accepts any shape.
    x = jax.random.uniform(key, (2, 4, 16, 16), dtype=jnp.float32,
                           minval=0.0, maxval=MAX_VAL * 1.2)

    configs = [
        dict(max_cutoff=True, dimensionless=True, normalize=False),
        dict(max_cutoff=False, dimensionless=False, normalize=True),
    ]
    for cfg in configs:
        out = bessel_basis_encoder(x, dim=DIM, max_val=MAX_VAL, min_val=MIN_VAL,
                                   eps=EPS, **cfg)
        out = jax.block_until_ready(out)
        ref = _reference(x, dim=DIM, max_val=MAX_VAL, min_val=MIN_VAL, eps=EPS, **cfg)

        assert out.shape == (*x.shape, DIM), out.shape
        assert out.dtype == jnp.float32
        max_err = float(jnp.max(jnp.abs(out - ref)))
        assert jnp.allclose(out, ref, atol=1e-5, rtol=1e-5), (cfg, max_err)

    print("KERNEL_OK")
</pallas_src>

<mosaic_0001>
module attributes {stable_mosaic.version = 11 : i64} {
  func.func @_bessel_kernel(%arg0: i32, %arg1: memref<8x256xf32, #tpu.memory_space<vmem>>, %arg2: memref<768x2048xbf16, #tpu.memory_space<vmem>>, %arg3: memref<1x2048xf32, #tpu.memory_space<vmem>>, %arg4: memref<8x2048xf32, #tpu.memory_space<vmem>>) attributes {dimension_semantics = [#tpu.dimension_semantics<parallel>], iteration_bounds = array<i64: 1>, scalar_prefetch = 0 : i64, scratch_operands = 0 : i64, tpu.core_type = #tpu.core_type<tc>, window_params = [{transform_indices = @transform_0, window_bounds = array<i64: 8, 256>}, {pipeline_mode = #tpu.pipeline_mode<synchronous>, transform_indices = @transform_1, window_bounds = array<i64: 768, 2048>}, {pipeline_mode = #tpu.pipeline_mode<synchronous>, transform_indices = @transform_2, window_bounds = array<i64: 1, 2048>}, {transform_indices = @transform_3, window_bounds = array<i64: 8, 2048>}]} {
    %c0 = arith.constant 0 : index
    %c0_0 = arith.constant 0 : index
    %0 = vector.load %arg1[%c0, %c0_0] : memref<8x256xf32, #tpu.memory_space<vmem>>, vector<8x256xf32>
    %cst = arith.constant 2.000000e-01 : f32
    %1 = vector.broadcast %cst : f32 to vector<8x256xf32>
    %2 = arith.mulf %0, %1 : vector<8x256xf32>
    %cst_1 = arith.constant 1.000000e-03 : f32
    %3 = vector.broadcast %cst_1 : f32 to vector<8x256xf32>
    %4 = arith.maximumf %2, %3 : vector<8x256xf32>
    %5 = arith.truncf %4 : vector<8x256xf32> to vector<8x256xbf16>
    %6 = arith.extf %5 : vector<8x256xbf16> to vector<8x256xf32>
    %7 = arith.subf %4, %6 : vector<8x256xf32>
    %8 = arith.truncf %7 : vector<8x256xf32> to vector<8x256xbf16>
    %9 = arith.extf %8 : vector<8x256xbf16> to vector<8x256xf32>
    %10 = arith.subf %7, %9 : vector<8x256xf32>
    %11 = arith.truncf %10 : vector<8x256xf32> to vector<8x256xbf16>
    %12 = tpu.concatenate %5, %8, %11 in 1 : vector<8x256xbf16>, vector<8x256xbf16>, vector<8x256xbf16> -> vector<8x768xbf16>
    %c0_2 = arith.constant 0 : index
    %c0_3 = arith.constant 0 : index
    %13 = vector.load %arg2[%c0_2, %c0_3] : memref<768x2048xbf16, #tpu.memory_space<vmem>>, vector<768x2048xbf16>
    %cst_4 = arith.constant dense<0.000000e+00> : vector<8x2048xf32>
    %14 = tpu.matmul %12, %13, %cst_4 {dimension_numbers = #tpu.dot_dimension_numbers<[1], [0], [0], [1], [0, 0, 1, 1], [], []>} : vector<8x768xbf16>, vector<768x2048xbf16>, vector<8x2048xf32> -> vector<8x2048xf32>
    %c0_5 = arith.constant 0 : index
    %c0_6 = arith.constant 0 : index
    %15 = vector.load %arg3[%c0_5, %c0_6] : memref<1x2048xf32, #tpu.memory_space<vmem>>, vector<1x2048xf32>
    %16 = vector.broadcast %15 : vector<1x2048xf32> to vector<8x2048xf32>
    %17 = arith.mulf %14, %16 : vector<8x2048xf32>
    %18 = tpu.reciprocal %14 : vector<8x2048xf32> -> vector<8x2048xf32>
    %19 = math.sin %17 : vector<8x2048xf32>
    %20 = arith.mulf %19, %18 : vector<8x2048xf32>
    %cst_7 = arith.constant 1.000000e+00 : f32
    %21 = vector.broadcast %cst_7 : f32 to vector<8x2048xf32>
    %22 = arith.cmpf olt, %14, %21 : vector<8x2048xf32>
    %cst_8 = arith.constant 0.000000e+00 : f32
    %23 = vector.broadcast %cst_8 : f32 to vector<8x2048xf32>
    %24 = arith.select %22, %20, %23 : vector<8x2048xi1>, vector<8x2048xf32>
    %c0_9 = arith.constant 0 : index
    %c0_10 = arith.constant 0 : index
    %25 = vector.load %arg4[%c0_9, %c0_10] : memref<8x2048xf32, #tpu.memory_space<vmem>>, vector<8x2048xf32>
    tpu.vector_store %arg4[%c0_9, %c0_10], %24 {strides = array<i32>} : memref<8x2048xf32, #tpu.memory_space<vmem>>, vector<8x2048xf32>,
    return
  }
  func.func @transform_0(%arg0: i32) -> (i32, i32) {
    %c0_i32 = arith.constant 0 : i32
    %c0_i32_0 = arith.constant 0 : i32
    return %arg0, %c0_i32 : i32, i32
  }
  func.func @transform_1(%arg0: i32) -> (i32, i32) {
    %c0_i32 = arith.constant 0 : i32
    %c0_i32_0 = arith.constant 0 : i32
    %c0_i32_1 = arith.constant 0 : i32
    return %c0_i32, %c0_i32_0 : i32, i32
  }
  func.func @transform_2(%arg0: i32) -> (i32, i32) {
    %c0_i32 = arith.constant 0 : i32
    %c0_i32_0 = arith.constant 0 : i32
    %c0_i32_1 = arith.constant 0 : i32
    return %c0_i32, %c0_i32_0 : i32, i32
  }
  func.func @transform_3(%arg0: i32) -> (i32, i32) {
    %c0_i32 = arith.constant 0 : i32
    %c0_i32_0 = arith.constant 0 : i32
    return %arg0, %c0_i32 : i32, i32
  }
}

</mosaic_0001>

<llo_original>
// kernel: tpu_custom_call.1
$region0: #{tpu_custom_call.1}
  #allocation0 [shape = 'u32[]', space=smem, size = 0x4, offset = 0x4, fixed_abs, tag = 'smem constant byte address 0x4 - core index']
  #allocation1 [shape = 'u32[144,128]{1,0:T(1,128)}', space=vmem, size = 0x12000, scoped, tag = 'internal scratch']
  %s0 = inlined_call_operand.hbm [shape: f32[8,256], index: 0, kind: input, shape index: {}]
  %s1 = inlined_call_operand.hbm [shape: bf16[768,2048], index: 1, kind: input, shape index: {}]
  %s2 = inlined_call_operand.hbm [shape: f32[1,2048], index: 2, kind: input, shape index: {}]
  %s3 = inlined_call_operand.hbm [shape: f32[8,2048], index: 3, kind: output, shape index: {}]
  %s4 = sld [smem:[#allocation0]]
  $region34: #{tpu_custom_call.1} parent=0
    _
  %s6 = ssub.s32 1, %s4
  %s7 = scalar_select 0, %s6, %s4
  $region1: #{tpu_custom_call.1} parent=0
    #allocation2 [shape = 'u8[8192]{0}', space=vmem, size = 0x2000, scoped, tag = 'input window, operand 0, single buffered']
    #allocation3 [shape = 's32[1]{0}', space=sflag, size = 0x4, scoped, tag = 'scoped memory for tpu_custom_call.1']
    #allocation4 [shape = 's32[1]{0}', space=sflag, size = 0x4, scoped, tag = 'scoped memory for tpu_custom_call.1']
    #allocation5 [shape = 'u8[3145728]{0}', space=vmem, size = 0x300000, scoped, tag = 'input window, operand 1, single buffered']
    #allocation6 [shape = 's32[1]{0}', space=sflag, size = 0x4, scoped, tag = 'scoped memory for tpu_custom_call.1']
    #allocation7 [shape = 'u8[8192]{0}', space=vmem, size = 0x2000, scoped, tag = 'input window, operand 2, single buffered']
    #allocation8 [shape = 'u8[65536]{0}', space=vmem, size = 0x10000, scoped, tag = 'output window, operand 0, single buffered']
    %8 = vsyncpa [#allocation3], 0
    %9 = vsyncpa [#allocation6], 0
    %10 = vsyncpa [#allocation4], 0
    // Predicated region
    $region2: #{tpu_custom_call.1} parent=1 // pred_check
      _
    $region3: #{tpu_custom_call.1} parent=1 // pred_check_branch
      %12 = sbr.rel (0) target = $region5
    $region4: #{tpu_custom_call.1} parent=1 // pred_region
      %s14 = ssub.s32 256, 256
      %15 = vsyncadd [#allocation3], %s14
      %s17 = sshll.u32 [#allocation2], 4
      %s18 = int_to_ptr.vmem [resolvable:$true] %s17
      %20 = dma.hbm_to_vmem [thread:$0]  %s0, 256, %s18, [#allocation3]
    $region5: #{tpu_custom_call.1} parent=1 // pred_fallthru
      _
    // Predicated region
    $region6: #{tpu_custom_call.1} parent=1 // pred_check
      _
    $region7: #{tpu_custom_call.1} parent=1 // pred_check_branch
      %22 = sbr.rel (0) target = $region9
    $region8: #{tpu_custom_call.1} parent=1 // pred_region
      %s24 = ssub.s32 98304, 98304
      %25 = vsyncadd [#allocation6], %s24
      %s26 = sshll.u32 [#allocation5], 4
      %s27 = int_to_ptr.vmem [resolvable:$true] %s26
      %32 = dma.hbm_to_vmem [thread:$0]  %s1, 98304, %s27, [#allocation6], 1024, 1024, 64
    $region9: #{tpu_custom_call.1} parent=1 // pred_fallthru
      _
    // Predicated region
    $region10: #{tpu_custom_call.1} parent=1 // pred_check
      _
    $region11: #{tpu_custom_call.1} parent=1 // pred_check_branch
      %34 = sbr.rel (0) target = $region13
    $region12: #{tpu_custom_call.1} parent=1 // pred_region
      %s36 = ssub.s32 256, 256
      %37 = vsyncadd [#allocation6], %s36
      %s39 = sshll.u32 [#allocation7], 4
      %s40 = int_to_ptr.vmem [resolvable:$true] %s39
      %42 = dma.hbm_to_vmem [thread:$0]  %s2, 256, %s40, [#allocation6]
    $region13: #{tpu_custom_call.1} parent=1 // pred_fallthru
      _
    // Predicated region
    $region14: #{tpu_custom_call.1} parent=1 // pred_check
      _
    $region15: #{tpu_custom_call.1} parent=1 // pred_check_branch
      %44 = sbr.rel (0) target = $region17
    $region16: #{tpu_custom_call.1} parent=1 // pred_region
      %45 = dma.done [#allocation3], 256
    $region17: #{tpu_custom_call.1} parent=1 // pred_fallthru
      _
    // Predicated region
    $region18: #{tpu_custom_call.1} parent=1 // pred_check
      _
    $region19: #{tpu_custom_call.1} parent=1 // pred_check_branch
      %47 = sbr.rel (0) target = $region21
    $region20: #{tpu_custom_call.1} parent=1 // pred_region
      %48 = dma.done [#allocation6], 98304
    $region21: #{tpu_custom_call.1} parent=1 // pred_fallthru
      _
    // Predicated region
    $region22: #{tpu_custom_call.1} parent=1 // pred_check
      _
    $region23: #{tpu_custom_call.1} parent=1 // pred_check_branch
      %50 = sbr.rel (0) target = $region25
    $region24: #{tpu_custom_call.1} parent=1 // pred_region
      %51 = dma.done [#allocation6], 256
    $region25: #{tpu_custom_call.1} parent=1 // pred_fallthru
      _
    %v52 = vld [vmem:[#allocation2] sm:$0xff]
    %v53 = vld [vmem:[#allocation2 + $0x8] sm:$0xff]
    %v54 = vmul.f32 %v52, 0.2
    %v55 = vmul.f32 %v53, 0.2
    %v56 = vmax.f32 %v54, 0.001
    %v57 = vmax.f32 %v55, 0.001
    %v58 = vpack.c.bf16 %v56, %v56
    %v59 = vpack.c.bf16 %v57, %v57
    %v60 = vunpack.c.l.bf16 %v58
    %v61 = vunpack.c.l.bf16 %v59
    %v62 = vsub.f32 %v56, %v60
    %v63 = vsub.f32 %v57, %v61
    %v64 = vpack.c.bf16 %v62, %v62
    %v65 = vpack.c.bf16 %v63, %v63
    %v66 = vunpack.c.l.bf16 %v64
    %v67 = vunpack.c.l.bf16 %v65
    %v68 = vsub.f32 %v62, %v66
    %v69 = vsub.f32 %v63, %v67
    %v70 = vpack.c.bf16 %v68, %v68
    %v71 = vpack.c.bf16 %v69, %v69
    %v72 = vld [vmem:[#allocation5] sm:$0xff]
    %v73 = vld [vmem:[#allocation5 + $0x8] sm:$0xff]
    %v74 = vld [vmem:[#allocation5 + $0x10] sm:$0xff]
    %v75 = vld [vmem:[#allocation5 + $0x18] sm:$0xff]
    %v76 = vld [vmem:[#allocation5 + $0x20] sm:$0xff]
    %v77 = vld [vmem:[#allocation5 + $0x28] sm:$0xff]
    %v78 = vld [vmem:[#allocation5 + $0x30] sm:$0xff]
    %v79 = vld [vmem:[#allocation5 + $0x38] sm:$0xff]
    %v80 = vld [vmem:[#allocation5 + $0x40] sm:$0xff]
    %v81 = vld [vmem:[#allocation5 + $0x48] sm:$0xff]
    %v82 = vld [vmem:[#allocation5 + $0x50] sm:$0xff]
    %v83 = vld [vmem:[#allocation5 + $0x58] sm:$0xff]
    %v84 = vld [vmem:[#allocation5 + $0x60] sm:$0xff]
    %v85 = vld [vmem:[#allocation5 + $0x68] sm:$0xff]
    %v86 = vld [vmem:[#allocation5 + $0x70] sm:$0xff]
    %v87 = vld [vmem:[#allocation5 + $0x78] sm:$0xff]
    %v88 = vld [vmem:[#allocation5 + $0x80] sm:$0xff]
    %v89 = vld [vmem:[#allocation5 + $0x88] sm:$0xff]
    %v90 = vld [vmem:[#allocation5 + $0x90] sm:$0xff]
    %v91 = vld [vmem:[#allocation5 + $0x98] sm:$0xff]
    %v92 = vld [vmem:[#allocation5 + $0xa0] sm:$0xff]
    %v93 = vld [vmem:[#allocation5 + $0xa8] sm:$0xff]
    %v94 = vld [vmem:[#allocation5 + $0xb0] sm:$0xff]
    %v95 = vld [vmem:[#allocation5 + $0xb8] sm:$0xff]
    %v96 = vld [vmem:[#allocation5 + $0xc0] sm:$0xff]
    %v97 = vld [vmem:[#allocation5 + $0xc8] sm:$0xff]
    %v98 = vld [vmem:[#allocation5 + $0xd0] sm:$0xff]
    %v99 = vld [vmem:[#allocation5 + $0xd8] sm:$0xff]
    %v100 = vld [vmem:[#allocation5 + $0xe0] sm:$0xff]
    %v101 = vld [vmem:[#allocation5 + $0xe8] sm:$0xff]
    %v102 = vld [vmem:[#allocation5 + $0xf0] sm:$0xff]
    %v103 = vld [vmem:[#allocation5 + $0xf8] sm:$0xff]
    %v104 = vld [vmem:[#allocation5 + $0x100] sm:$0xff]
    %v105 = vld [vmem:[#allocation5 + $0x108] sm:$0xff]
    %v106 = vld [vmem:[#allocation5 + $0x110] sm:$0xff]
    %v107 = vld [vmem:[#allocation5 + $0x118] sm:$0xff]
    %v108 = vld [vmem:[#allocation5 + $0x120] sm:$0xff]
    %v109 = vld [vmem:[#allocation5 + $0x128] sm:$0xff]
    %v110 = vld [vmem:[#allocation5 + $0x130] sm:$0xff]
    %v111 = vld [vmem:[#allocation5 + $0x138] sm:$0xff]
    %v112 = vld [vmem:[#allocation5 + $0x140] sm:$0xff]
    %v113 = vld [vmem:[#allocation5 + $0x148] sm:$0xff]
    %v114 = vld [vmem:[#allocation5 + $0x150] sm:$0xff]
    %v115 = vld [vmem:[#allocation5 + $0x158] sm:$0xff]
    %v116 = vld [vmem:[#allocation5 + $0x160] sm:$0xff]
    %v117 = vld [vmem:[#allocation5 + $0x168] sm:$0xff]
    %v118 = vld [vmem:[#allocation5 + $0x170] sm:$0xff]
    %v119 = vld [vmem:[#allocation5 + $0x178] sm:$0xff]
    %v120 = vld [vmem:[#allocation5 + $0x180] sm:$0xff]
    %v121 = vld [vmem:[#allocation5 + $0x188] sm:$0xff]
    %v122 = vld [vmem:[#allocation5 + $0x190] sm:$0xff]
    %v123 = vld [vmem:[#allocation5 + $0x198] sm:$0xff]
    %v124 = vld [vmem:[#allocation5 + $0x1a0] sm:$0xff]
    %v125 = vld [vmem:[#allocation5 + $0x1a8] sm:$0xff]
    %v126 = vld [vmem:[#allocation5 + $0x1b0] sm:$0xff]
    %v127 = vld [vmem:[#allocation5 + $0x1b8] sm:$0xff]
    %v128 = vld [vmem:[#allocation5 + $0x1c0] sm:$0xff]
    %v129 = vld [vmem:[#allocation5 + $0x1c8] sm:$0xff]
    %v130 = vld [vmem:[#allocation5 + $0x1d0] sm:$0xff]
    %v131 = vld [vmem:[#allocation5 + $0x1d8] sm:$0xff]
    %v132 = vld [vmem:[#allocation5 + $0x1e0] sm:$0xff]
    %v133 = vld [vmem:[#allocation5 + $0x1e8] sm:$0xff]
    %v134 = vld [vmem:[#allocation5 + $0x1f0] sm:$0xff]
    %v135 = vld [vmem:[#allocation5 + $0x1f8] sm:$0xff]
    %v136 = vld [vmem:[#allocation5 + $0x200] sm:$0xff]
    %v137 = vld [vmem:[#allocation5 + $0x208] sm:$0xff]
    %v138 = vld [vmem:[#allocation5 + $0x210] sm:$0xff]
    %v139 = vld [vmem:[#allocation5 + $0x218] sm:$0xff]
    %v140 = vld [vmem:[#allocation5 + $0x220] sm:$0xff]
    %v141 = vld [vmem:[#allocation5 + $0x228] sm:$0xff]
    %v142 = vld [vmem:[#allocation5 + $0x230] sm:$0xff]
    %v143 = vld [vmem:[#allocation5 + $0x238] sm:$0xff]
    %v144 = vld [vmem:[#allocation5 + $0x240] sm:$0xff]
    %v145 = vld [vmem:[#allocation5 + $0x248] sm:$0xff]
    %v146 = vld [vmem:[#allocation5 + $0x250] sm:$0xff]
    %v147 = vld [vmem:[#allocation5 + $0x258] sm:$0xff]
    %v148 = vld [vmem:[#allocation5 + $0x260] sm:$0xff]
    %v149 = vld [vmem:[#allocation5 + $0x268] sm:$0xff]
    %v150 = vld [vmem:[#allocation5 + $0x270] sm:$0xff]
    %v151 = vld [vmem:[#allocation5 + $0x278] sm:$0xff]
    %v152 = vld [vmem:[#allocation5 + $0x280] sm:$0xff]
    %v153 = vld [vmem:[#allocation5 + $0x288] sm:$0xff]
    %v154 = vld [vmem:[#allocation5 + $0x290] sm:$0xff]
    %v155 = vld [vmem:[#allocation5 + $0x298] sm:$0xff]
    %v156 = vld [vmem:[#allocation5 + $0x2a0] sm:$0xff]
    %v157 = vld [vmem:[#allocation5 + $0x2a8] sm:$0xff]
    %v158 = vld [vmem:[#allocation5 + $0x2b0] sm:$0xff]
    %v159 = vld [vmem:[#allocation5 + $0x2b8] sm:$0xff]
    %v160 = vld [vmem:[#allocation5 + $0x2c0] sm:$0xff]
    %v161 = vld [vmem:[#allocation5 + $0x2c8] sm:$0xff]
    %v162 = vld [vmem:[#allocation5 + $0x2d0] sm:$0xff]
    %v163 = vld [vmem:[#allocation5 + $0x2d8] sm:$0xff]
    %v164 = vld [vmem:[#allocation5 + $0x2e0] sm:$0xff]
    %v165 = vld [vmem:[#allocation5 + $0x2e8] sm:$0xff]
    %v166 = vld [vmem:[#allocation5 + $0x2f0] sm:$0xff]
    %v167 = vld [vmem:[#allocation5 + $0x2f8] sm:$0xff]
    %v168 = vld [vmem:[#allocation5 + $0x300] sm:$0xff]
    %v169 = vld [vmem:[#allocation5 + $0x308] sm:$0xff]
    %v170 = vld [vmem:[#allocation5 + $0x310] sm:$0xff]
    %v171 = vld [vmem:[#allocation5 + $0x318] sm:$0xff]
    %v172 = vld [vmem:[#allocation5 + $0x320] sm:$0xff]
    %v173 = vld [vmem:[#allocation5 + $0x328] sm:$0xff]
    %v174 = vld [vmem:[#allocation5 + $0x330] sm:$0xff]
    %v175 = vld [vmem:[#allocation5 + $0x338] sm:$0xff]
    %v176 = vld [vmem:[#allocation5 + $0x340] sm:$0xff]
    %v177 = vld [vmem:[#allocation5 + $0x348] sm:$0xff]
    %v178 = vld [vmem:[#allocation5 + $0x350] sm:$0xff]
    %v179 = vld [vmem:[#allocation5 + $0x358] sm:$0xff]
    %v180 = vld [vmem:[#allocation5 + $0x360] sm:$0xff]
    %v181 = vld [vmem:[#allocation5 + $0x368] sm:$0xff]
    %v182 = vld [vmem:[#allocation5 + $0x370] sm:$0xff]
    %v183 = vld [vmem:[#allocation5 + $0x378] sm:$0xff]
    %v184 = vld [vmem:[#allocation5 + $0x380] sm:$0xff]
    %v185 = vld [vmem:[#allocation5 + $0x388] sm:$0xff]
    %v186 = vld [vmem:[#allocation5 + $0x390] sm:$0xff]
    %v187 = vld [vmem:[#allocation5 + $0x398] sm:$0xff]
    %v188 = vld [vmem:[#allocation5 + $0x3a0] sm:$0xff]
    %v189 = vld [vmem:[#allocation5 + $0x3a8] sm:$0xff]
    %v190 = vld [vmem:[#allocation5 + $0x3b0] sm:$0xff]
    %v191 = vld [vmem:[#allocation5 + $0x3b8] sm:$0xff]
    %v192 = vld [vmem:[#allocation5 + $0x3c0] sm:$0xff]
    %v193 = vld [vmem:[#allocation5 + $0x3c8] sm:$0xff]
    %v194 = vld [vmem:[#allocation5 + $0x3d0] sm:$0xff]
    %v195 = vld [vmem:[#allocation5 + $0x3d8] sm:$0xff]
    %v196 = vld [vmem:[#allocation5 + $0x3e0] sm:$0xff]
    %v197 = vld [vmem:[#allocation5 + $0x3e8] sm:$0xff]
    %v198 = vld [vmem:[#allocation5 + $0x3f0] sm:$0xff]
    %v199 = vld [vmem:[#allocation5 + $0x3f8] sm:$0xff]
    %v200 = vld [vmem:[#allocation5 + $0x400] sm:$0xff]
    %v201 = vld [vmem:[#allocation5 + $0x408] sm:$0xff]
    %v202 = vld [vmem:[#allocation5 + $0x410] sm:$0xff]
    %v203 = vld [vmem:[#allocation5 + $0x418] sm:$0xff]
    %v204 = vld [vmem:[#allocation5 + $0x420] sm:$0xff]
    %v205 = vld [vmem:[#allocation5 + $0x428] sm:$0xff]
    %v206 = vld [vmem:[#allocation5 + $0x430] sm:$0xff]
    %v207 = vld [vmem:[#allocation5 + $0x438] sm:$0xff]
    %v208 = vld [vmem:[#allocation5 + $0x440] sm:$0xff]
    %v209 = vld [vmem:[#allocation5 + $0x448] sm:$0xff]
    %v210 = vld [vmem:[#allocation5 + $0x450] sm:$0xff]
    %v211 = vld [vmem:[#allocation5 + $0x458] sm:$0xff]
    %v212 = vld [vmem:[#allocation5 + $0x460] sm:$0xff]
    %v213 = vld [vmem:[#allocation5 + $0x468] sm:$0xff]
    %v214 = vld [vmem:[#allocation5 + $0x470] sm:$0xff]
    %v215 = vld [vmem:[#allocation5 + $0x478] sm:$0xff]
    %v216 = vld [vmem:[#allocation5 + $0x480] sm:$0xff]
    %v217 = vld [vmem:[#allocation5 + $0x488] sm:$0xff]
    %v218 = vld [vmem:[#allocation5 + $0x490] sm:$0xff]
    %v219 = vld [vmem:[#allocation5 + $0x498] sm:$0xff]
    %v220 = vld [vmem:[#allocation5 + $0x4a0] sm:$0xff]
    %v221 = vld [vmem:[#allocation5 + $0x4a8] sm:$0xff]
    %v222 = vld [vmem:[#allocation5 + $0x4b0] sm:$0xff]
    %v223 = vld [vmem:[#allocation5 + $0x4b8] sm:$0xff]
    %v224 = vld [vmem:[#allocation5 + $0x4c0] sm:$0xff]
    %v225 = vld [vmem:[#allocation5 + $0x4c8] sm:$0xff]
    %v226 = vld [vmem:[#allocation5 + $0x4d0] sm:$0xff]
    %v227 = vld [vmem:[#allocation5 + $0x4d8] sm:$0xff]
    %v228 = vld [vmem:[#allocation5 + $0x4e0] sm:$0xff]
    %v229 = vld [vmem:[#allocation5 + $0x4e8] sm:$0xff]
    %v230 = vld [vmem:[#allocation5 + $0x4f0] sm:$0xff]
    %v231 = vld [vmem:[#allocation5 + $0x4f8] sm:$0xff]
    %v232 = vld [vmem:[#allocation5 + $0x500] sm:$0xff]
    %v233 = vld [vmem:[#allocation5 + $0x508] sm:$0xff]
    %v234 = vld [vmem:[#allocation5 + $0x510] sm:$0xff]
    %v235 = vld [vmem:[#allocation5 + $0x518] sm:$0xff]
    %v236 = vld [vmem:[#allocation5 + $0x520] sm:$0xff]
    %v237 = vld [vmem:[#allocation5 + $0x528] sm:$0xff]
    %v238 = vld [vmem:[#allocation5 + $0x530] sm:$0xff]
    %v239 = vld [vmem:[#allocation5 + $0x538] sm:$0xff]
    %v240 = vld [vmem:[#allocation5 + $0x540] sm:$0xff]
    %v241 = vld [vmem:[#allocation5 + $0x548] sm:$0xff]
    %v242 = vld [vmem:[#allocation5 + $0x550] sm:$0xff]
    %v243 = vld [vmem:[#allocation5 + $0x558] sm:$0xff]
    %v244 = vld [vmem:[#allocation5 + $0x560] sm:$0xff]
    %v245 = vld [vmem:[#allocation5 + $0x568] sm:$0xff]
    %v246 = vld [vmem:[#allocation5 + $0x570] sm:$0xff]
    %v247 = vld [vmem:[#allocation5 + $0x578] sm:$0xff]
    %v248 = vld [vmem:[#allocation5 + $0x580] sm:$0xff]
    %v249 = vld [vmem:[#allocation5 + $0x588] sm:$0xff]
    %v250 = vld [vmem:[#allocation5 + $0x590] sm:$0xff]
    %v251 = vld [vmem:[#allocation5 + $0x598] sm:$0xff]
    %v252 = vld [vmem:[#allocation5 + $0x5a0] sm:$0xff]
    %v253 = vld [vmem:[#allocation5 + $0x5a8] sm:$0xff]
    %v254 = vld [vmem:[#allocation5 + $0x5b0] sm:$0xff]
    %v255 = vld [vmem:[#allocation5 + $0x5b8] sm:$0xff]
    %v256 = vld [vmem:[#allocation5 + $0x5c0] sm:$0xff]
    %v257 = vld [vmem:[#allocation5 + $0x5c8] sm:$0xff]
    %v258 = vld [vmem:[#allocation5 + $0x5d0] sm:$0xff]
    %v259 = vld [vmem:[#allocation5 + $0x5d8] sm:$0xff]
    %v260 = vld [vmem:[#allocation5 + $0x5e0] sm:$0xff]
    %v261 = vld [vmem:[#allocation5 + $0x5e8] sm:$0xff]
    %v262 = vld [vmem:[#allocation5 + $0x5f0] sm:$0xff]
    %v263 = vld [vmem:[#allocation5 + $0x5f8] sm:$0xff]
    %v264 = vld [vmem:[#allocation5 + $0x600] sm:$0xff]
    %v265 = vld [vmem:[#allocation5 + $0x608] sm:$0xff]
    %v266 = vld [vmem:[#allocation5 + $0x610] sm:$0xff]
    %v267 = vld [vmem:[#allocation5 + $0x618] sm:$0xff]
    %v268 = vld [vmem:[#allocation5 + $0x620] sm:$0xff]
    %v269 = vld [vmem:[#allocation5 + $0x628] sm:$0xff]
    %v270 = vld [vmem:[#allocation5 + $0x630] sm:$0xff]
    %v271 = vld [vmem:[#allocation5 + $0x638] sm:$0xff]
    %v272 = vld [vmem:[#allocation5 + $0x640] sm:$0xff]
    %v273 = vld [vmem:[#allocation5 + $0x648] sm:$0xff]
    %v274 = vld [vmem:[#allocation5 + $0x650] sm:$0xff]
    %v275 = vld [vmem:[#allocation5 + $0x658] sm:$0xff]
    %v276 = vld [vmem:[#allocation5 + $0x660] sm:$0xff]
    %v277 = vld [vmem:[#allocation5 + $0x668] sm:$0xff]
    %v278 = vld [vmem:[#allocation5 + $0x670] sm:$0xff]
    %v279 = vld [vmem:[#allocation5 + $0x678] sm:$0xff]
    %v280 = vld [vmem:[#allocation5 + $0x680] sm:$0xff]
    %v281 = vld [vmem:[#allocation5 + $0x688] sm:$0xff]
    %v282 = vld [vmem:[#allocation5 + $0x690] sm:$0xff]
    %v283 = vld [vmem:[#allocation5 + $0x698] sm:$0xff]
    %v284 = vld [vmem:[#allocation5 + $0x6a0] sm:$0xff]
    %v285 = vld [vmem:[#allocation5 + $0x6a8] sm:$0xff]
    %v286 = vld [vmem:[#allocation5 + $0x6b0] sm:$0xff]
    %v287 = vld [vmem:[#allocation5 + $0x6b8] sm:$0xff]
    %v288 = vld [vmem:[#allocation5 + $0x6c0] sm:$0xff]
    %v289 = vld [vmem:[#allocation5 + $0x6c8] sm:$0xff]
    %v290 = vld [vmem:[#allocation5 + $0x6d0] sm:$0xff]
    %v291 = vld [vmem:[#allocation5 + $0x6d8] sm:$0xff]
    %v292 = vld [vmem:[#allocation5 + $0x6e0] sm:$0xff]
    %v293 = vld [vmem:[#allocation5 + $0x6e8] sm:$0xff]
    %v294 = vld [vmem:[#allocation5 + $0x6f0] sm:$0xff]
    %v295 = vld [vmem:[#allocation5 + $0x6f8] sm:$0xff]
    %v296 = vld [vmem:[#allocation5 + $0x700] sm:$0xff]
    %v297 = vld [vmem:[#allocation5 + $0x708] sm:$0xff]
    %v298 = vld [vmem:[#allocation5 + $0x710] sm:$0xff]
    %v299 = vld [vmem:[#allocation5 + $0x718] sm:$0xff]
    %v300 = vld [vmem:[#allocation5 + $0x720] sm:$0xff]
    %v301 = vld [vmem:[#allocation5 + $0x728] sm:$0xff]
    %v302 = vld [vmem:[#allocation5 + $0x730] sm:$0xff]
    %v303 = vld [vmem:[#allocation5 + $0x738] sm:$0xff]
    %v304 = vld [vmem:[#allocation5 + $0x740] sm:$0xff]
    %v305 = vld [vmem:[#allocation5 + $0x748] sm:$0xff]
    %v306 = vld [vmem:[#allocation5 + $0x750] sm:$0xff]
    %v307 = vld [vmem:[#allocation5 + $0x758] sm:$0xff]
    %v308 = vld [vmem:[#allocation5 + $0x760] sm:$0xff]
    %v309 = vld [vmem:[#allocation5 + $0x768] sm:$0xff]
    %v310 = vld [vmem:[#allocation5 + $0x770] sm:$0xff]
    %v311 = vld [vmem:[#allocation5 + $0x778] sm:$0xff]
    %v312 = vld [vmem:[#allocation5 + $0x780] sm:$0xff]
    %v313 = vld [vmem:[#allocation5 + $0x788] sm:$0xff]
    %v314 = vld [vmem:[#allocation5 + $0x790] sm:$0xff]
    %v315 = vld [vmem:[#allocation5 + $0x798] sm:$0xff]
    %v316 = vld [vmem:[#allocation5 + $0x7a0] sm:$0xff]
    %v317 = vld [vmem:[#allocation5 + $0x7a8] sm:$0xff]
    %v318 = vld [vmem:[#allocation5 + $0x7b0] sm:$0xff]
    %v319 = vld [vmem:[#allocation5 + $0x7b8] sm:$0xff]
    %v320 = vld [vmem:[#allocation5 + $0x7c0] sm:$0xff]
    %v321 = vld [vmem:[#allocation5 + $0x7c8] sm:$0xff]
    %v322 = vld [vmem:[#allocation5 + $0x7d0] sm:$0xff]
    %v323 = vld [vmem:[#allocation5 + $0x7d8] sm:$0xff]
    %v324 = vld [vmem:[#allocation5 + $0x7e0] sm:$0xff]
    %v325 = vld [vmem:[#allocation5 + $0x7e8] sm:$0xff]
    %v326 = vld [vmem:[#allocation5 + $0x7f0] sm:$0xff]
    %v327 = vld [vmem:[#allocation5 + $0x7f8] sm:$0xff]
    %v328 = vld [vmem:[#allocation5 + $0x800] sm:$0xff]
    %v329 = vld [vmem:[#allocation5 + $0x808] sm:$0xff]
    %v330 = vld [vmem:[#allocation5 + $0x810] sm:$0xff]
    %v331 = vld [vmem:[#allocation5 + $0x818] sm:$0xff]
    %v332 = vld [vmem:[#allocation5 + $0x820] sm:$0xff]
    %v333 = vld [vmem:[#allocation5 + $0x828] sm:$0xff]
    %v334 = vld [vmem:[#allocation5 + $0x830] sm:$0xff]
    %v335 = vld [vmem:[#allocation5 + $0x838] sm:$0xff]
    %v336 = vld [vmem:[#allocation5 + $0x840] sm:$0xff]
    %v337 = vld [vmem:[#allocation5 + $0x848] sm:$0xff]
    %v338 = vld [vmem:[#allocation5 + $0x850] sm:$0xff]
    %v339 = vld [vmem:[#allocation5 + $0x858] sm:$0xff]
    %v340 = vld [vmem:[#allocation5 + $0x860] sm:$0xff]
    %v341 = vld [vmem:[#allocation5 + $0x868] sm:$0xff]
    %v342 = vld [vmem:[#allocation5 + $0x870] sm:$0xff]
    %v343 = vld [vmem:[#allocation5 + $0x878] sm:$0xff]
    %v344 = vld [vmem:[#allocation5 + $0x880] sm:$0xff]
    %v345 = vld [vmem:[#allocation5 + $0x888] sm:$0xff]
    %v346 = vld [vmem:[#allocation5 + $0x890] sm:$0xff]
    %v347 = vld [vmem:[#allocation5 + $0x898] sm:$0xff]
    %v348 = vld [vmem:[#allocation5 + $0x8a0] sm:$0xff]
    %v349 = vld [vmem:[#allocation5 + $0x8a8] sm:$0xff]
    %v350 = vld [vmem:[#allocation5 + $0x8b0] sm:$0xff]
    %v351 = vld [vmem:[#allocation5 + $0x8b8] sm:$0xff]
    %v352 = vld [vmem:[#allocation5 + $0x8c0] sm:$0xff]
    %v353 = vld [vmem:[#allocation5 + $0x8c8] sm:$0xff]
    %v354 = vld [vmem:[#allocation5 + $0x8d0] sm:$0xff]
    %v355 = vld [vmem:[#allocation5 + $0x8d8] sm:$0xff]
    %v356 = vld [vmem:[#allocation5 + $0x8e0] sm:$0xff]
    %v357 = vld [vmem:[#allocation5 + $0x8e8] sm:$0xff]
    %v358 = vld [vmem:[#allocation5 + $0x8f0] sm:$0xff]
    %v359 = vld [vmem:[#allocation5 + $0x8f8] sm:$0xff]
    %v360 = vld [vmem:[#allocation5 + $0x900] sm:$0xff]
    %v361 = vld [vmem:[#allocation5 + $0x908] sm:$0xff]
    %v362 = vld [vmem:[#allocation5 + $0x910] sm:$0xff]
    %v363 = vld [vmem:[#allocation5 + $0x918] sm:$0xff]
    %v364 = vld [vmem:[#allocation5 + $0x920] sm:$0xff]
    %v365 = vld [vmem:[#allocation5 + $0x928] sm:$0xff]
    %v366 = vld [vmem:[#allocation5 + $0x930] sm:$0xff]
    %v367 = vld [vmem:[#allocation5 + $0x938] sm:$0xff]
    %v368 = vld [vmem:[#allocation5 + $0x940] sm:$0xff]
    %v369 = vld [vmem:[#allocation5 + $0x948] sm:$0xff]
    %v370 = vld [vmem:[#allocation5 + $0x950] sm:$0xff]
    %v371 = vld [vmem:[#allocation5 + $0x958] sm:$0xff]
    %v372 = vld [vmem:[#allocation5 + $0x960] sm:$0xff]
    %v373 = vld [vmem:[#allocation5 + $0x968] sm:$0xff]
    %v374 = vld [vmem:[#allocation5 + $0x970] sm:$0xff]
    %v375 = vld [vmem:[#allocation5 + $0x978] sm:$0xff]
    %v376 = vld [vmem:[#allocation5 + $0x980] sm:$0xff]
    %v377 = vld [vmem:[#allocation5 + $0x988] sm:$0xff]
    %v378 = vld [vmem:[#allocation5 + $0x990] sm:$0xff]
    %v379 = vld [vmem:[#allocation5 + $0x998] sm:$0xff]
    %v380 = vld [vmem:[#allocation5 + $0x9a0] sm:$0xff]
    %v381 = vld [vmem:[#allocation5 + $0x9a8] sm:$0xff]
    %v382 = vld [vmem:[#allocation5 + $0x9b0] sm:$0xff]
    %v383 = vld [vmem:[#allocation5 + $0x9b8] sm:$0xff]
    %v384 = vld [vmem:[#allocation5 + $0x9c0] sm:$0xff]
    %v385 = vld [vmem:[#allocation5 + $0x9c8] sm:$0xff]
    %v386 = vld [vmem:[#allocation5 + $0x9d0] sm:$0xff]
    %v387 = vld [vmem:[#allocation5 + $0x9d8] sm:$0xff]
    %v388 = vld [vmem:[#allocation5 + $0x9e0] sm:$0xff]
    %v389 = vld [vmem:[#allocation5 + $0x9e8] sm:$0xff]
    %v390 = vld [vmem:[#allocation5 + $0x9f0] sm:$0xff]
    %v391 = vld [vmem:[#allocation5 + $0x9f8] sm:$0xff]
    %v392 = vld [vmem:[#allocation5 + $0xa00] sm:$0xff]
    %v393 = vld [vmem:[#allocation5 + $0xa08] sm:$0xff]
    %v394 = vld [vmem:[#allocation5 + $0xa10] sm:$0xff]
    %v395 = vld [vmem:[#allocation5 + $0xa18] sm:$0xff]
    %v396 = vld [vmem:[#allocation5 + $0xa20] sm:$0xff]
    %v397 = vld [vmem:[#allocation5 + $0xa28] sm:$0xff]
    %v398 = vld [vmem:[#allocation5 + $0xa30] sm:$0xff]
    %v399 = vld [vmem:[#allocation5 + $0xa38] sm:$0xff]
    %v400 = vld [vmem:[#allocation5 + $0xa40] sm:$0xff]
    %v401 = vld [vmem:[#allocation5 + $0xa48] sm:$0xff]
    %v402 = vld [vmem:[#allocation5 + $0xa50] sm:$0xff]
    %v403 = vld [vmem:[#allocation5 + $0xa58] sm:$0xff]
    %v404 = vld [vmem:[#allocation5 + $0xa60] sm:$0xff]
    %v405 = vld [vmem:[#allocation5 + $0xa68] sm:$0xff]
    %v406 = vld [vmem:[#allocation5 + $0xa70] sm:$0xff]
    %v407 = vld [vmem:[#allocation5 + $0xa78] sm:$0xff]
    %v408 = vld [vmem:[#allocation5 + $0xa80] sm:$0xff]
    %v409 = vld [vmem:[#allocation5 + $0xa88] sm:$0xff]
    %v410 = vld [vmem:[#allocation5 + $0xa90] sm:$0xff]
    %v411 = vld [vmem:[#allocation5 + $0xa98] sm:$0xff]
    %v412 = vld [vmem:[#allocation5 + $0xaa0] sm:$0xff]
    %v413 = vld [vmem:[#allocation5 + $0xaa8] sm:$0xff]
    %v414 = vld [vmem:[#allocation5 + $0xab0] sm:$0xff]
    %v415 = vld [vmem:[#allocation5 + $0xab8] sm:$0xff]
    %v416 = vld [vmem:[#allocation5 + $0xac0] sm:$0xff]
    %v417 = vld [vmem:[#allocation5 + $0xac8] sm:$0xff]
    %v418 = vld [vmem:[#allocation5 + $0xad0] sm:$0xff]
    %v419 = vld [vmem:[#allocation5 + $0xad8] sm:$0xff]
    %v420 = vld [vmem:[#allocation5 + $0xae0] sm:$0xff]
    %v421 = vld [vmem:[#allocation5 + $0xae8] sm:$0xff]
    %v422 = vld [vmem:[#allocation5 + $0xaf0] sm:$0xff]
    %v423 = vld [vmem:[#allocation5 + $0xaf8] sm:$0xff]
    %v424 = vld [vmem:[#allocation5 + $0xb00] sm:$0xff]
    %v425 = vld [vmem:[#allocation5 + $0xb08] sm:$0xff]
    %v426 = vld [vmem:[#allocation5 + $0xb10] sm:$0xff]
    %v427 = vld [vmem:[#allocation5 + $0xb18] sm:$0xff]
    %v428 = vld [vmem:[#allocation5 + $0xb20] sm:$0xff]
    %v429 = vld [vmem:[#allocation5 + $0xb28] sm:$0xff]
    %v430 = vld [vmem:[#allocation5 + $0xb30] sm:$0xff]
    %v431 = vld [vmem:[#allocation5 + $0xb38] sm:$0xff]
    %v432 = vld [vmem:[#allocation5 + $0xb40] sm:$0xff]
    %v433 = vld [vmem:[#allocation5 + $0xb48] sm:$0xff]
    %v434 = vld [vmem:[#allocation5 + $0xb50] sm:$0xff]
    %v435 = vld [vmem:[#allocation5 + $0xb58] sm:$0xff]
    %v436 = vld [vmem:[#allocation5 + $0xb60] sm:$0xff]
    %v437 = vld [vmem:[#allocation5 + $0xb68] sm:$0xff]
    %v438 = vld [vmem:[#allocation5 + $0xb70] sm:$0xff]
    %v439 = vld [vmem:[#allocation5 + $0xb78] sm:$0xff]
    %v440 = vld [vmem:[#allocation5 + $0xb80] sm:$0xff]
    %v441 = vld [vmem:[#allocation5 + $0xb88] sm:$0xff]
    %v442 = vld [vmem:[#allocation5 + $0xb90] sm:$0xff]
    %v443 = vld [vmem:[#allocation5 + $0xb98] sm:$0xff]
    %v444 = vld [vmem:[#allocation5 + $0xba0] sm:$0xff]
    %v445 = vld [vmem:[#allocation5 + $0xba8] sm:$0xff]
    %v446 = vld [vmem:[#allocation5 + $0xbb0] sm:$0xff]
    %v447 = vld [vmem:[#allocation5 + $0xbb8] sm:$0xff]
    %v448 = vld [vmem:[#allocation5 + $0xbc0] sm:$0xff]
    %v449 = vld [vmem:[#allocation5 + $0xbc8] sm:$0xff]
    %v450 = vld [vmem:[#allocation5 + $0xbd0] sm:$0xff]
    %v451 = vld [vmem:[#allocation5 + $0xbd8] sm:$0xff]
    %v452 = vld [vmem:[#allocation5 + $0xbe0] sm:$0xff]
    %v453 = vld [vmem:[#allocation5 + $0xbe8] sm:$0xff]
    %v454 = vld [vmem:[#allocation5 + $0xbf0] sm:$0xff]
    %v455 = vld [vmem:[#allocation5 + $0xbf8] sm:$0xff]
    %v456 = vld [vmem:[#allocation5 + $0xc00] sm:$0xff]
    %v457 = vld [vmem:[#allocation5 + $0xc08] sm:$0xff]
    %v458 = vld [vmem:[#allocation5 + $0xc10] sm:$0xff]
    %v459 = vld [vmem:[#allocation5 + $0xc18] sm:$0xff]
    %v460 = vld [vmem:[#allocation5 + $0xc20] sm:$0xff]
    %v461 = vld [vmem:[#allocation5 + $0xc28] sm:$0xff]
    %v462 = vld [vmem:[#allocation5 + $0xc30] sm:$0xff]
    %v463 = vld [vmem:[#allocation5 + $0xc38] sm:$0xff]
    %v464 = vld [vmem:[#allocation5 + $0xc40] sm:$0xff]
    %v465 = vld [vmem:[#allocation5 + $0xc48] sm:$0xff]
    %v466 = vld [vmem:[#allocation5 + $0xc50] sm:$0xff]
    %v467 = vld [vmem:[#allocation5 + $0xc58] sm:$0xff]
    %v468 = vld [vmem:[#allocation5 + $0xc60] sm:$0xff]
    %v469 = vld [vmem:[#allocation5 + $0xc68] sm:$0xff]
    %v470 = vld [vmem:[#allocation5 + $0xc70] sm:$0xff]
    %v471 = vld [vmem:[#allocation5 + $0xc78] sm:$0xff]
    %v472 = vld [vmem:[#allocation5 + $0xc80] sm:$0xff]
    %v473 = vld [vmem:[#allocation5 + $0xc88] sm:$0xff]
    %v474 = vld [vmem:[#allocation5 + $0xc90] sm:$0xff]
    %v475 = vld [vmem:[#allocation5 + $0xc98] sm:$0xff]
    %v476 = vld [vmem:[#allocation5 + $0xca0] sm:$0xff]
    %v477 = vld [vmem:[#allocation5 + $0xca8] sm:$0xff]
    %v478 = vld [vmem:[#allocation5 + $0xcb0] sm:$0xff]
    %v479 = vld [vmem:[#allocation5 + $0xcb8] sm:$0xff]
    %v480 = vld [vmem:[#allocation5 + $0xcc0] sm:$0xff]
    %v481 = vld [vmem:[#allocation5 + $0xcc8] sm:$0xff]
    %v482 = vld [vmem:[#allocation5 + $0xcd0] sm:$0xff]
    %v483 = vld [vmem:[#allocation5 + $0xcd8] sm:$0xff]
    %v484 = vld [vmem:[#allocation5 + $0xce0] sm:$0xff]
    %v485 = vld [vmem:[#allocation5 + $0xce8] sm:$0xff]
    %v486 = vld [vmem:[#allocation5 + $0xcf0] sm:$0xff]
    %v487 = vld [vmem:[#allocation5 + $0xcf8] sm:$0xff]
    %v488 = vld [vmem:[#allocation5 + $0xd00] sm:$0xff]
    %v489 = vld [vmem:[#allocation5 + $0xd08] sm:$0xff]
    %v490 = vld [vmem:[#allocation5 + $0xd10] sm:$0xff]
    %v491 = vld [vmem:[#allocation5 + $0xd18] sm:$0xff]
    %v492 = vld [vmem:[#allocation5 + $0xd20] sm:$0xff]
    %v493 = vld [vmem:[#allocation5 + $0xd28] sm:$0xff]
    %v494 = vld [vmem:[#allocation5 + $0xd30] sm:$0xff]
    %v495 = vld [vmem:[#allocation5 + $0xd38] sm:$0xff]
    %v496 = vld [vmem:[#allocation5 + $0xd40] sm:$0xff]
    %v497 = vld [vmem:[#allocation5 + $0xd48] sm:$0xff]
    %v498 = vld [vmem:[#allocation5 + $0xd50] sm:$0xff]
    %v499 = vld [vmem:[#allocation5 + $0xd58] sm:$0xff]
    %v500 = vld [vmem:[#allocation5 + $0xd60] sm:$0xff]
    %v501 = vld [vmem:[#allocation5 + $0xd68] sm:$0xff]
    %v502 = vld [vmem:[#allocation5 + $0xd70] sm:$0xff]
    %v503 = vld [vmem:[#allocation5 + $0xd78] sm:$0xff]
    %v504 = vld [vmem:[#allocation5 + $0xd80] sm:$0xff]
    %v505 = vld [vmem:[#allocation5 + $0xd88] sm:$0xff]
    %v506 = vld [vmem:[#allocation5 + $0xd90] sm:$0xff]
    %v507 = vld [vmem:[#allocation5 + $0xd98] sm:$0xff]
    %v508 = vld [vmem:[#allocation5 + $0xda0] sm:$0xff]
    %v509 = vld [vmem:[#allocation5 + $0xda8] sm:$0xff]
    %v510 = vld [vmem:[#allocation5 + $0xdb0] sm:$0xff]
    %v511 = vld [vmem:[#allocation5 + $0xdb8] sm:$0xff]
    %v512 = vld [vmem:[#allocation5 + $0xdc0] sm:$0xff]
    %v513 = vld [vmem:[#allocation5 + $0xdc8] sm:$0xff]
    %v514 = vld [vmem:[#allocation5 + $0xdd0] sm:$0xff]
    %v515 = vld [vmem:[#allocation5 + $0xdd8] sm:$0xff]
    %v516 = vld [vmem:[#allocation5 + $0xde0] sm:$0xff]
    %v517 = vld [vmem:[#allocation5 + $0xde8] sm:$0xff]
    %v518 = vld [vmem:[#allocation5 + $0xdf0] sm:$0xff]
    %v519 = vld [vmem:[#allocation5 + $0xdf8] sm:$0xff]
    %v520 = vld [vmem:[#allocation5 + $0xe00] sm:$0xff]
    %v521 = vld [vmem:[#allocation5 + $0xe08] sm:$0xff]
    %v522 = vld [vmem:[#allocation5 + $0xe10] sm:$0xff]
    %v523 = vld [vmem:[#allocation5 + $0xe18] sm:$0xff]
    %v524 = vld [vmem:[#allocation5 + $0xe20] sm:$0xff]
    %v525 = vld [vmem:[#allocation5 + $0xe28] sm:$0xff]
    %v526 = vld [vmem:[#allocation5 + $0xe30] sm:$0xff]
    %v527 = vld [vmem:[#allocation5 + $0xe38] sm:$0xff]
    %v528 = vld [vmem:[#allocation5 + $0xe40] sm:$0xff]
    %v529 = vld [vmem:[#allocation5 + $0xe48] sm:$0xff]
    %v530 = vld [vmem:[#allocation5 + $0xe50] sm:$0xff]
    %v531 = vld [vmem:[#allocation5 + $0xe58] sm:$0xff]
    %v532 = vld [vmem:[#allocation5 + $0xe60] sm:$0xff]
    %v533 = vld [vmem:[#allocation5 + $0xe68] sm:$0xff]
    %v534 = vld [vmem:[#allocation5 + $0xe70] sm:$0xff]
    %v535 = vld [vmem:[#allocation5 + $0xe78] sm:$0xff]
    %v536 = vld [vmem:[#allocation5 + $0xe80] sm:$0xff]
    %v537 = vld [vmem:[#allocation5 + $0xe88] sm:$0xff]
    %v538 = vld [vmem:[#allocation5 + $0xe90] sm:$0xff]
    %v539 = vld [vmem:[#allocation5 + $0xe98] sm:$0xff]
    %v540 = vld [vmem:[#allocation5 + $0xea0] sm:$0xff]
    %v541 = vld [vmem:[#allocation5 + $0xea8] sm:$0xff]
    %v542 = vld [vmem:[#allocation5 + $0xeb0] sm:$0xff]
    %v543 = vld [vmem:[#allocation5 + $0xeb8] sm:$0xff]
    %v544 = vld [vmem:[#allocation5 + $0xec0] sm:$0xff]
    %v545 = vld [vmem:[#allocation5 + $0xec8] sm:$0xff]
    %v546 = vld [vmem:[#allocation5 + $0xed0] sm:$0xff]
    %v547 = vld [vmem:[#allocation5 + $0xed8] sm:$0xff]
    %v548 = vld [vmem:[#allocation5 + $0xee0] sm:$0xff]
    %v549 = vld [vmem:[#allocation5 + $0xee8] sm:$0xff]
    %v550 = vld [vmem:[#allocation5 + $0xef0] sm:$0xff]
    %v551 = vld [vmem:[#allocation5 + $0xef8] sm:$0xff]
    %v552 = vld [vmem:[#allocation5 + $0xf00] sm:$0xff]
    %v553 = vld [vmem:[#allocation5 + $0xf08] sm:$0xff]
    %v554 = vld [vmem:[#allocation5 + $0xf10] sm:$0xff]
    %v555 = vld [vmem:[#allocation5 + $0xf18] sm:$0xff]
    %v556 = vld [vmem:[#allocation5 + $0xf20] sm:$0xff]
    %v557 = vld [vmem:[#allocation5 + $0xf28] sm:$0xff]
    %v558 = vld [vmem:[#allocation5 + $0xf30] sm:$0xff]
    %v559 = vld [vmem:[#allocation5 + $0xf38] sm:$0xff]
    %v560 = vld [vmem:[#allocation5 + $0xf40] sm:$0xff]
    %v561 = vld [vmem:[#allocation5 + $0xf48] sm:$0xff]
    %v562 = vld [vmem:[#allocation5 + $0xf50] sm:$0xff]
    %v563 = vld [vmem:[#allocation5 + $0xf58] sm:$0xff]
    %v564 = vld [vmem:[#allocation5 + $0xf60] sm:$0xff]
    %v565 = vld [vmem:[#allocation5 + $0xf68] sm:$0xff]
    %v566 = vld [vmem:[#allocation5 + $0xf70] sm:$0xff]
    %v567 = vld [vmem:[#allocation5 + $0xf78] sm:$0xff]
    %v568 = vld [vmem:[#allocation5 + $0xf80] sm:$0xff]
    %v569 = vld [vmem:[#allocation5 + $0xf88] sm:$0xff]
    %v570 = vld [vmem:[#allocation5 + $0xf90] sm:$0xff]
    %v571 = vld [vmem:[#allocation5 + $0xf98] sm:$0xff]
    %v572 = vld [vmem:[#allocation5 + $0xfa0] sm:$0xff]
    %v573 = vld [vmem:[#allocation5 + $0xfa8] sm:$0xff]
    %v574 = vld [vmem:[#allocation5 + $0xfb0] sm:$0xff]
    %v575 = vld [vmem:[#allocation5 + $0xfb8] sm:$0xff]
    %v576 = vld [vmem:[#allocation5 + $0xfc0] sm:$0xff]
    %v577 = vld [vmem:[#allocation5 + $0xfc8] sm:$0xff]
    %v578 = vld [vmem:[#allocation5 + $0xfd0] sm:$0xff]
    %v579 = vld [vmem:[#allocation5 + $0xfd8] sm:$0xff]
    %v580 = vld [vmem:[#allocation5 + $0xfe0] sm:$0xff]
    %v581 = vld [vmem:[#allocation5 + $0xfe8] sm:$0xff]
    %v582 = vld [vmem:[#allocation5 + $0xff0] sm:$0xff]
    %v583 = vld [vmem:[#allocation5 + $0xff8] sm:$0xff]
    %v584 = vld [vmem:[#allocation5 + $0x1000] sm:$0xff]
    %v585 = vld [vmem:[#allocation5 + $0x1008] sm:$0xff]
    %v586 = vld [vmem:[#allocation5 + $0x1010] sm:$0xff]
    %v587 = vld [vmem:[#allocation5 + $0x1018] sm:$0xff]
    %v588 = vld [vmem:[#allocation5 + $0x1020] sm:$0xff]
    %v589 = vld [vmem:[#allocation5 + $0x1028] sm:$0xff]
    %v590 = vld [vmem:[#allocation5 + $0x1030] sm:$0xff]
    %v591 = vld [vmem:[#allocation5 + $0x1038] sm:$0xff]
    %v592 = vld [vmem:[#allocation5 + $0x1040] sm:$0xff]
    %v593 = vld [vmem:[#allocation5 + $0x1048] sm:$0xff]
    %v594 = vld [vmem:[#allocation5 + $0x1050] sm:$0xff]
    %v595 = vld [vmem:[#allocation5 + $0x1058] sm:$0xff]
    %v596 = vld [vmem:[#allocation5 + $0x1060] sm:$0xff]
    %v597 = vld [vmem:[#allocation5 + $0x1068] sm:$0xff]
    %v598 = vld [vmem:[#allocation5 + $0x1070] sm:$0xff]
    %v599 = vld [vmem:[#allocation5 + $0x1078] sm:$0xff]
    %v600 = vld [vmem:[#allocation5 + $0x1080] sm:$0xff]
    %v601 = vld [vmem:[#allocation5 + $0x1088] sm:$0xff]
    %v602 = vld [vmem:[#allocation5 + $0x1090] sm:$0xff]
    %v603 = vld [vmem:[#allocation5 + $0x1098] sm:$0xff]
    %v604 = vld [vmem:[#allocation5 + $0x10a0] sm:$0xff]
    %v605 = vld [vmem:[#allocation5 + $0x10a8] sm:$0xff]
    %v606 = vld [vmem:[#allocation5 + $0x10b0] sm:$0xff]
    %v607 = vld [vmem:[#allocation5 + $0x10b8] sm:$0xff]
    %v608 = vld [vmem:[#allocation5 + $0x10c0] sm:$0xff]
    %v609 = vld [vmem:[#allocation5 + $0x10c8] sm:$0xff]
    %v610 = vld [vmem:[#allocation5 + $0x10d0] sm:$0xff]
    %v611 = vld [vmem:[#allocation5 + $0x10d8] sm:$0xff]
    %v612 = vld [vmem:[#allocation5 + $0x10e0] sm:$0xff]
    %v613 = vld [vmem:[#allocation5 + $0x10e8] sm:$0xff]
    %v614 = vld [vmem:[#allocation5 + $0x10f0] sm:$0xff]
    %v615 = vld [vmem:[#allocation5 + $0x10f8] sm:$0xff]
    %v616 = vld [vmem:[#allocation5 + $0x1100] sm:$0xff]
    %v617 = vld [vmem:[#allocation5 + $0x1108] sm:$0xff]
    %v618 = vld [vmem:[#allocation5 + $0x1110] sm:$0xff]
    %v619 = vld [vmem:[#allocation5 + $0x1118] sm:$0xff]
    %v620 = vld [vmem:[#allocation5 + $0x1120] sm:$0xff]
    %v621 = vld [vmem:[#allocation5 + $0x1128] sm:$0xff]
    %v622 = vld [vmem:[#allocation5 + $0x1130] sm:$0xff]
    %v623 = vld [vmem:[#allocation5 + $0x1138] sm:$0xff]
    %v624 = vld [vmem:[#allocation5 + $0x1140] sm:$0xff]
    %v625 = vld [vmem:[#allocation5 + $0x1148] sm:$0xff]
    %v626 = vld [vmem:[#allocation5 + $0x1150] sm:$0xff]
    %v627 = vld [vmem:[#allocation5 + $0x1158] sm:$0xff]
    %v628 = vld [vmem:[#allocation5 + $0x1160] sm:$0xff]
    %v629 = vld [vmem:[#allocation5 + $0x1168] sm:$0xff]
    %v630 = vld [vmem:[#allocation5 + $0x1170] sm:$0xff]
    %v631 = vld [vmem:[#allocation5 + $0x1178] sm:$0xff]
    %v632 = vld [vmem:[#allocation5 + $0x1180] sm:$0xff]
    %v633 = vld [vmem:[#allocation5 + $0x1188] sm:$0xff]
    %v634 = vld [vmem:[#allocation5 + $0x1190] sm:$0xff]
    %v635 = vld [vmem:[#allocation5 + $0x1198] sm:$0xff]
    %v636 = vld [vmem:[#allocation5 + $0x11a0] sm:$0xff]
    %v637 = vld [vmem:[#allocation5 + $0x11a8] sm:$0xff]
    %v638 = vld [vmem:[#allocation5 + $0x11b0] sm:$0xff]
    %v639 = vld [vmem:[#allocation5 + $0x11b8] sm:$0xff]
    %v640 = vld [vmem:[#allocation5 + $0x11c0] sm:$0xff]
    %v641 = vld [vmem:[#allocation5 + $0x11c8] sm:$0xff]
    %v642 = vld [vmem:[#allocation5 + $0x11d0] sm:$0xff]
    %v643 = vld [vmem:[#allocation5 + $0x11d8] sm:$0xff]
    %v644 = vld [vmem:[#allocation5 + $0x11e0] sm:$0xff]
    %v645 = vld [vmem:[#allocation5 + $0x11e8] sm:$0xff]
    %v646 = vld [vmem:[#allocation5 + $0x11f0] sm:$0xff]
    %v647 = vld [vmem:[#allocation5 + $0x11f8] sm:$0xff]
    %v648 = vld [vmem:[#allocation5 + $0x1200] sm:$0xff]
    %v649 = vld [vmem:[#allocation5 + $0x1208] sm:$0xff]
    %v650 = vld [vmem:[#allocation5 + $0x1210] sm:$0xff]
    %v651 = vld [vmem:[#allocation5 + $0x1218] sm:$0xff]
    %v652 = vld [vmem:[#allocation5 + $0x1220] sm:$0xff]
    %v653 = vld [vmem:[#allocation5 + $0x1228] sm:$0xff]
    %v654 = vld [vmem:[#allocation5 + $0x1230] sm:$0xff]
    %v655 = vld [vmem:[#allocation5 + $0x1238] sm:$0xff]
    %v656 = vld [vmem:[#allocation5 + $0x1240] sm:$0xff]
    %v657 = vld [vmem:[#allocation5 + $0x1248] sm:$0xff]
    %v658 = vld [vmem:[#allocation5 + $0x1250] sm:$0xff]
    %v659 = vld [vmem:[#allocation5 + $0x1258] sm:$0xff]
    %v660 = vld [vmem:[#allocation5 + $0x1260] sm:$0xff]
    %v661 = vld [vmem:[#allocation5 + $0x1268] sm:$0xff]
    %v662 = vld [vmem:[#allocation5 + $0x1270] sm:$0xff]
    %v663 = vld [vmem:[#allocation5 + $0x1278] sm:$0xff]
    %v664 = vld [vmem:[#allocation5 + $0x1280] sm:$0xff]
    %v665 = vld [vmem:[#allocation5 + $0x1288] sm:$0xff]
    %v666 = vld [vmem:[#allocation5 + $0x1290] sm:$0xff]
    %v667 = vld [vmem:[#allocation5 + $0x1298] sm:$0xff]
    %v668 = vld [vmem:[#allocation5 + $0x12a0] sm:$0xff]
    %v669 = vld [vmem:[#allocation5 + $0x12a8] sm:$0xff]
    %v670 = vld [vmem:[#allocation5 + $0x12b0] sm:$0xff]
    %v671 = vld [vmem:[#allocation5 + $0x12b8] sm:$0xff]
    %v672 = vld [vmem:[#allocation5 + $0x12c0] sm:$0xff]
    %v673 = vld [vmem:[#allocation5 + $0x12c8] sm:$0xff]
    %v674 = vld [vmem:[#allocation5 + $0x12d0] sm:$0xff]
    %v675 = vld [vmem:[#allocation5 + $0x12d8] sm:$0xff]
    %v676 = vld [vmem:[#allocation5 + $0x12e0] sm:$0xff]
    %v677 = vld [vmem:[#allocation5 + $0x12e8] sm:$0xff]
    %v678 = vld [vmem:[#allocation5 + $0x12f0] sm:$0xff]
    %v679 = vld [vmem:[#allocation5 + $0x12f8] sm:$0xff]
    %v680 = vld [vmem:[#allocation5 + $0x1300] sm:$0xff]
    %v681 = vld [vmem:[#allocation5 + $0x1308] sm:$0xff]
    %v682 = vld [vmem:[#allocation5 + $0x1310] sm:$0xff]
    %v683 = vld [vmem:[#allocation5 + $0x1318] sm:$0xff]
    %v684 = vld [vmem:[#allocation5 + $0x1320] sm:$0xff]
    %v685 = vld [vmem:[#allocation5 + $0x1328] sm:$0xff]
    %v686 = vld [vmem:[#allocation5 + $0x1330] sm:$0xff]
    %v687 = vld [vmem:[#allocation5 + $0x1338] sm:$0xff]
    %v688 = vld [vmem:[#allocation5 + $0x1340] sm:$0xff]
    %v689 = vld [vmem:[#allocation5 + $0x1348] sm:$0xff]
    %v690 = vld [vmem:[#allocation5 + $0x1350] sm:$0xff]
    %v691 = vld [vmem:[#allocation5 + $0x1358] sm:$0xff]
    %v692 = vld [vmem:[#allocation5 + $0x1360] sm:$0xff]
    %v693 = vld [vmem:[#allocation5 + $0x1368] sm:$0xff]
    %v694 = vld [vmem:[#allocation5 + $0x1370] sm:$0xff]
    %v695 = vld [vmem:[#allocation5 + $0x1378] sm:$0xff]
    %v696 = vld [vmem:[#allocation5 + $0x1380] sm:$0xff]
    %v697 = vld [vmem:[#allocation5 + $0x1388] sm:$0xff]
    %v698 = vld [vmem:[#allocation5 + $0x1390] sm:$0xff]
    %v699 = vld [vmem:[#allocation5 + $0x1398] sm:$0xff]
    %v700 = vld [vmem:[#allocation5 + $0x13a0] sm:$0xff]
    %v701 = vld [vmem:[#allocation5 + $0x13a8] sm:$0xff]
    %v702 = vld [vmem:[#allocation5 + $0x13b0] sm:$0xff]
    %v703 = vld [vmem:[#allocation5 + $0x13b8] sm:$0xff]
    %v704 = vld [vmem:[#allocation5 + $0x13c0] sm:$0xff]
    %v705 = vld [vmem:[#allocation5 + $0x13c8] sm:$0xff]
    %v706 = vld [vmem:[#allocation5 + $0x13d0] sm:$0xff]
    %v707 = vld [vmem:[#allocation5 + $0x13d8] sm:$0xff]
    %v708 = vld [vmem:[#allocation5 + $0x13e0] sm:$0xff]
    %v709 = vld [vmem:[#allocation5 + $0x13e8] sm:$0xff]
    %v710 = vld [vmem:[#allocation5 + $0x13f0] sm:$0xff]
    %v711 = vld [vmem:[#allocation5 + $0x13f8] sm:$0xff]
    %v712 = vld [vmem:[#allocation5 + $0x1400] sm:$0xff]
    %v713 = vld [vmem:[#allocation5 + $0x1408] sm:$0xff]
    %v714 = vld [vmem:[#allocation5 + $0x1410] sm:$0xff]
    %v715 = vld [vmem:[#allocation5 + $0x1418] sm:$0xff]
    %v716 = vld [vmem:[#allocation5 + $0x1420] sm:$0xff]
    %v717 = vld [vmem:[#allocation5 + $0x1428] sm:$0xff]
    %v718 = vld [vmem:[#allocation5 + $0x1430] sm:$0xff]
    %v719 = vld [vmem:[#allocation5 + $0x1438] sm:$0xff]
    %v720 = vld [vmem:[#allocation5 + $0x1440] sm:$0xff]
    %v721 = vld [vmem:[#allocation5 + $0x1448] sm:$0xff]
    %v722 = vld [vmem:[#allocation5 + $0x1450] sm:$0xff]
    %v723 = vld [vmem:[#allocation5 + $0x1458] sm:$0xff]
    %v724 = vld [vmem:[#allocation5 + $0x1460] sm:$0xff]
    %v725 = vld [vmem:[#allocation5 + $0x1468] sm:$0xff]
    %v726 = vld [vmem:[#allocation5 + $0x1470] sm:$0xff]
    %v727 = vld [vmem:[#allocation5 + $0x1478] sm:$0xff]
    %v728 = vld [vmem:[#allocation5 + $0x1480] sm:$0xff]
    %v729 = vld [vmem:[#allocation5 + $0x1488] sm:$0xff]
    %v730 = vld [vmem:[#allocation5 + $0x1490] sm:$0xff]
    %v731 = vld [vmem:[#allocation5 + $0x1498] sm:$0xff]
    %v732 = vld [vmem:[#allocation5 + $0x14a0] sm:$0xff]
    %v733 = vld [vmem:[#allocation5 + $0x14a8] sm:$0xff]
    %v734 = vld [vmem:[#allocation5 + $0x14b0] sm:$0xff]
    %v735 = vld [vmem:[#allocation5 + $0x14b8] sm:$0xff]
    %v736 = vld [vmem:[#allocation5 + $0x14c0] sm:$0xff]
    %v737 = vld [vmem:[#allocation5 + $0x14c8] sm:$0xff]
    %v738 = vld [vmem:[#allocation5 + $0x14d0] sm:$0xff]
    %v739 = vld [vmem:[#allocation5 + $0x14d8] sm:$0xff]
    %v740 = vld [vmem:[#allocation5 + $0x14e0] sm:$0xff]
    %v741 = vld [vmem:[#allocation5 + $0x14e8] sm:$0xff]
    %v742 = vld [vmem:[#allocation5 + $0x14f0] sm:$0xff]
    %v743 = vld [vmem:[#allocation5 + $0x14f8] sm:$0xff]
    %v744 = vld [vmem:[#allocation5 + $0x1500] sm:$0xff]
    %v745 = vld [vmem:[#allocation5 + $0x1508] sm:$0xff]
    %v746 = vld [vmem:[#allocation5 + $0x1510] sm:$0xff]
    %v747 = vld [vmem:[#allocation5 + $0x1518] sm:$0xff]
    %v748 = vld [vmem:[#allocation5 + $0x1520] sm:$0xff]
    %v749 = vld [vmem:[#allocation5 + $0x1528] sm:$0xff]
    %v750 = vld [vmem:[#allocation5 + $0x1530] sm:$0xff]
    %v751 = vld [vmem:[#allocation5 + $0x1538] sm:$0xff]
    %v752 = vld [vmem:[#allocation5 + $0x1540] sm:$0xff]
    %v753 = vld [vmem:[#allocation5 + $0x1548] sm:$0xff]
    %v754 = vld [vmem:[#allocation5 + $0x1550] sm:$0xff]
    %v755 = vld [vmem:[#allocation5 + $0x1558] sm:$0xff]
    %v756 = vld [vmem:[#allocation5 + $0x1560] sm:$0xff]
    %v757 = vld [vmem:[#allocation5 + $0x1568] sm:$0xff]
    %v758 = vld [vmem:[#allocation5 + $0x1570] sm:$0xff]
    %v759 = vld [vmem:[#allocation5 + $0x1578] sm:$0xff]
    %v760 = vld [vmem:[#allocation5 + $0x1580] sm:$0xff]
    %v761 = vld [vmem:[#allocation5 + $0x1588] sm:$0xff]
    %v762 = vld [vmem:[#allocation5 + $0x1590] sm:$0xff]
    %v763 = vld [vmem:[#allocation5 + $0x1598] sm:$0xff]
    %v764 = vld [vmem:[#allocation5 + $0x15a0] sm:$0xff]
    %v765 = vld [vmem:[#allocation5 + $0x15a8] sm:$0xff]
    %v766 = vld [vmem:[#allocation5 + $0x15b0] sm:$0xff]
    %v767 = vld [vmem:[#allocation5 + $0x15b8] sm:$0xff]
    %v768 = vld [vmem:[#allocation5 + $0x15c0] sm:$0xff]
    %v769 = vld [vmem:[#allocation5 + $0x15c8] sm:$0xff]
    %v770 = vld [vmem:[#allocation5 + $0x15d0] sm:$0xff]
    %v771 = vld [vmem:[#allocation5 + $0x15d8] sm:$0xff]
    %v772 = vld [vmem:[#allocation5 + $0x15e0] sm:$0xff]
    %v773 = vld [vmem:[#allocation5 + $0x15e8] sm:$0xff]
    %v774 = vld [vmem:[#allocation5 + $0x15f0] sm:$0xff]
    %v775 = vld [vmem:[#allocation5 + $0x15f8] sm:$0xff]
    %v776 = vld [vmem:[#allocation5 + $0x1600] sm:$0xff]
    %v777 = vld [vmem:[#allocation5 + $0x1608] sm:$0xff]
    %v778 = vld [vmem:[#allocation5 + $0x1610] sm:$0xff]
    %v779 = vld [vmem:[#allocation5 + $0x1618] sm:$0xff]
    %v780 = vld [vmem:[#allocation5 + $0x1620] sm:$0xff]
    %v781 = vld [vmem:[#allocation5 + $0x1628] sm:$0xff]
    %v782 = vld [vmem:[#allocation5 + $0x1630] sm:$0xff]
    %v783 = vld [vmem:[#allocation5 + $0x1638] sm:$0xff]
    %v784 = vld [vmem:[#allocation5 + $0x1640] sm:$0xff]
    %v785 = vld [vmem:[#allocation5 + $0x1648] sm:$0xff]
    %v786 = vld [vmem:[#allocation5 + $0x1650] sm:$0xff]
    %v787 = vld [vmem:[#allocation5 + $0x1658] sm:$0xff]
    %v788 = vld [vmem:[#allocation5 + $0x1660] sm:$0xff]
    %v789 = vld [vmem:[#allocation5 + $0x1668] sm:$0xff]
    %v790 = vld [vmem:[#allocation5 + $0x1670] sm:$0xff]
    %v791 = vld [vmem:[#allocation5 + $0x1678] sm:$0xff]
    %v792 = vld [vmem:[#allocation5 + $0x1680] sm:$0xff]
    %v793 = vld [vmem:[#allocation5 + $0x1688] sm:$0xff]
    %v794 = vld [vmem:[#allocation5 + $0x1690] sm:$0xff]
    %v795 = vld [vmem:[#allocation5 + $0x1698] sm:$0xff]
    %v796 = vld [vmem:[#allocation5 + $0x16a0] sm:$0xff]
    %v797 = vld [vmem:[#allocation5 + $0x16a8] sm:$0xff]
    %v798 = vld [vmem:[#allocation5 + $0x16b0] sm:$0xff]
    %v799 = vld [vmem:[#allocation5 + $0x16b8] sm:$0xff]
    %v800 = vld [vmem:[#allocation5 + $0x16c0] sm:$0xff]
    %v801 = vld [vmem:[#allocation5 + $0x16c8] sm:$0xff]
    %v802 = vld [vmem:[#allocation5 + $0x16d0] sm:$0xff]
    %v803 = vld [vmem:[#allocation5 + $0x16d8] sm:$0xff]
    %v804 = vld [vmem:[#allocation5 + $0x16e0] sm:$0xff]
    %v805 = vld [vmem:[#allocation5 + $0x16e8] sm:$0xff]
    %v806 = vld [vmem:[#allocation5 + $0x16f0] sm:$0xff]
    %v807 = vld [vmem:[#allocation5 + $0x16f8] sm:$0xff]
    %v808 = vld [vmem:[#allocation5 + $0x1700] sm:$0xff]
    %v809 = vld [vmem:[#allocation5 + $0x1708] sm:$0xff]
    %v810 = vld [vmem:[#allocation5 + $0x1710] sm:$0xff]
    %v811 = vld [vmem:[#allocation5 + $0x1718] sm:$0xff]
    %v812 = vld [vmem:[#allocation5 + $0x1720] sm:$0xff]
    %v813 = vld [vmem:[#allocation5 + $0x1728] sm:$0xff]
    %v814 = vld [vmem:[#allocation5 + $0x1730] sm:$0xff]
    %v815 = vld [vmem:[#allocation5 + $0x1738] sm:$0xff]
    %v816 = vld [vmem:[#allocation5 + $0x1740] sm:$0xff]
    %v817 = vld [vmem:[#allocation5 + $0x1748] sm:$0xff]
    %v818 = vld [vmem:[#allocation5 + $0x1750] sm:$0xff]
    %v819 = vld [vmem:[#allocation5 + $0x1758] sm:$0xff]
    %v820 = vld [vmem:[#allocation5 + $0x1760] sm:$0xff]
    %v821 = vld [vmem:[#allocation5 + $0x1768] sm:$0xff]
    %v822 = vld [vmem:[#allocation5 + $0x1770] sm:$0xff]
    %v823 = vld [vmem:[#allocation5 + $0x1778] sm:$0xff]
    %v824 = vld [vmem:[#allocation5 + $0x1780] sm:$0xff]
    %v825 = vld [vmem:[#allocation5 + $0x1788] sm:$0xff]
    %v826 = vld [vmem:[#allocation5 + $0x1790] sm:$0xff]
    %v827 = vld [vmem:[#allocation5 + $0x1798] sm:$0xff]
    %v828 = vld [vmem:[#allocation5 + $0x17a0] sm:$0xff]
    %v829 = vld [vmem:[#allocation5 + $0x17a8] sm:$0xff]
    %v830 = vld [vmem:[#allocation5 + $0x17b0] sm:$0xff]
    %v831 = vld [vmem:[#allocation5 + $0x17b8] sm:$0xff]
    %v832 = vld [vmem:[#allocation5 + $0x17c0] sm:$0xff]
    %v833 = vld [vmem:[#allocation5 + $0x17c8] sm:$0xff]
    %v834 = vld [vmem:[#allocation5 + $0x17d0] sm:$0xff]
    %v835 = vld [vmem:[#allocation5 + $0x17d8] sm:$0xff]
    %v836 = vld [vmem:[#allocation5 + $0x17e0] sm:$0xff]
    %v837 = vld [vmem:[#allocation5 + $0x17e8] sm:$0xff]
    %v838 = vld [vmem:[#allocation5 + $0x17f0] sm:$0xff]
    %v839 = vld [vmem:[#allocation5 + $0x17f8] sm:$0xff]
    %v1608 = vunpack.c.l.b16 %v72
    %v1609 = vunpack.c.h.b16 %v72
    %v1610 = vunpack.c.l.b16 %v73
    %v1611 = vunpack.c.h.b16 %v73
    %v1612 = vunpack.c.l.b16 %v74
    %v1613 = vunpack.c.h.b16 %v74
    %v1614 = vunpack.c.l.b16 %v75
    %v1615 = vunpack.c.h.b16 %v75
    %v1616 = vunpack.c.l.b16 %v76
    %v1617 = vunpack.c.h.b16 %v76
    %v1618 = vunpack.c.l.b16 %v77
    %v1619 = vunpack.c.h.b16 %v77
    %v1620 = vunpack.c.l.b16 %v78
    %v1621 = vunpack.c.h.b16 %v78
    %v1622 = vunpack.c.l.b16 %v79
    %v1623 = vunpack.c.h.b16 %v79
    %v1624 = vunpack.c.l.b16 %v80
    %v1625 = vunpack.c.h.b16 %v80
    %v1626 = vunpack.c.l.b16 %v81
    %v1627 = vunpack.c.h.b16 %v81
    %v1628 = vunpack.c.l.b16 %v82
    %v1629 = vunpack.c.h.b16 %v82
    %v1630 = vunpack.c.l.b16 %v83
    %v1631 = vunpack.c.h.b16 %v83
    %v1632 = vunpack.c.l.b16 %v84
    %v1633 = vunpack.c.h.b16 %v84
    %v1634 = vunpack.c.l.b16 %v85
    %v1635 = vunpack.c.h.b16 %v85
    %v1636 = vunpack.c.l.b16 %v86
    %v1637 = vunpack.c.h.b16 %v86
    %v1638 = vunpack.c.l.b16 %v87
    %v1639 = vunpack.c.h.b16 %v87
    %v1640 = vunpack.c.l.b16 %v88
    %v1641 = vunpack.c.h.b16 %v88
    %v1642 = vunpack.c.l.b16 %v89
    %v1643 = vunpack.c.h.b16 %v89
    %v1644 = vunpack.c.l.b16 %v90
    %v1645 = vunpack.c.h.b16 %v90
    %v1646 = vunpack.c.l.b16 %v91
    %v1647 = vunpack.c.h.b16 %v91
    %v1648 = vunpack.c.l.b16 %v92
    %v1649 = vunpack.c.h.b16 %v92
    %v1650 = vunpack.c.l.b16 %v93
    %v1651 = vunpack.c.h.b16 %v93
    %v1652 = vunpack.c.l.b16 %v94
    %v1653 = vunpack.c.h.b16 %v94
    %v1654 = vunpack.c.l.b16 %v95
    %v1655 = vunpack.c.h.b16 %v95
    %v1656 = vunpack.c.l.b16 %v96
    %v1657 = vunpack.c.h.b16 %v96
    %v1658 = vunpack.c.l.b16 %v97
    %v1659 = vunpack.c.h.b16 %v97
    %v1660 = vunpack.c.l.b16 %v98
    %v1661 = vunpack.c.h.b16 %v98
    %v1662 = vunpack.c.l.b16 %v99
    %v1663 = vunpack.c.h.b16 %v99
    %v1664 = vunpack.c.l.b16 %v100
    %v1665 = vunpack.c.h.b16 %v100
    %v1666 = vunpack.c.l.b16 %v101
    %v1667 = vunpack.c.h.b16 %v101
    %v1668 = vunpack.c.l.b16 %v102
    %v1669 = vunpack.c.h.b16 %v102
    %v1670 = vunpack.c.l.b16 %v103
    %v1671 = vunpack.c.h.b16 %v103
    %v1672 = vunpack.c.l.b16 %v104
    %v1673 = vunpack.c.h.b16 %v104
    %v1674 = vunpack.c.l.b16 %v105
    %v1675 = vunpack.c.h.b16 %v105
    %v1676 = vunpack.c.l.b16 %v106
    %v1677 = vunpack.c.h.b16 %v106
    %v1678 = vunpack.c.l.b16 %v107
    %v1679 = vunpack.c.h.b16 %v107
    %v1680 = vunpack.c.l.b16 %v108
    %v1681 = vunpack.c.h.b16 %v108
    %v1682 = vunpack.c.l.b16 %v109
    %v1683 = vunpack.c.h.b16 %v109
    %v1684 = vunpack.c.l.b16 %v110
    %v1685 = vunpack.c.h.b16 %v110
    %v1686 = vunpack.c.l.b16 %v111
    %v1687 = vunpack.c.h.b16 %v111
    %v1688 = vunpack.c.l.b16 %v112
    %v1689 = vunpack.c.h.b16 %v112
    %v1690 = vunpack.c.l.b16 %v113
    %v1691 = vunpack.c.h.b16 %v113
    %v1692 = vunpack.c.l.b16 %v114
    %v1693 = vunpack.c.h.b16 %v114
    %v1694 = vunpack.c.l.b16 %v115
    %v1695 = vunpack.c.h.b16 %v115
    %v1696 = vunpack.c.l.b16 %v116
    %v1697 = vunpack.c.h.b16 %v116
    %v1698 = vunpack.c.l.b16 %v117
    %v1699 = vunpack.c.h.b16 %v117
    %v1700 = vunpack.c.l.b16 %v118
    %v1701 = vunpack.c.h.b16 %v118
    %v1702 = vunpack.c.l.b16 %v119
    %v1703 = vunpack.c.h.b16 %v119
    %v1704 = vunpack.c.l.b16 %v120
    %v1705 = vunpack.c.h.b16 %v120
    %v1706 = vunpack.c.l.b16 %v121
    %v1707 = vunpack.c.h.b16 %v121
    %v1708 = vunpack.c.l.b16 %v122
    %v1709 = vunpack.c.h.b16 %v122
    %v1710 = vunpack.c.l.b16 %v123
    %v1711 = vunpack.c.h.b16 %v123
    %v1712 = vunpack.c.l.b16 %v124
    %v1713 = vunpack.c.h.b16 %v124
    %v1714 = vunpack.c.l.b16 %v125
    %v1715 = vunpack.c.h.b16 %v125
    %v1716 = vunpack.c.l.b16 %v126
    %v1717 = vunpack.c.h.b16 %v126
    %v1718 = vunpack.c.l.b16 %v127
    %v1719 = vunpack.c.h.b16 %v127
    %v1720 = vunpack.c.l.b16 %v128
    %v1721 = vunpack.c.h.b16 %v128
    %v1722 = vunpack.c.l.b16 %v129
    %v1723 = vunpack.c.h.b16 %v129
    %v1724 = vunpack.c.l.b16 %v130
    %v1725 = vunpack.c.h.b16 %v130
    %v1726 = vunpack.c.l.b16 %v131
    %v1727 = vunpack.c.h.b16 %v131
    %v1728 = vunpack.c.l.b16 %v132
    %v1729 = vunpack.c.h.b16 %v132
    %v1730 = vunpack.c.l.b16 %v133
    %v1731 = vunpack.c.h.b16 %v133
    %v1732 = vunpack.c.l.b16 %v134
    %v1733 = vunpack.c.h.b16 %v134
    %v1734 = vunpack.c.l.b16 %v135
    %v1735 = vunpack.c.h.b16 %v135
    %v1736 = vunpack.c.l.b16 %v136
    %v1737 = vunpack.c.h.b16 %v136
    %v1738 = vunpack.c.l.b16 %v137
    %v1739 = vunpack.c.h.b16 %v137
    %v1740 = vunpack.c.l.b16 %v138
    %v1741 = vunpack.c.h.b16 %v138
    %v1742 = vunpack.c.l.b16 %v139
    %v1743 = vunpack.c.h.b16 %v139
    %v1744 = vunpack.c.l.b16 %v140
    %v1745 = vunpack.c.h.b16 %v140
    %v1746 = vunpack.c.l.b16 %v141
    %v1747 = vunpack.c.h.b16 %v141
    %v1748 = vunpack.c.l.b16 %v142
    %v1749 = vunpack.c.h.b16 %v142
    %v1750 = vunpack.c.l.b16 %v143
    %v1751 = vunpack.c.h.b16 %v143
    %v1752 = vunpack.c.l.b16 %v144
    %v1753 = vunpack.c.h.b16 %v144
    %v1754 = vunpack.c.l.b16 %v145
    %v1755 = vunpack.c.h.b16 %v145
    %v1756 = vunpack.c.l.b16 %v146
    %v1757 = vunpack.c.h.b16 %v146
    %v1758 = vunpack.c.l.b16 %v147
    %v1759 = vunpack.c.h.b16 %v147
    %v1760 = vunpack.c.l.b16 %v148
    %v1761 = vunpack.c.h.b16 %v148
    %v1762 = vunpack.c.l.b16 %v149
    %v1763 = vunpack.c.h.b16 %v149
    %v1764 = vunpack.c.l.b16 %v150
    %v1765 = vunpack.c.h.b16 %v150
    %v1766 = vunpack.c.l.b16 %v151
    %v1767 = vunpack.c.h.b16 %v151
    %v1768 = vunpack.c.l.b16 %v152
    %v1769 = vunpack.c.h.b16 %v152
    %v1770 = vunpack.c.l.b16 %v153
    %v1771 = vunpack.c.h.b16 %v153
    %v1772 = vunpack.c.l.b16 %v154
    %v1773 = vunpack.c.h.b16 %v154
    %v1774 = vunpack.c.l.b16 %v155
    %v1775 = vunpack.c.h.b16 %v155
    %v1776 = vunpack.c.l.b16 %v156
    %v1777 = vunpack.c.h.b16 %v156
    %v1778 = vunpack.c.l.b16 %v157
    %v1779 = vunpack.c.h.b16 %v157
    %v1780 = vunpack.c.l.b16 %v158
    %v1781 = vunpack.c.h.b16 %v158
    %v1782 = vunpack.c.l.b16 %v159
    %v1783 = vunpack.c.h.b16 %v159
    %v1784 = vunpack.c.l.b16 %v160
    %v1785 = vunpack.c.h.b16 %v160
    %v1786 = vunpack.c.l.b16 %v161
    %v1787 = vunpack.c.h.b16 %v161
    %v1788 = vunpack.c.l.b16 %v162
    %v1789 = vunpack.c.h.b16 %v162
    %v1790 = vunpack.c.l.b16 %v163
    %v1791 = vunpack.c.h.b16 %v163
    %v1792 = vunpack.c.l.b16 %v164
    %v1793 = vunpack.c.h.b16 %v164
    %v1794 = vunpack.c.l.b16 %v165
    %v1795 = vunpack.c.h.b16 %v165
    %v1796 = vunpack.c.l.b16 %v166
    %v1797 = vunpack.c.h.b16 %v166
    %v1798 = vunpack.c.l.b16 %v167
    %v1799 = vunpack.c.h.b16 %v167
    %v1800 = vunpack.c.l.b16 %v168
    %v1801 = vunpack.c.h.b16 %v168
    %v1802 = vunpack.c.l.b16 %v169
    %v1803 = vunpack.c.h.b16 %v169
    %v1804 = vunpack.c.l.b16 %v170
    %v1805 = vunpack.c.h.b16 %v170
    %v1806 = vunpack.c.l.b16 %v171
    %v1807 = vunpack.c.h.b16 %v171
    %v1808 = vunpack.c.l.b16 %v172
    %v1809 = vunpack.c.h.b16 %v172
    %v1810 = vunpack.c.l.b16 %v173
    %v1811 = vunpack.c.h.b16 %v173
    %v1812 = vunpack.c.l.b16 %v174
    %v1813 = vunpack.c.h.b16 %v174
    %v1814 = vunpack.c.l.b16 %v175
    %v1815 = vunpack.c.h.b16 %v175
    %v1816 = vunpack.c.l.b16 %v176
    %v1817 = vunpack.c.h.b16 %v176
    %v1818 = vunpack.c.l.b16 %v177
    %v1819 = vunpack.c.h.b16 %v177
    %v1820 = vunpack.c.l.b16 %v178
    %v1821 = vunpack.c.h.b16 %v178
    %v1822 = vunpack.c.l.b16 %v179
    %v1823 = vunpack.c.h.b16 %v179
    %v1824 = vunpack.c.l.b16 %v180
    %v1825 = vunpack.c.h.b16 %v180
    %v1826 = vunpack.c.l.b16 %v181
    %v1827 = vunpack.c.h.b16 %v181
    %v1828 = vunpack.c.l.b16 %v182
    %v1829 = vunpack.c.h.b16 %v182
    %v1830 = vunpack.c.l.b16 %v183
    %v1831 = vunpack.c.h.b16 %v183
    %v1832 = vunpack.c.l.b16 %v184
    %v1833 = vunpack.c.h.b16 %v184
    %v1834 = vunpack.c.l.b16 %v185
    %v1835 = vunpack.c.h.b16 %v185
    %v1836 = vunpack.c.l.b16 %v186
    %v1837 = vunpack.c.h.b16 %v186
    %v1838 = vunpack.c.l.b16 %v187
    %v1839 = vunpack.c.h.b16 %v187
    %v1840 = vunpack.c.l.b16 %v188
    %v1841 = vunpack.c.h.b16 %v188
    %v1842 = vunpack.c.l.b16 %v189
    %v1843 = vunpack.c.h.b16 %v189
    %v1844 = vunpack.c.l.b16 %v190
    %v1845 = vunpack.c.h.b16 %v190
    %v1846 = vunpack.c.l.b16 %v191
    %v1847 = vunpack.c.h.b16 %v191
    %v1848 = vunpack.c.l.b16 %v192
    %v1849 = vunpack.c.h.b16 %v192
    %v1850 = vunpack.c.l.b16 %v193
    %v1851 = vunpack.c.h.b16 %v193
    %v1852 = vunpack.c.l.b16 %v194
    %v1853 = vunpack.c.h.b16 %v194
    %v1854 = vunpack.c.l.b16 %v195
    %v1855 = vunpack.c.h.b16 %v195
    %v1856 = vunpack.c.l.b16 %v196
    %v1857 = vunpack.c.h.b16 %v196
    %v1858 = vunpack.c.l.b16 %v197
    %v1859 = vunpack.c.h.b16 %v197
    %v1860 = vunpack.c.l.b16 %v198
    %v1861 = vunpack.c.h.b16 %v198
    %v1862 = vunpack.c.l.b16 %v199
    %v1863 = vunpack.c.h.b16 %v199
    %v1864 = vunpack.c.l.b16 %v200
    %v1865 = vunpack.c.h.b16 %v200
    %v1866 = vunpack.c.l.b16 %v201
    %v1867 = vunpack.c.h.b16 %v201
    %v1868 = vunpack.c.l.b16 %v202
    %v1869 = vunpack.c.h.b16 %v202
    %v1870 = vunpack.c.l.b16 %v203
    %v1871 = vunpack.c.h.b16 %v203
    %v1872 = vunpack.c.l.b16 %v204
    %v1873 = vunpack.c.h.b16 %v204
    %v1874 = vunpack.c.l.b16 %v205
    %v1875 = vunpack.c.h.b16 %v205
    %v1876 = vunpack.c.l.b16 %v206
    %v1877 = vunpack.c.h.b16 %v206
    %v1878 = vunpack.c.l.b16 %v207
    %v1879 = vunpack.c.h.b16 %v207
    %v1880 = vunpack.c.l.b16 %v208
    %v1881 = vunpack.c.h.b16 %v208
    %v1882 = vunpack.c.l.b16 %v209
    %v1883 = vunpack.c.h.b16 %v209
    %v1884 = vunpack.c.l.b16 %v210
    %v1885 = vunpack.c.h.b16 %v210
    %v1886 = vunpack.c.l.b16 %v211
    %v1887 = vunpack.c.h.b16 %v211
    %v1888 = vunpack.c.l.b16 %v212
    %v1889 = vunpack.c.h.b16 %v212
    %v1890 = vunpack.c.l.b16 %v213
    %v1891 = vunpack.c.h.b16 %v213
    %v1892 = vunpack.c.l.b16 %v214
    %v1893 = vunpack.c.h.b16 %v214
    %v1894 = vunpack.c.l.b16 %v215
    %v1895 = vunpack.c.h.b16 %v215
    %v1896 = vunpack.c.l.b16 %v216
    %v1897 = vunpack.c.h.b16 %v216
    %v1898 = vunpack.c.l.b16 %v217
    %v1899 = vunpack.c.h.b16 %v217
    %v1900 = vunpack.c.l.b16 %v218
    %v1901 = vunpack.c.h.b16 %v218
    %v1902 = vunpack.c.l.b16 %v219
    %v1903 = vunpack.c.h.b16 %v219
    %v1904 = vunpack.c.l.b16 %v220
    %v1905 = vunpack.c.h.b16 %v220
    %v1906 = vunpack.c.l.b16 %v221
    %v1907 = vunpack.c.h.b16 %v221
    %v1908 = vunpack.c.l.b16 %v222
    %v1909 = vunpack.c.h.b16 %v222
    %v1910 = vunpack.c.l.b16 %v223
    %v1911 = vunpack.c.h.b16 %v223
    %v1912 = vunpack.c.l.b16 %v224
    %v1913 = vunpack.c.h.b16 %v224
    %v1914 = vunpack.c.l.b16 %v225
    %v1915 = vunpack.c.h.b16 %v225
    %v1916 = vunpack.c.l.b16 %v226
    %v1917 = vunpack.c.h.b16 %v226
    %v1918 = vunpack.c.l.b16 %v227
    %v1919 = vunpack.c.h.b16 %v227
    %v1920 = vunpack.c.l.b16 %v228
    %v1921 = vunpack.c.h.b16 %v228
    %v1922 = vunpack.c.l.b16 %v229
    %v1923 = vunpack.c.h.b16 %v229
    %v1924 = vunpack.c.l.b16 %v230
    %v1925 = vunpack.c.h.b16 %v230
    %v1926 = vunpack.c.l.b16 %v231
    %v1927 = vunpack.c.h.b16 %v231
    %v1928 = vunpack.c.l.b16 %v232
    %v1929 = vunpack.c.h.b16 %v232
    %v1930 = vunpack.c.l.b16 %v233
    %v1931 = vunpack.c.h.b16 %v233
    %v1932 = vunpack.c.l.b16 %v234
    %v1933 = vunpack.c.h.b16 %v234
    %v1934 = vunpack.c.l.b16 %v235
    %v1935 = vunpack.c.h.b16 %v235
    %v1936 = vunpack.c.l.b16 %v236
    %v1937 = vunpack.c.h.b16 %v236
    %v1938 = vunpack.c.l.b16 %v237
    %v1939 = vunpack.c.h.b16 %v237
    %v1940 = vunpack.c.l.b16 %v238
    %v1941 = vunpack.c.h.b16 %v238
    %v1942 = vunpack.c.l.b16 %v239
    %v1943 = vunpack.c.h.b16 %v239
    %v1944 = vunpack.c.l.b16 %v240
    %v1945 = vunpack.c.h.b16 %v240
    %v1946 = vunpack.c.l.b16 %v241
    %v1947 = vunpack.c.h.b16 %v241
    %v1948 = vunpack.c.l.b16 %v242
    %v1949 = vunpack.c.h.b16 %v242
    %v1950 = vunpack.c.l.b16 %v243
    %v1951 = vunpack.c.h.b16 %v243
    %v1952 = vunpack.c.l.b16 %v244
    %v1953 = vunpack.c.h.b16 %v244
    %v1954 = vunpack.c.l.b16 %v245
    %v1955 = vunpack.c.h.b16 %v245
    %v1956 = vunpack.c.l.b16 %v246
    %v1957 = vunpack.c.h.b16 %v246
    %v1958 = vunpack.c.l.b16 %v247
    %v1959 = vunpack.c.h.b16 %v247
    %v1960 = vunpack.c.l.b16 %v248
    %v1961 = vunpack.c.h.b16 %v248
    %v1962 = vunpack.c.l.b16 %v249
    %v1963 = vunpack.c.h.b16 %v249
    %v1964 = vunpack.c.l.b16 %v250
    %v1965 = vunpack.c.h.b16 %v250
    %v1966 = vunpack.c.l.b16 %v251
    %v1967 = vunpack.c.h.b16 %v251
    %v1968 = vunpack.c.l.b16 %v252
    %v1969 = vunpack.c.h.b16 %v252
    %v1970 = vunpack.c.l.b16 %v253
    %v1971 = vunpack.c.h.b16 %v253
    %v1972 = vunpack.c.l.b16 %v254
    %v1973 = vunpack.c.h.b16 %v254
    %v1974 = vunpack.c.l.b16 %v255
    %v1975 = vunpack.c.h.b16 %v255
    %v1976 = vunpack.c.l.b16 %v256
    %v1977 = vunpack.c.h.b16 %v256
    %v1978 = vunpack.c.l.b16 %v257
    %v1979 = vunpack.c.h.b16 %v257
    %v1980 = vunpack.c.l.b16 %v258
    %v1981 = vunpack.c.h.b16 %v258
    %v1982 = vunpack.c.l.b16 %v259
    %v1983 = vunpack.c.h.b16 %v259
    %v1984 = vunpack.c.l.b16 %v260
    %v1985 = vunpack.c.h.b16 %v260
    %v1986 = vunpack.c.l.b16 %v261
    %v1987 = vunpack.c.h.b16 %v261
    %v1988 = vunpack.c.l.b16 %v262
    %v1989 = vunpack.c.h.b16 %v262
    %v1990 = vunpack.c.l.b16 %v263
    %v1991 = vunpack.c.h.b16 %v263
    %v1992 = vunpack.c.l.b16 %v264
    %v1993 = vunpack.c.h.b16 %v264
    %v1994 = vunpack.c.l.b16 %v265
    %v1995 = vunpack.c.h.b16 %v265
    %v1996 = vunpack.c.l.b16 %v266
    %v1997 = vunpack.c.h.b16 %v266
    %v1998 = vunpack.c.l.b16 %v267
    %v1999 = vunpack.c.h.b16 %v267
    %v2000 = vunpack.c.l.b16 %v268
    %v2001 = vunpack.c.h.b16 %v268
    %v2002 = vunpack.c.l.b16 %v269
    %v2003 = vunpack.c.h.b16 %v269
    %v2004 = vunpack.c.l.b16 %v270
    %v2005 = vunpack.c.h.b16 %v270
    %v2006 = vunpack.c.l.b16 %v271
    %v2007 = vunpack.c.h.b16 %v271
    %v2008 = vunpack.c.l.b16 %v272
    %v2009 = vunpack.c.h.b16 %v272
    %v2010 = vunpack.c.l.b16 %v273
    %v2011 = vunpack.c.h.b16 %v273
    %v2012 = vunpack.c.l.b16 %v274
    %v2013 = vunpack.c.h.b16 %v274
    %v2014 = vunpack.c.l.b16 %v275
    %v2015 = vunpack.c.h.b16 %v275
    %v2016 = vunpack.c.l.b16 %v276
    %v2017 = vunpack.c.h.b16 %v276
    %v2018 = vunpack.c.l.b16 %v277
    %v2019 = vunpack.c.h.b16 %v277
    %v2020 = vunpack.c.l.b16 %v278
    %v2021 = vunpack.c.h.b16 %v278
    %v2022 = vunpack.c.l.b16 %v279
    %v2023 = vunpack.c.h.b16 %v279
    %v2024 = vunpack.c.l.b16 %v280
    %v2025 = vunpack.c.h.b16 %v280
    %v2026 = vunpack.c.l.b16 %v281
    %v2027 = vunpack.c.h.b16 %v281
    %v2028 = vunpack.c.l.b16 %v282
    %v2029 = vunpack.c.h.b16 %v282
    %v2030 = vunpack.c.l.b16 %v283
    %v2031 = vunpack.c.h.b16 %v283
    %v2032 = vunpack.c.l.b16 %v284
    %v2033 = vunpack.c.h.b16 %v284
    %v2034 = vunpack.c.l.b16 %v285
    %v2035 = vunpack.c.h.b16 %v285
    %v2036 = vunpack.c.l.b16 %v286
    %v2037 = vunpack.c.h.b16 %v286
    %v2038 = vunpack.c.l.b16 %v287
    %v2039 = vunpack.c.h.b16 %v287
    %v2040 = vunpack.c.l.b16 %v288
    %v2041 = vunpack.c.h.b16 %v288
    %v2042 = vunpack.c.l.b16 %v289
    %v2043 = vunpack.c.h.b16 %v289
    %v2044 = vunpack.c.l.b16 %v290
    %v2045 = vunpack.c.h.b16 %v290
    %v2046 = vunpack.c.l.b16 %v291
    %v2047 = vunpack.c.h.b16 %v291
    %v2048 = vunpack.c.l.b16 %v292
    %v2049 = vunpack.c.h.b16 %v292
    %v2050 = vunpack.c.l.b16 %v293
    %v2051 = vunpack.c.h.b16 %v293
    %v2052 = vunpack.c.l.b16 %v294
    %v2053 = vunpack.c.h.b16 %v294
    %v2054 = vunpack.c.l.b16 %v295
    %v2055 = vunpack.c.h.b16 %v295
    %v2056 = vunpack.c.l.b16 %v296
    %v2057 = vunpack.c.h.b16 %v296
    %v2058 = vunpack.c.l.b16 %v297
    %v2059 = vunpack.c.h.b16 %v297
    %v2060 = vunpack.c.l.b16 %v298
    %v2061 = vunpack.c.h.b16 %v298
    %v2062 = vunpack.c.l.b16 %v299
    %v2063 = vunpack.c.h.b16 %v299
    %v2064 = vunpack.c.l.b16 %v300
    %v2065 = vunpack.c.h.b16 %v300
    %v2066 = vunpack.c.l.b16 %v301
    %v2067 = vunpack.c.h.b16 %v301
    %v2068 = vunpack.c.l.b16 %v302
    %v2069 = vunpack.c.h.b16 %v302
    %v2070 = vunpack.c.l.b16 %v303
    %v2071 = vunpack.c.h.b16 %v303
    %v2072 = vunpack.c.l.b16 %v304
    %v2073 = vunpack.c.h.b16 %v304
    %v2074 = vunpack.c.l.b16 %v305
    %v2075 = vunpack.c.h.b16 %v305
    %v2076 = vunpack.c.l.b16 %v306
    %v2077 = vunpack.c.h.b16 %v306
    %v2078 = vunpack.c.l.b16 %v307
    %v2079 = vunpack.c.h.b16 %v307
    %v2080 = vunpack.c.l.b16 %v308
    %v2081 = vunpack.c.h.b16 %v308
    %v2082 = vunpack.c.l.b16 %v309
    %v2083 = vunpack.c.h.b16 %v309
    %v2084 = vunpack.c.l.b16 %v310
    %v2085 = vunpack.c.h.b16 %v310
    %v2086 = vunpack.c.l.b16 %v311
    %v2087 = vunpack.c.h.b16 %v311
    %v2088 = vunpack.c.l.b16 %v312
    %v2089 = vunpack.c.h.b16 %v312
    %v2090 = vunpack.c.l.b16 %v313
    %v2091 = vunpack.c.h.b16 %v313
    %v2092 = vunpack.c.l.b16 %v314
    %v2093 = vunpack.c.h.b16 %v314
    %v2094 = vunpack.c.l.b16 %v315
    %v2095 = vunpack.c.h.b16 %v315
    %v2096 = vunpack.c.l.b16 %v316
    %v2097 = vunpack.c.h.b16 %v316
    %v2098 = vunpack.c.l.b16 %v317
    %v2099 = vunpack.c.h.b16 %v317
    %v2100 = vunpack.c.l.b16 %v318
    %v2101 = vunpack.c.h.b16 %v318
    %v2102 = vunpack.c.l.b16 %v319
    %v2103 = vunpack.c.h.b16 %v319
    %v2104 = vunpack.c.l.b16 %v320
    %v2105 = vunpack.c.h.b16 %v320
    %v2106 = vunpack.c.l.b16 %v321
    %v2107 = vunpack.c.h.b16 %v321
    %v2108 = vunpack.c.l.b16 %v322
    %v2109 = vunpack.c.h.b16 %v322
    %v2110 = vunpack.c.l.b16 %v323
    %v2111 = vunpack.c.h.b16 %v323
    %v2112 = vunpack.c.l.b16 %v324
    %v2113 = vunpack.c.h.b16 %v324
    %v2114 = vunpack.c.l.b16 %v325
    %v2115 = vunpack.c.h.b16 %v325
    %v2116 = vunpack.c.l.b16 %v326
    %v2117 = vunpack.c.h.b16 %v326
    %v2118 = vunpack.c.l.b16 %v327
    %v2119 = vunpack.c.h.b16 %v327
    %v2120 = vunpack.c.l.b16 %v328
    %v2121 = vunpack.c.h.b16 %v328
    %v2122 = vunpack.c.l.b16 %v329
    %v2123 = vunpack.c.h.b16 %v329
    %v2124 = vunpack.c.l.b16 %v330
    %v2125 = vunpack.c.h.b16 %v330
    %v2126 = vunpack.c.l.b16 %v331
    %v2127 = vunpack.c.h.b16 %v331
    %v2128 = vunpack.c.l.b16 %v332
    %v2129 = vunpack.c.h.b16 %v332
    %v2130 = vunpack.c.l.b16 %v333
    %v2131 = vunpack.c.h.b16 %v333
    %v2132 = vunpack.c.l.b16 %v334
    %v2133 = vunpack.c.h.b16 %v334
    %v2134 = vunpack.c.l.b16 %v335
    %v2135 = vunpack.c.h.b16 %v335
    %v2136 = vunpack.c.l.b16 %v336
    %v2137 = vunpack.c.h.b16 %v336
    %v2138 = vunpack.c.l.b16 %v337
    %v2139 = vunpack.c.h.b16 %v337
    %v2140 = vunpack.c.l.b16 %v338
    %v2141 = vunpack.c.h.b16 %v338
    %v2142 = vunpack.c.l.b16 %v339
    %v2143 = vunpack.c.h.b16 %v339
    %v2144 = vunpack.c.l.b16 %v340
    %v2145 = vunpack.c.h.b16 %v340
    %v2146 = vunpack.c.l.b16 %v341
    %v2147 = vunpack.c.h.b16 %v341
    %v2148 = vunpack.c.l.b16 %v342
    %v2149 = vunpack.c.h.b16 %v342
    %v2150 = vunpack.c.l.b16 %v343
    %v2151 = vunpack.c.h.b16 %v343
    %v2152 = vunpack.c.l.b16 %v344
    %v2153 = vunpack.c.h.b16 %v344
    %v2154 = vunpack.c.l.b16 %v345
    %v2155 = vunpack.c.h.b16 %v345
    %v2156 = vunpack.c.l.b16 %v346
    %v2157 = vunpack.c.h.b16 %v346
    %v2158 = vunpack.c.l.b16 %v347
    %v2159 = vunpack.c.h.b16 %v347
    %v2160 = vunpack.c.l.b16 %v348
    %v2161 = vunpack.c.h.b16 %v348
    %v2162 = vunpack.c.l.b16 %v349
    %v2163 = vunpack.c.h.b16 %v349
    %v2164 = vunpack.c.l.b16 %v350
    %v2165 = vunpack.c.h.b16 %v350
    %v2166 = vunpack.c.l.b16 %v351
    %v2167 = vunpack.c.h.b16 %v351
    %v2168 = vunpack.c.l.b16 %v352
    %v2169 = vunpack.c.h.b16 %v352
    %v2170 = vunpack.c.l.b16 %v353
    %v2171 = vunpack.c.h.b16 %v353
    %v2172 = vunpack.c.l.b16 %v354
    %v2173 = vunpack.c.h.b16 %v354
    %v2174 = vunpack.c.l.b16 %v355
    %v2175 = vunpack.c.h.b16 %v355
    %v2176 = vunpack.c.l.b16 %v356
    %v2177 = vunpack.c.h.b16 %v356
    %v2178 = vunpack.c.l.b16 %v357
    %v2179 = vunpack.c.h.b16 %v357
    %v2180 = vunpack.c.l.b16 %v358
    %v2181 = vunpack.c.h.b16 %v358
    %v2182 = vunpack.c.l.b16 %v359
    %v2183 = vunpack.c.h.b16 %v359
    %v2184 = vunpack.c.l.b16 %v360
    %v2185 = vunpack.c.h.b16 %v360
    %v2186 = vunpack.c.l.b16 %v361
    %v2187 = vunpack.c.h.b16 %v361
    %v2188 = vunpack.c.l.b16 %v362
    %v2189 = vunpack.c.h.b16 %v362
    %v2190 = vunpack.c.l.b16 %v363
    %v2191 = vunpack.c.h.b16 %v363
    %v2192 = vunpack.c.l.b16 %v364
    %v2193 = vunpack.c.h.b16 %v364
    %v2194 = vunpack.c.l.b16 %v365
    %v2195 = vunpack.c.h.b16 %v365
    %v2196 = vunpack.c.l.b16 %v366
    %v2197 = vunpack.c.h.b16 %v366
    %v2198 = vunpack.c.l.b16 %v367
    %v2199 = vunpack.c.h.b16 %v367
    %v2200 = vunpack.c.l.b16 %v368
    %v2201 = vunpack.c.h.b16 %v368
    %v2202 = vunpack.c.l.b16 %v369
    %v2203 = vunpack.c.h.b16 %v369
    %v2204 = vunpack.c.l.b16 %v370
    %v2205 = vunpack.c.h.b16 %v370
    %v2206 = vunpack.c.l.b16 %v371
    %v2207 = vunpack.c.h.b16 %v371
    %v2208 = vunpack.c.l.b16 %v372
    %v2209 = vunpack.c.h.b16 %v372
    %v2210 = vunpack.c.l.b16 %v373
    %v2211 = vunpack.c.h.b16 %v373
    %v2212 = vunpack.c.l.b16 %v374
    %v2213 = vunpack.c.h.b16 %v374
    %v2214 = vunpack.c.l.b16 %v375
    %v2215 = vunpack.c.h.b16 %v375
    %v2216 = vunpack.c.l.b16 %v376
    %v2217 = vunpack.c.h.b16 %v376
    %v2218 = vunpack.c.l.b16 %v377
    %v2219 = vunpack.c.h.b16 %v377
    %v2220 = vunpack.c.l.b16 %v378
    %v2221 = vunpack.c.h.b16 %v378
    %v2222 = vunpack.c.l.b16 %v379
    %v2223 = vunpack.c.h.b16 %v379
    %v2224 = vunpack.c.l.b16 %v380
    %v2225 = vunpack.c.h.b16 %v380
    %v2226 = vunpack.c.l.b16 %v381
    %v2227 = vunpack.c.h.b16 %v381
    %v2228 = vunpack.c.l.b16 %v382
    %v2229 = vunpack.c.h.b16 %v382
    %v2230 = vunpack.c.l.b16 %v383
    %v2231 = vunpack.c.h.b16 %v383
    %v2232 = vunpack.c.l.b16 %v384
    %v2233 = vunpack.c.h.b16 %v384
    %v2234 = vunpack.c.l.b16 %v385
    %v2235 = vunpack.c.h.b16 %v385
    %v2236 = vunpack.c.l.b16 %v386
    %v2237 = vunpack.c.h.b16 %v386
    %v2238 = vunpack.c.l.b16 %v387
    %v2239 = vunpack.c.h.b16 %v387
    %v2240 = vunpack.c.l.b16 %v388
    %v2241 = vunpack.c.h.b16 %v388
    %v2242 = vunpack.c.l.b16 %v389
    %v2243 = vunpack.c.h.b16 %v389
    %v2244 = vunpack.c.l.b16 %v390
    %v2245 = vunpack.c.h.b16 %v390
    %v2246 = vunpack.c.l.b16 %v391
    %v2247 = vunpack.c.h.b16 %v391
    %v2248 = vunpack.c.l.b16 %v392
    %v2249 = vunpack.c.h.b16 %v392
    %v2250 = vunpack.c.l.b16 %v393
    %v2251 = vunpack.c.h.b16 %v393
    %v2252 = vunpack.c.l.b16 %v394
    %v2253 = vunpack.c.h.b16 %v394
    %v2254 = vunpack.c.l.b16 %v395
    %v2255 = vunpack.c.h.b16 %v395
    %v2256 = vunpack.c.l.b16 %v396
    %v2257 = vunpack.c.h.b16 %v396
    %v2258 = vunpack.c.l.b16 %v397
    %v2259 = vunpack.c.h.b16 %v397
    %v2260 = vunpack.c.l.b16 %v398
    %v2261 = vunpack.c.h.b16 %v398
    %v2262 = vunpack.c.l.b16 %v399
    %v2263 = vunpack.c.h.b16 %v399
    %v2264 = vunpack.c.l.b16 %v400
    %v2265 = vunpack.c.h.b16 %v400
    %v2266 = vunpack.c.l.b16 %v401
    %v2267 = vunpack.c.h.b16 %v401
    %v2268 = vunpack.c.l.b16 %v402
    %v2269 = vunpack.c.h.b16 %v402
    %v2270 = vunpack.c.l.b16 %v403
    %v2271 = vunpack.c.h.b16 %v403
    %v2272 = vunpack.c.l.b16 %v404
    %v2273 = vunpack.c.h.b16 %v404
    %v2274 = vunpack.c.l.b16 %v405
    %v2275 = vunpack.c.h.b16 %v405
    %v2276 = vunpack.c.l.b16 %v406
    %v2277 = vunpack.c.h.b16 %v406
    %v2278 = vunpack.c.l.b16 %v407
    %v2279 = vunpack.c.h.b16 %v407
    %v2280 = vunpack.c.l.b16 %v408
    %v2281 = vunpack.c.h.b16 %v408
    %v2282 = vunpack.c.l.b16 %v409
    %v2283 = vunpack.c.h.b16 %v409
    %v2284 = vunpack.c.l.b16 %v410
    %v2285 = vunpack.c.h.b16 %v410
    %v2286 = vunpack.c.l.b16 %v411
    %v2287 = vunpack.c.h.b16 %v411
    %v2288 = vunpack.c.l.b16 %v412
    %v2289 = vunpack.c.h.b16 %v412
    %v2290 = vunpack.c.l.b16 %v413
    %v2291 = vunpack.c.h.b16 %v413
    %v2292 = vunpack.c.l.b16 %v414
    %v2293 = vunpack.c.h.b16 %v414
    %v2294 = vunpack.c.l.b16 %v415
    %v2295 = vunpack.c.h.b16 %v415
    %v2296 = vunpack.c.l.b16 %v416
    %v2297 = vunpack.c.h.b16 %v416
    %v2298 = vunpack.c.l.b16 %v417
    %v2299 = vunpack.c.h.b16 %v417
    %v2300 = vunpack.c.l.b16 %v418
    %v2301 = vunpack.c.h.b16 %v418
    %v2302 = vunpack.c.l.b16 %v419
    %v2303 = vunpack.c.h.b16 %v419
    %v2304 = vunpack.c.l.b16 %v420
    %v2305 = vunpack.c.h.b16 %v420
    %v2306 = vunpack.c.l.b16 %v421
    %v2307 = vunpack.c.h.b16 %v421
    %v2308 = vunpack.c.l.b16 %v422
    %v2309 = vunpack.c.h.b16 %v422
    %v2310 = vunpack.c.l.b16 %v423
    %v2311 = vunpack.c.h.b16 %v423
    %v2312 = vunpack.c.l.b16 %v424
    %v2313 = vunpack.c.h.b16 %v424
    %v2314 = vunpack.c.l.b16 %v425
    %v2315 = vunpack.c.h.b16 %v425
    %v2316 = vunpack.c.l.b16 %v426
    %v2317 = vunpack.c.h.b16 %v426
    %v2318 = vunpack.c.l.b16 %v427
    %v2319 = vunpack.c.h.b16 %v427
    %v2320 = vunpack.c.l.b16 %v428
    %v2321 = vunpack.c.h.b16 %v428
    %v2322 = vunpack.c.l.b16 %v429
    %v2323 = vunpack.c.h.b16 %v429
    %v2324 = vunpack.c.l.b16 %v430
    %v2325 = vunpack.c.h.b16 %v430
    %v2326 = vunpack.c.l.b16 %v431
    %v2327 = vunpack.c.h.b16 %v431
    %v2328 = vunpack.c.l.b16 %v432
    %v2329 = vunpack.c.h.b16 %v432
    %v2330 = vunpack.c.l.b16 %v433
    %v2331 = vunpack.c.h.b16 %v433
    %v2332 = vunpack.c.l.b16 %v434
    %v2333 = vunpack.c.h.b16 %v434
    %v2334 = vunpack.c.l.b16 %v435
    %v2335 = vunpack.c.h.b16 %v435
    %v2336 = vunpack.c.l.b16 %v436
    %v2337 = vunpack.c.h.b16 %v436
    %v2338 = vunpack.c.l.b16 %v437
    %v2339 = vunpack.c.h.b16 %v437
    %v2340 = vunpack.c.l.b16 %v438
    %v2341 = vunpack.c.h.b16 %v438
    %v2342 = vunpack.c.l.b16 %v439
    %v2343 = vunpack.c.h.b16 %v439
    %v2344 = vunpack.c.l.b16 %v440
    %v2345 = vunpack.c.h.b16 %v440
    %v2346 = vunpack.c.l.b16 %v441
    %v2347 = vunpack.c.h.b16 %v441
    %v2348 = vunpack.c.l.b16 %v442
    %v2349 = vunpack.c.h.b16 %v442
    %v2350 = vunpack.c.l.b16 %v443
    %v2351 = vunpack.c.h.b16 %v443
    %v2352 = vunpack.c.l.b16 %v444
    %v2353 = vunpack.c.h.b16 %v444
    %v2354 = vunpack.c.l.b16 %v445
    %v2355 = vunpack.c.h.b16 %v445
    %v2356 = vunpack.c.l.b16 %v446
    %v2357 = vunpack.c.h.b16 %v446
    %v2358 = vunpack.c.l.b16 %v447
    %v2359 = vunpack.c.h.b16 %v447
    %v2360 = vunpack.c.l.b16 %v448
    %v2361 = vunpack.c.h.b16 %v448
    %v2362 = vunpack.c.l.b16 %v449
    %v2363 = vunpack.c.h.b16 %v449
    %v2364 = vunpack.c.l.b16 %v450
    %v2365 = vunpack.c.h.b16 %v450
    %v2366 = vunpack.c.l.b16 %v451
    %v2367 = vunpack.c.h.b16 %v451
    %v2368 = vunpack.c.l.b16 %v452
    %v2369 = vunpack.c.h.b16 %v452
    %v2370 = vunpack.c.l.b16 %v453
    %v2371 = vunpack.c.h.b16 %v453
    %v2372 = vunpack.c.l.b16 %v454
    %v2373 = vunpack.c.h.b16 %v454
    %v2374 = vunpack.c.l.b16 %v455
    %v2375 = vunpack.c.h.b16 %v455
    %v2376 = vunpack.c.l.b16 %v456
    %v2377 = vunpack.c.h.b16 %v456
    %v2378 = vunpack.c.l.b16 %v457
    %v2379 = vunpack.c.h.b16 %v457
    %v2380 = vunpack.c.l.b16 %v458
    %v2381 = vunpack.c.h.b16 %v458
    %v2382 = vunpack.c.l.b16 %v459
    %v2383 = vunpack.c.h.b16 %v459
    %v2384 = vunpack.c.l.b16 %v460
    %v2385 = vunpack.c.h.b16 %v460
    %v2386 = vunpack.c.l.b16 %v461
    %v2387 = vunpack.c.h.b16 %v461
    %v2388 = vunpack.c.l.b16 %v462
    %v2389 = vunpack.c.h.b16 %v462
    %v2390 = vunpack.c.l.b16 %v463
    %v2391 = vunpack.c.h.b16 %v463
    %v2392 = vunpack.c.l.b16 %v464
    %v2393 = vunpack.c.h.b16 %v464
    %v2394 = vunpack.c.l.b16 %v465
    %v2395 = vunpack.c.h.b16 %v465
    %v2396 = vunpack.c.l.b16 %v466
    %v2397 = vunpack.c.h.b16 %v466
    %v2398 = vunpack.c.l.b16 %v467
    %v2399 = vunpack.c.h.b16 %v467
    %v2400 = vunpack.c.l.b16 %v468
    %v2401 = vunpack.c.h.b16 %v468
    %v2402 = vunpack.c.l.b16 %v469
    %v2403 = vunpack.c.h.b16 %v469
    %v2404 = vunpack.c.l.b16 %v470
    %v2405 = vunpack.c.h.b16 %v470
    %v2406 = vunpack.c.l.b16 %v471
    %v2407 = vunpack.c.h.b16 %v471
    %v2408 = vunpack.c.l.b16 %v472
    %v2409 = vunpack.c.h.b16 %v472
    %v2410 = vunpack.c.l.b16 %v473
    %v2411 = vunpack.c.h.b16 %v473
    %v2412 = vunpack.c.l.b16 %v474
    %v2413 = vunpack.c.h.b16 %v474
    %v2414 = vunpack.c.l.b16 %v475
    %v2415 = vunpack.c.h.b16 %v475
    %v2416 = vunpack.c.l.b16 %v476
    %v2417 = vunpack.c.h.b16 %v476
    %v2418 = vunpack.c.l.b16 %v477
    %v2419 = vunpack.c.h.b16 %v477
    %v2420 = vunpack.c.l.b16 %v478
    %v2421 = vunpack.c.h.b16 %v478
    %v2422 = vunpack.c.l.b16 %v479
    %v2423 = vunpack.c.h.b16 %v479
    %v2424 = vunpack.c.l.b16 %v480
    %v2425 = vunpack.c.h.b16 %v480
    %v2426 = vunpack.c.l.b16 %v481
    %v2427 = vunpack.c.h.b16 %v481
    %v2428 = vunpack.c.l.b16 %v482
    %v2429 = vunpack.c.h.b16 %v482
    %v2430 = vunpack.c.l.b16 %v483
    %v2431 = vunpack.c.h.b16 %v483
    %v2432 = vunpack.c.l.b16 %v484
    %v2433 = vunpack.c.h.b16 %v484
    %v2434 = vunpack.c.l.b16 %v485
    %v2435 = vunpack.c.h.b16 %v485
    %v2436 = vunpack.c.l.b16 %v486
    %v2437 = vunpack.c.h.b16 %v486
    %v2438 = vunpack.c.l.b16 %v487
    %v2439 = vunpack.c.h.b16 %v487
    %v2440 = vunpack.c.l.b16 %v488
    %v2441 = vunpack.c.h.b16 %v488
    %v2442 = vunpack.c.l.b16 %v489
    %v2443 = vunpack.c.h.b16 %v489
    %v2444 = vunpack.c.l.b16 %v490
    %v2445 = vunpack.c.h.b16 %v490
    %v2446 = vunpack.c.l.b16 %v491
    %v2447 = vunpack.c.h.b16 %v491
    %v2448 = vunpack.c.l.b16 %v492
    %v2449 = vunpack.c.h.b16 %v492
    %v2450 = vunpack.c.l.b16 %v493
    %v2451 = vunpack.c.h.b16 %v493
    %v2452 = vunpack.c.l.b16 %v494
    %v2453 = vunpack.c.h.b16 %v494
    %v2454 = vunpack.c.l.b16 %v495
    %v2455 = vunpack.c.h.b16 %v495
    %v2456 = vunpack.c.l.b16 %v496
    %v2457 = vunpack.c.h.b16 %v496
    %v2458 = vunpack.c.l.b16 %v497
    %v2459 = vunpack.c.h.b16 %v497
    %v2460 = vunpack.c.l.b16 %v498
    %v2461 = vunpack.c.h.b16 %v498
    %v2462 = vunpack.c.l.b16 %v499
    %v2463 = vunpack.c.h.b16 %v499
    %v2464 = vunpack.c.l.b16 %v500
    %v2465 = vunpack.c.h.b16 %v500
    %v2466 = vunpack.c.l.b16 %v501
    %v2467 = vunpack.c.h.b16 %v501
    %v2468 = vunpack.c.l.b16 %v502
    %v2469 = vunpack.c.h.b16 %v502
    %v2470 = vunpack.c.l.b16 %v503
    %v2471 = vunpack.c.h.b16 %v503
    %v2472 = vunpack.c.l.b16 %v504
    %v2473 = vunpack.c.h.b16 %v504
    %v2474 = vunpack.c.l.b16 %v505
    %v2475 = vunpack.c.h.b16 %v505
    %v2476 = vunpack.c.l.b16 %v506
    %v2477 = vunpack.c.h.b16 %v506
    %v2478 = vunpack.c.l.b16 %v507
    %v2479 = vunpack.c.h.b16 %v507
    %v2480 = vunpack.c.l.b16 %v508
    %v2481 = vunpack.c.h.b16 %v508
    %v2482 = vunpack.c.l.b16 %v509
    %v2483 = vunpack.c.h.b16 %v509
    %v2484 = vunpack.c.l.b16 %v510
    %v2485 = vunpack.c.h.b16 %v510
    %v2486 = vunpack.c.l.b16 %v511
    %v2487 = vunpack.c.h.b16 %v511
    %v2488 = vunpack.c.l.b16 %v512
    %v2489 = vunpack.c.h.b16 %v512
    %v2490 = vunpack.c.l.b16 %v513
    %v2491 = vunpack.c.h.b16 %v513
    %v2492 = vunpack.c.l.b16 %v514
    %v2493 = vunpack.c.h.b16 %v514
    %v2494 = vunpack.c.l.b16 %v515
    %v2495 = vunpack.c.h.b16 %v515
    %v2496 = vunpack.c.l.b16 %v516
    %v2497 = vunpack.c.h.b16 %v516
    %v2498 = vunpack.c.l.b16 %v517
    %v2499 = vunpack.c.h.b16 %v517
    %v2500 = vunpack.c.l.b16 %v518
    %v2501 = vunpack.c.h.b16 %v518
    %v2502 = vunpack.c.l.b16 %v519
    %v2503 = vunpack.c.h.b16 %v519
    %v2504 = vunpack.c.l.b16 %v520
    %v2505 = vunpack.c.h.b16 %v520
    %v2506 = vunpack.c.l.b16 %v521
    %v2507 = vunpack.c.h.b16 %v521
    %v2508 = vunpack.c.l.b16 %v522
    %v2509 = vunpack.c.h.b16 %v522
    %v2510 = vunpack.c.l.b16 %v523
    %v2511 = vunpack.c.h.b16 %v523
    %v2512 = vunpack.c.l.b16 %v524
    %v2513 = vunpack.c.h.b16 %v524
    %v2514 = vunpack.c.l.b16 %v525
    %v2515 = vunpack.c.h.b16 %v525
    %v2516 = vunpack.c.l.b16 %v526
    %v2517 = vunpack.c.h.b16 %v526
    %v2518 = vunpack.c.l.b16 %v527
    %v2519 = vunpack.c.h.b16 %v527
    %v2520 = vunpack.c.l.b16 %v528
    %v2521 = vunpack.c.h.b16 %v528
    %v2522 = vunpack.c.l.b16 %v529
    %v2523 = vunpack.c.h.b16 %v529
    %v2524 = vunpack.c.l.b16 %v530
    %v2525 = vunpack.c.h.b16 %v530
    %v2526 = vunpack.c.l.b16 %v531
    %v2527 = vunpack.c.h.b16 %v531
    %v2528 = vunpack.c.l.b16 %v532
    %v2529 = vunpack.c.h.b16 %v532
    %v2530 = vunpack.c.l.b16 %v533
    %v2531 = vunpack.c.h.b16 %v533
    %v2532 = vunpack.c.l.b16 %v534
    %v2533 = vunpack.c.h.b16 %v534
    %v2534 = vunpack.c.l.b16 %v535
    %v2535 = vunpack.c.h.b16 %v535
    %v2536 = vunpack.c.l.b16 %v536
    %v2537 = vunpack.c.h.b16 %v536
    %v2538 = vunpack.c.l.b16 %v537
    %v2539 = vunpack.c.h.b16 %v537
    %v2540 = vunpack.c.l.b16 %v538
    %v2541 = vunpack.c.h.b16 %v538
    %v2542 = vunpack.c.l.b16 %v539
    %v2543 = vunpack.c.h.b16 %v539
    %v2544 = vunpack.c.l.b16 %v540
    %v2545 = vunpack.c.h.b16 %v540
    %v2546 = vunpack.c.l.b16 %v541
    %v2547 = vunpack.c.h.b16 %v541
    %v2548 = vunpack.c.l.b16 %v542
    %v2549 = vunpack.c.h.b16 %v542
    %v2550 = vunpack.c.l.b16 %v543
    %v2551 = vunpack.c.h.b16 %v543
    %v2552 = vunpack.c.l.b16 %v544
    %v2553 = vunpack.c.h.b16 %v544
    %v2554 = vunpack.c.l.b16 %v545
    %v2555 = vunpack.c.h.b16 %v545
    %v2556 = vunpack.c.l.b16 %v546
    %v2557 = vunpack.c.h.b16 %v546
    %v2558 = vunpack.c.l.b16 %v547
    %v2559 = vunpack.c.h.b16 %v547
    %v2560 = vunpack.c.l.b16 %v548
    %v2561 = vunpack.c.h.b16 %v548
    %v2562 = vunpack.c.l.b16 %v549
    %v2563 = vunpack.c.h.b16 %v549
    %v2564 = vunpack.c.l.b16 %v550
    %v2565 = vunpack.c.h.b16 %v550
    %v2566 = vunpack.c.l.b16 %v551
    %v2567 = vunpack.c.h.b16 %v551
    %v2568 = vunpack.c.l.b16 %v552
    %v2569 = vunpack.c.h.b16 %v552
    %v2570 = vunpack.c.l.b16 %v553
    %v2571 = vunpack.c.h.b16 %v553
    %v2572 = vunpack.c.l.b16 %v554
    %v2573 = vunpack.c.h.b16 %v554
    %v2574 = vunpack.c.l.b16 %v555
    %v2575 = vunpack.c.h.b16 %v555
    %v2576 = vunpack.c.l.b16 %v556
    %v2577 = vunpack.c.h.b16 %v556
    %v2578 = vunpack.c.l.b16 %v557
    %v2579 = vunpack.c.h.b16 %v557
    %v2580 = vunpack.c.l.b16 %v558
    %v2581 = vunpack.c.h.b16 %v558
    %v2582 = vunpack.c.l.b16 %v559
    %v2583 = vunpack.c.h.b16 %v559
    %v2584 = vunpack.c.l.b16 %v560
    %v2585 = vunpack.c.h.b16 %v560
    %v2586 = vunpack.c.l.b16 %v561
    %v2587 = vunpack.c.h.b16 %v561
    %v2588 = vunpack.c.l.b16 %v562
    %v2589 = vunpack.c.h.b16 %v562
    %v2590 = vunpack.c.l.b16 %v563
    %v2591 = vunpack.c.h.b16 %v563
    %v2592 = vunpack.c.l.b16 %v564
    %v2593 = vunpack.c.h.b16 %v564
    %v2594 = vunpack.c.l.b16 %v565
    %v2595 = vunpack.c.h.b16 %v565
    %v2596 = vunpack.c.l.b16 %v566
    %v2597 = vunpack.c.h.b16 %v566
    %v2598 = vunpack.c.l.b16 %v567
    %v2599 = vunpack.c.h.b16 %v567
    %v2600 = vunpack.c.l.b16 %v568
    %v2601 = vunpack.c.h.b16 %v568
    %v2602 = vunpack.c.l.b16 %v569
    %v2603 = vunpack.c.h.b16 %v569
    %v2604 = vunpack.c.l.b16 %v570
    %v2605 = vunpack.c.h.b16 %v570
    %v2606 = vunpack.c.l.b16 %v571
    %v2607 = vunpack.c.h.b16 %v571
    %v2608 = vunpack.c.l.b16 %v572
    %v2609 = vunpack.c.h.b16 %v572
    %v2610 = vunpack.c.l.b16 %v573
    %v2611 = vunpack.c.h.b16 %v573
    %v2612 = vunpack.c.l.b16 %v574
    %v2613 = vunpack.c.h.b16 %v574
    %v2614 = vunpack.c.l.b16 %v575
    %v2615 = vunpack.c.h.b16 %v575
    %v2616 = vunpack.c.l.b16 %v576
    %v2617 = vunpack.c.h.b16 %v576
    %v2618 = vunpack.c.l.b16 %v577
    %v2619 = vunpack.c.h.b16 %v577
    %v2620 = vunpack.c.l.b16 %v578
    %v2621 = vunpack.c.h.b16 %v578
    %v2622 = vunpack.c.l.b16 %v579
    %v2623 = vunpack.c.h.b16 %v579
    %v2624 = vunpack.c.l.b16 %v580
    %v2625 = vunpack.c.h.b16 %v580
    %v2626 = vunpack.c.l.b16 %v581
    %v2627 = vunpack.c.h.b16 %v581
    %v2628 = vunpack.c.l.b16 %v582
    %v2629 = vunpack.c.h.b16 %v582
    %v2630 = vunpack.c.l.b16 %v583
    %v2631 = vunpack.c.h.b16 %v583
    %v2632 = vunpack.c.l.b16 %v584
    %v2633 = vunpack.c.h.b16 %v584
    %v2634 = vunpack.c.l.b16 %v585
    %v2635 = vunpack.c.h.b16 %v585
    %v2636 = vunpack.c.l.b16 %v586
    %v2637 = vunpack.c.h.b16 %v586
    %v2638 = vunpack.c.l.b16 %v587
    %v2639 = vunpack.c.h.b16 %v587
    %v2640 = vunpack.c.l.b16 %v588
    %v2641 = vunpack.c.h.b16 %v588
    %v2642 = vunpack.c.l.b16 %v589
    %v2643 = vunpack.c.h.b16 %v589
    %v2644 = vunpack.c.l.b16 %v590
    %v2645 = vunpack.c.h.b16 %v590
    %v2646 = vunpack.c.l.b16 %v591
    %v2647 = vunpack.c.h.b16 %v591
    %v2648 = vunpack.c.l.b16 %v592
    %v2649 = vunpack.c.h.b16 %v592
    %v2650 = vunpack.c.l.b16 %v593
    %v2651 = vunpack.c.h.b16 %v593
    %v2652 = vunpack.c.l.b16 %v594
    %v2653 = vunpack.c.h.b16 %v594
    %v2654 = vunpack.c.l.b16 %v595
    %v2655 = vunpack.c.h.b16 %v595
    %v2656 = vunpack.c.l.b16 %v596
    %v2657 = vunpack.c.h.b16 %v596
    %v2658 = vunpack.c.l.b16 %v597
    %v2659 = vunpack.c.h.b16 %v597
    %v2660 = vunpack.c.l.b16 %v598
    %v2661 = vunpack.c.h.b16 %v598
    %v2662 = vunpack.c.l.b16 %v599
    %v2663 = vunpack.c.h.b16 %v599
    %v2664 = vunpack.c.l.b16 %v600
    %v2665 = vunpack.c.h.b16 %v600
    %v2666 = vunpack.c.l.b16 %v601
    %v2667 = vunpack.c.h.b16 %v601
    %v2668 = vunpack.c.l.b16 %v602
    %v2669 = vunpack.c.h.b16 %v602
    %v2670 = vunpack.c.l.b16 %v603
    %v2671 = vunpack.c.h.b16 %v603
    %v2672 = vunpack.c.l.b16 %v604
    %v2673 = vunpack.c.h.b16 %v604
    %v2674 = vunpack.c.l.b16 %v605
    %v2675 = vunpack.c.h.b16 %v605
    %v2676 = vunpack.c.l.b16 %v606
    %v2677 = vunpack.c.h.b16 %v606
    %v2678 = vunpack.c.l.b16 %v607
    %v2679 = vunpack.c.h.b16 %v607
    %v2680 = vunpack.c.l.b16 %v608
    %v2681 = vunpack.c.h.b16 %v608
    %v2682 = vunpack.c.l.b16 %v609
    %v2683 = vunpack.c.h.b16 %v609
    %v2684 = vunpack.c.l.b16 %v610
    %v2685 = vunpack.c.h.b16 %v610
    %v2686 = vunpack.c.l.b16 %v611
    %v2687 = vunpack.c.h.b16 %v611
    %v2688 = vunpack.c.l.b16 %v612
    %v2689 = vunpack.c.h.b16 %v612
    %v2690 = vunpack.c.l.b16 %v613
    %v2691 = vunpack.c.h.b16 %v613
    %v2692 = vunpack.c.l.b16 %v614
    %v2693 = vunpack.c.h.b16 %v614
    %v2694 = vunpack.c.l.b16 %v615
    %v2695 = vunpack.c.h.b16 %v615
    %v2696 = vunpack.c.l.b16 %v616
    %v2697 = vunpack.c.h.b16 %v616
    %v2698 = vunpack.c.l.b16 %v617
    %v2699 = vunpack.c.h.b16 %v617
    %v2700 = vunpack.c.l.b16 %v618
    %v2701 = vunpack.c.h.b16 %v618
    %v2702 = vunpack.c.l.b16 %v619
    %v2703 = vunpack.c.h.b16 %v619
    %v2704 = vunpack.c.l.b16 %v620
    %v2705 = vunpack.c.h.b16 %v620
    %v2706 = vunpack.c.l.b16 %v621
    %v2707 = vunpack.c.h.b16 %v621
    %v2708 = vunpack.c.l.b16 %v622
    %v2709 = vunpack.c.h.b16 %v622
    %v2710 = vunpack.c.l.b16 %v623
    %v2711 = vunpack.c.h.b16 %v623
    %v2712 = vunpack.c.l.b16 %v624
    %v2713 = vunpack.c.h.b16 %v624
    %v2714 = vunpack.c.l.b16 %v625
    %v2715 = vunpack.c.h.b16 %v625
    %v2716 = vunpack.c.l.b16 %v626
    %v2717 = vunpack.c.h.b16 %v626
    %v2718 = vunpack.c.l.b16 %v627
    %v2719 = vunpack.c.h.b16 %v627
    %v2720 = vunpack.c.l.b16 %v628
    %v2721 = vunpack.c.h.b16 %v628
    %v2722 = vunpack.c.l.b16 %v629
    %v2723 = vunpack.c.h.b16 %v629
    %v2724 = vunpack.c.l.b16 %v630
    %v2725 = vunpack.c.h.b16 %v630
    %v2726 = vunpack.c.l.b16 %v631
    %v2727 = vunpack.c.h.b16 %v631
    %v2728 = vunpack.c.l.b16 %v632
    %v2729 = vunpack.c.h.b16 %v632
    %v2730 = vunpack.c.l.b16 %v633
    %v2731 = vunpack.c.h.b16 %v633
    %v2732 = vunpack.c.l.b16 %v634
    %v2733 = vunpack.c.h.b16 %v634
    %v2734 = vunpack.c.l.b16 %v635
    %v2735 = vunpack.c.h.b16 %v635
    %v2736 = vunpack.c.l.b16 %v636
    %v2737 = vunpack.c.h.b16 %v636
    %v2738 = vunpack.c.l.b16 %v637
    %v2739 = vunpack.c.h.b16 %v637
    %v2740 = vunpack.c.l.b16 %v638
    %v2741 = vunpack.c.h.b16 %v638
    %v2742 = vunpack.c.l.b16 %v639
    %v2743 = vunpack.c.h.b16 %v639
    %v2744 = vunpack.c.l.b16 %v640
    %v2745 = vunpack.c.h.b16 %v640
    %v2746 = vunpack.c.l.b16 %v641
    %v2747 = vunpack.c.h.b16 %v641
    %v2748 = vunpack.c.l.b16 %v642
    %v2749 = vunpack.c.h.b16 %v642
    %v2750 = vunpack.c.l.b16 %v643
    %v2751 = vunpack.c.h.b16 %v643
    %v2752 = vunpack.c.l.b16 %v644
    %v2753 = vunpack.c.h.b16 %v644
    %v2754 = vunpack.c.l.b16 %v645
    %v2755 = vunpack.c.h.b16 %v645
    %v2756 = vunpack.c.l.b16 %v646
    %v2757 = vunpack.c.h.b16 %v646
    %v2758 = vunpack.c.l.b16 %v647
    %v2759 = vunpack.c.h.b16 %v647
    %v2760 = vunpack.c.l.b16 %v648
    %v2761 = vunpack.c.h.b16 %v648
    %v2762 = vunpack.c.l.b16 %v649
    %v2763 = vunpack.c.h.b16 %v649
    %v2764 = vunpack.c.l.b16 %v650
    %v2765 = vunpack.c.h.b16 %v650
    %v2766 = vunpack.c.l.b16 %v651
    %v2767 = vunpack.c.h.b16 %v651
    %v2768 = vunpack.c.l.b16 %v652
    %v2769 = vunpack.c.h.b16 %v652
    %v2770 = vunpack.c.l.b16 %v653
    %v2771 = vunpack.c.h.b16 %v653
    %v2772 = vunpack.c.l.b16 %v654
    %v2773 = vunpack.c.h.b16 %v654
    %v2774 = vunpack.c.l.b16 %v655
    %v2775 = vunpack.c.h.b16 %v655
    %v2776 = vunpack.c.l.b16 %v656
    %v2777 = vunpack.c.h.b16 %v656
    %v2778 = vunpack.c.l.b16 %v657
    %v2779 = vunpack.c.h.b16 %v657
    %v2780 = vunpack.c.l.b16 %v658
    %v2781 = vunpack.c.h.b16 %v658
    %v2782 = vunpack.c.l.b16 %v659
    %v2783 = vunpack.c.h.b16 %v659
    %v2784 = vunpack.c.l.b16 %v660
    %v2785 = vunpack.c.h.b16 %v660
    %v2786 = vunpack.c.l.b16 %v661
    %v2787 = vunpack.c.h.b16 %v661
    %v2788 = vunpack.c.l.b16 %v662
    %v2789 = vunpack.c.h.b16 %v662
    %v2790 = vunpack.c.l.b16 %v663
    %v2791 = vunpack.c.h.b16 %v663
    %v2792 = vunpack.c.l.b16 %v664
    %v2793 = vunpack.c.h.b16 %v664
    %v2794 = vunpack.c.l.b16 %v665
    %v2795 = vunpack.c.h.b16 %v665
    %v2796 = vunpack.c.l.b16 %v666
    %v2797 = vunpack.c.h.b16 %v666
    %v2798 = vunpack.c.l.b16 %v667
    %v2799 = vunpack.c.h.b16 %v667
    %v2800 = vunpack.c.l.b16 %v668
    %v2801 = vunpack.c.h.b16 %v668
    %v2802 = vunpack.c.l.b16 %v669
    %v2803 = vunpack.c.h.b16 %v669
    %v2804 = vunpack.c.l.b16 %v670
    %v2805 = vunpack.c.h.b16 %v670
    %v2806 = vunpack.c.l.b16 %v671
    %v2807 = vunpack.c.h.b16 %v671
    %v2808 = vunpack.c.l.b16 %v672
    %v2809 = vunpack.c.h.b16 %v672
    %v2810 = vunpack.c.l.b16 %v673
    %v2811 = vunpack.c.h.b16 %v673
    %v2812 = vunpack.c.l.b16 %v674
    %v2813 = vunpack.c.h.b16 %v674
    %v2814 = vunpack.c.l.b16 %v675
    %v2815 = vunpack.c.h.b16 %v675
    %v2816 = vunpack.c.l.b16 %v676
    %v2817 = vunpack.c.h.b16 %v676
    %v2818 = vunpack.c.l.b16 %v677
    %v2819 = vunpack.c.h.b16 %v677
    %v2820 = vunpack.c.l.b16 %v678
    %v2821 = vunpack.c.h.b16 %v678
    %v2822 = vunpack.c.l.b16 %v679
    %v2823 = vunpack.c.h.b16 %v679
    %v2824 = vunpack.c.l.b16 %v680
    %v2825 = vunpack.c.h.b16 %v680
    %v2826 = vunpack.c.l.b16 %v681
    %v2827 = vunpack.c.h.b16 %v681
    %v2828 = vunpack.c.l.b16 %v682
    %v2829 = vunpack.c.h.b16 %v682
    %v2830 = vunpack.c.l.b16 %v683
    %v2831 = vunpack.c.h.b16 %v683
    %v2832 = vunpack.c.l.b16 %v684
    %v2833 = vunpack.c.h.b16 %v684
    %v2834 = vunpack.c.l.b16 %v685
    %v2835 = vunpack.c.h.b16 %v685
    %v2836 = vunpack.c.l.b16 %v686
    %v2837 = vunpack.c.h.b16 %v686
    %v2838 = vunpack.c.l.b16 %v687
    %v2839 = vunpack.c.h.b16 %v687
    %v2840 = vunpack.c.l.b16 %v688
    %v2841 = vunpack.c.h.b16 %v688
    %v2842 = vunpack.c.l.b16 %v689
    %v2843 = vunpack.c.h.b16 %v689
    %v2844 = vunpack.c.l.b16 %v690
    %v2845 = vunpack.c.h.b16 %v690
    %v2846 = vunpack.c.l.b16 %v691
    %v2847 = vunpack.c.h.b16 %v691
    %v2848 = vunpack.c.l.b16 %v692
    %v2849 = vunpack.c.h.b16 %v692
    %v2850 = vunpack.c.l.b16 %v693
    %v2851 = vunpack.c.h.b16 %v693
    %v2852 = vunpack.c.l.b16 %v694
    %v2853 = vunpack.c.h.b16 %v694
    %v2854 = vunpack.c.l.b16 %v695
    %v2855 = vunpack.c.h.b16 %v695
    %v2856 = vunpack.c.l.b16 %v696
    %v2857 = vunpack.c.h.b16 %v696
    %v2858 = vunpack.c.l.b16 %v697
    %v2859 = vunpack.c.h.b16 %v697
    %v2860 = vunpack.c.l.b16 %v698
    %v2861 = vunpack.c.h.b16 %v698
    %v2862 = vunpack.c.l.b16 %v699
    %v2863 = vunpack.c.h.b16 %v699
    %v2864 = vunpack.c.l.b16 %v700
    %v2865 = vunpack.c.h.b16 %v700
    %v2866 = vunpack.c.l.b16 %v701
    %v2867 = vunpack.c.h.b16 %v701
    %v2868 = vunpack.c.l.b16 %v702
    %v2869 = vunpack.c.h.b16 %v702
    %v2870 = vunpack.c.l.b16 %v703
    %v2871 = vunpack.c.h.b16 %v703
    %v2872 = vunpack.c.l.b16 %v704
    %v2873 = vunpack.c.h.b16 %v704
    %v2874 = vunpack.c.l.b16 %v705
    %v2875 = vunpack.c.h.b16 %v705
    %v2876 = vunpack.c.l.b16 %v706
    %v2877 = vunpack.c.h.b16 %v706
    %v2878 = vunpack.c.l.b16 %v707
    %v2879 = vunpack.c.h.b16 %v707
    %v2880 = vunpack.c.l.b16 %v708
    %v2881 = vunpack.c.h.b16 %v708
    %v2882 = vunpack.c.l.b16 %v709
    %v2883 = vunpack.c.h.b16 %v709
    %v2884 = vunpack.c.l.b16 %v710
    %v2885 = vunpack.c.h.b16 %v710
    %v2886 = vunpack.c.l.b16 %v711
    %v2887 = vunpack.c.h.b16 %v711
    %v2888 = vunpack.c.l.b16 %v712
    %v2889 = vunpack.c.h.b16 %v712
    %v2890 = vunpack.c.l.b16 %v713
    %v2891 = vunpack.c.h.b16 %v713
    %v2892 = vunpack.c.l.b16 %v714
    %v2893 = vunpack.c.h.b16 %v714
    %v2894 = vunpack.c.l.b16 %v715
    %v2895 = vunpack.c.h.b16 %v715
    %v2896 = vunpack.c.l.b16 %v716
    %v2897 = vunpack.c.h.b16 %v716
    %v2898 = vunpack.c.l.b16 %v717
    %v2899 = vunpack.c.h.b16 %v717
    %v2900 = vunpack.c.l.b16 %v718
    %v2901 = vunpack.c.h.b16 %v718
    %v2902 = vunpack.c.l.b16 %v719
    %v2903 = vunpack.c.h.b16 %v719
    %v2904 = vunpack.c.l.b16 %v720
    %v2905 = vunpack.c.h.b16 %v720
    %v2906 = vunpack.c.l.b16 %v721
    %v2907 = vunpack.c.h.b16 %v721
    %v2908 = vunpack.c.l.b16 %v722
    %v2909 = vunpack.c.h.b16 %v722
    %v2910 = vunpack.c.l.b16 %v723
    %v2911 = vunpack.c.h.b16 %v723
    %v2912 = vunpack.c.l.b16 %v724
    %v2913 = vunpack.c.h.b16 %v724
    %v2914 = vunpack.c.l.b16 %v725
    %v2915 = vunpack.c.h.b16 %v725
    %v2916 = vunpack.c.l.b16 %v726
    %v2917 = vunpack.c.h.b16 %v726
    %v2918 = vunpack.c.l.b16 %v727
    %v2919 = vunpack.c.h.b16 %v727
    %v2920 = vunpack.c.l.b16 %v728
    %v2921 = vunpack.c.h.b16 %v728
    %v2922 = vunpack.c.l.b16 %v729
    %v2923 = vunpack.c.h.b16 %v729
    %v2924 = vunpack.c.l.b16 %v730
    %v2925 = vunpack.c.h.b16 %v730
    %v2926 = vunpack.c.l.b16 %v731
    %v2927 = vunpack.c.h.b16 %v731
    %v2928 = vunpack.c.l.b16 %v732
    %v2929 = vunpack.c.h.b16 %v732
    %v2930 = vunpack.c.l.b16 %v733
    %v2931 = vunpack.c.h.b16 %v733
    %v2932 = vunpack.c.l.b16 %v734
    %v2933 = vunpack.c.h.b16 %v734
    %v2934 = vunpack.c.l.b16 %v735
    %v2935 = vunpack.c.h.b16 %v735
    %v2936 = vunpack.c.l.b16 %v736
    %v2937 = vunpack.c.h.b16 %v736
    %v2938 = vunpack.c.l.b16 %v737
    %v2939 = vunpack.c.h.b16 %v737
    %v2940 = vunpack.c.l.b16 %v738
    %v2941 = vunpack.c.h.b16 %v738
    %v2942 = vunpack.c.l.b16 %v739
    %v2943 = vunpack.c.h.b16 %v739
    %v2944 = vunpack.c.l.b16 %v740
    %v2945 = vunpack.c.h.b16 %v740
    %v2946 = vunpack.c.l.b16 %v741
    %v2947 = vunpack.c.h.b16 %v741
    %v2948 = vunpack.c.l.b16 %v742
    %v2949 = vunpack.c.h.b16 %v742
    %v2950 = vunpack.c.l.b16 %v743
    %v2951 = vunpack.c.h.b16 %v743
    %v2952 = vunpack.c.l.b16 %v744
    %v2953 = vunpack.c.h.b16 %v744
    %v2954 = vunpack.c.l.b16 %v745
    %v2955 = vunpack.c.h.b16 %v745
    %v2956 = vunpack.c.l.b16 %v746
    %v2957 = vunpack.c.h.b16 %v746
    %v2958 = vunpack.c.l.b16 %v747
    %v2959 = vunpack.c.h.b16 %v747
    %v2960 = vunpack.c.l.b16 %v748
    %v2961 = vunpack.c.h.b16 %v748
    %v2962 = vunpack.c.l.b16 %v749
    %v2963 = vunpack.c.h.b16 %v749
    %v2964 = vunpack.c.l.b16 %v750
    %v2965 = vunpack.c.h.b16 %v750
    %v2966 = vunpack.c.l.b16 %v751
    %v2967 = vunpack.c.h.b16 %v751
    %v2968 = vunpack.c.l.b16 %v752
    %v2969 = vunpack.c.h.b16 %v752
    %v2970 = vunpack.c.l.b16 %v753
    %v2971 = vunpack.c.h.b16 %v753
    %v2972 = vunpack.c.l.b16 %v754
    %v2973 = vunpack.c.h.b16 %v754
    %v2974 = vunpack.c.l.b16 %v755
    %v2975 = vunpack.c.h.b16 %v755
    %v2976 = vunpack.c.l.b16 %v756
    %v2977 = vunpack.c.h.b16 %v756
    %v2978 = vunpack.c.l.b16 %v757
    %v2979 = vunpack.c.h.b16 %v757
    %v2980 = vunpack.c.l.b16 %v758
    %v2981 = vunpack.c.h.b16 %v758
    %v2982 = vunpack.c.l.b16 %v759
    %v2983 = vunpack.c.h.b16 %v759
    %v2984 = vunpack.c.l.b16 %v760
    %v2985 = vunpack.c.h.b16 %v760
    %v2986 = vunpack.c.l.b16 %v761
    %v2987 = vunpack.c.h.b16 %v761
    %v2988 = vunpack.c.l.b16 %v762
    %v2989 = vunpack.c.h.b16 %v762
    %v2990 = vunpack.c.l.b16 %v763
    %v2991 = vunpack.c.h.b16 %v763
    %v2992 = vunpack.c.l.b16 %v764
    %v2993 = vunpack.c.h.b16 %v764
    %v2994 = vunpack.c.l.b16 %v765
    %v2995 = vunpack.c.h.b16 %v765
    %v2996 = vunpack.c.l.b16 %v766
    %v2997 = vunpack.c.h.b16 %v766
    %v2998 = vunpack.c.l.b16 %v767
    %v2999 = vunpack.c.h.b16 %v767
    %v3000 = vunpack.c.l.b16 %v768
    %v3001 = vunpack.c.h.b16 %v768
    %v3002 = vunpack.c.l.b16 %v769
    %v3003 = vunpack.c.h.b16 %v769
    %v3004 = vunpack.c.l.b16 %v770
    %v3005 = vunpack.c.h.b16 %v770
    %v3006 = vunpack.c.l.b16 %v771
    %v3007 = vunpack.c.h.b16 %v771
    %v3008 = vunpack.c.l.b16 %v772
    %v3009 = vunpack.c.h.b16 %v772
    %v3010 = vunpack.c.l.b16 %v773
    %v3011 = vunpack.c.h.b16 %v773
    %v3012 = vunpack.c.l.b16 %v774
    %v3013 = vunpack.c.h.b16 %v774
    %v3014 = vunpack.c.l.b16 %v775
    %v3015 = vunpack.c.h.b16 %v775
    %v3016 = vunpack.c.l.b16 %v776
    %v3017 = vunpack.c.h.b16 %v776
    %v3018 = vunpack.c.l.b16 %v777
    %v3019 = vunpack.c.h.b16 %v777
    %v3020 = vunpack.c.l.b16 %v778
    %v3021 = vunpack.c.h.b16 %v778
    %v3022 = vunpack.c.l.b16 %v779
    %v3023 = vunpack.c.h.b16 %v779
    %v3024 = vunpack.c.l.b16 %v780
    %v3025 = vunpack.c.h.b16 %v780
    %v3026 = vunpack.c.l.b16 %v781
    %v3027 = vunpack.c.h.b16 %v781
    %v3028 = vunpack.c.l.b16 %v782
    %v3029 = vunpack.c.h.b16 %v782
    %v3030 = vunpack.c.l.b16 %v783
    %v3031 = vunpack.c.h.b16 %v783
    %v3032 = vunpack.c.l.b16 %v784
    %v3033 = vunpack.c.h.b16 %v784
    %v3034 = vunpack.c.l.b16 %v785
    %v3035 = vunpack.c.h.b16 %v785
    %v3036 = vunpack.c.l.b16 %v786
    %v3037 = vunpack.c.h.b16 %v786
    %v3038 = vunpack.c.l.b16 %v787
    %v3039 = vunpack.c.h.b16 %v787
    %v3040 = vunpack.c.l.b16 %v788
    %v3041 = vunpack.c.h.b16 %v788
    %v3042 = vunpack.c.l.b16 %v789
    %v3043 = vunpack.c.h.b16 %v789
    %v3044 = vunpack.c.l.b16 %v790
    %v3045 = vunpack.c.h.b16 %v790
    %v3046 = vunpack.c.l.b16 %v791
    %v3047 = vunpack.c.h.b16 %v791
    %v3048 = vunpack.c.l.b16 %v792
    %v3049 = vunpack.c.h.b16 %v792
    %v3050 = vunpack.c.l.b16 %v793
    %v3051 = vunpack.c.h.b16 %v793
    %v3052 = vunpack.c.l.b16 %v794
    %v3053 = vunpack.c.h.b16 %v794
    %v3054 = vunpack.c.l.b16 %v795
    %v3055 = vunpack.c.h.b16 %v795
    %v3056 = vunpack.c.l.b16 %v796
    %v3057 = vunpack.c.h.b16 %v796
    %v3058 = vunpack.c.l.b16 %v797
    %v3059 = vunpack.c.h.b16 %v797
    %v3060 = vunpack.c.l.b16 %v798
    %v3061 = vunpack.c.h.b16 %v798
    %v3062 = vunpack.c.l.b16 %v799
    %v3063 = vunpack.c.h.b16 %v799
    %v3064 = vunpack.c.l.b16 %v800
    %v3065 = vunpack.c.h.b16 %v800
    %v3066 = vunpack.c.l.b16 %v801
    %v3067 = vunpack.c.h.b16 %v801
    %v3068 = vunpack.c.l.b16 %v802
    %v3069 = vunpack.c.h.b16 %v802
    %v3070 = vunpack.c.l.b16 %v803
    %v3071 = vunpack.c.h.b16 %v803
    %v3072 = vunpack.c.l.b16 %v804
    %v3073 = vunpack.c.h.b16 %v804
    %v3074 = vunpack.c.l.b16 %v805
    %v3075 = vunpack.c.h.b16 %v805
    %v3076 = vunpack.c.l.b16 %v806
    %v3077 = vunpack.c.h.b16 %v806
    %v3078 = vunpack.c.l.b16 %v807
    %v3079 = vunpack.c.h.b16 %v807
    %v3080 = vunpack.c.l.b16 %v808
    %v3081 = vunpack.c.h.b16 %v808
    %v3082 = vunpack.c.l.b16 %v809
    %v3083 = vunpack.c.h.b16 %v809
    %v3084 = vunpack.c.l.b16 %v810
    %v3085 = vunpack.c.h.b16 %v810
    %v3086 = vunpack.c.l.b16 %v811
    %v3087 = vunpack.c.h.b16 %v811
    %v3088 = vunpack.c.l.b16 %v812
    %v3089 = vunpack.c.h.b16 %v812
    %v3090 = vunpack.c.l.b16 %v813
    %v3091 = vunpack.c.h.b16 %v813
    %v3092 = vunpack.c.l.b16 %v814
    %v3093 = vunpack.c.h.b16 %v814
    %v3094 = vunpack.c.l.b16 %v815
    %v3095 = vunpack.c.h.b16 %v815
    %v3096 = vunpack.c.l.b16 %v816
    %v3097 = vunpack.c.h.b16 %v816
    %v3098 = vunpack.c.l.b16 %v817
    %v3099 = vunpack.c.h.b16 %v817
    %v3100 = vunpack.c.l.b16 %v818
    %v3101 = vunpack.c.h.b16 %v818
    %v3102 = vunpack.c.l.b16 %v819
    %v3103 = vunpack.c.h.b16 %v819
    %v3104 = vunpack.c.l.b16 %v820
    %v3105 = vunpack.c.h.b16 %v820
    %v3106 = vunpack.c.l.b16 %v821
    %v3107 = vunpack.c.h.b16 %v821
    %v3108 = vunpack.c.l.b16 %v822
    %v3109 = vunpack.c.h.b16 %v822
    %v3110 = vunpack.c.l.b16 %v823
    %v3111 = vunpack.c.h.b16 %v823
    %v3112 = vunpack.c.l.b16 %v824
    %v3113 = vunpack.c.h.b16 %v824
    %v3114 = vunpack.c.l.b16 %v825
    %v3115 = vunpack.c.h.b16 %v825
    %v3116 = vunpack.c.l.b16 %v826
    %v3117 = vunpack.c.h.b16 %v826
    %v3118 = vunpack.c.l.b16 %v827
    %v3119 = vunpack.c.h.b16 %v827
    %v3120 = vunpack.c.l.b16 %v828
    %v3121 = vunpack.c.h.b16 %v828
    %v3122 = vunpack.c.l.b16 %v829
    %v3123 = vunpack.c.h.b16 %v829
    %v3124 = vunpack.c.l.b16 %v830
    %v3125 = vunpack.c.h.b16 %v830
    %v3126 = vunpack.c.l.b16 %v831
    %v3127 = vunpack.c.h.b16 %v831
    %v3128 = vunpack.c.l.b16 %v832
    %v3129 = vunpack.c.h.b16 %v832
    %v3130 = vunpack.c.l.b16 %v833
    %v3131 = vunpack.c.h.b16 %v833
    %v3132 = vunpack.c.l.b16 %v834
    %v3133 = vunpack.c.h.b16 %v834
    %v3134 = vunpack.c.l.b16 %v835
    %v3135 = vunpack.c.h.b16 %v835
    %v3136 = vunpack.c.l.b16 %v836
    %v3137 = vunpack.c.h.b16 %v836
    %v3138 = vunpack.c.l.b16 %v837
    %v3139 = vunpack.c.h.b16 %v837
    %v3140 = vunpack.c.l.b16 %v838
    %v3141 = vunpack.c.h.b16 %v838
    %v3142 = vunpack.c.l.b16 %v839
    %v3143 = vunpack.c.h.b16 %v839
    %v3144 = vpack.c.b16 %v1624, %v1608
    %v3145 = vpack.c.b16 %v1625, %v1609
    %v3146 = vpack.c.b16 %v1626, %v1610
    %v3147 = vpack.c.b16 %v1627, %v1611
    %v3148 = vpack.c.b16 %v1628, %v1612
    %v3149 = vpack.c.b16 %v1629, %v1613
    %v3150 = vpack.c.b16 %v1630, %v1614
    %v3151 = vpack.c.b16 %v1631, %v1615
    %v3152 = vpack.c.b16 %v1632, %v1616
    %v3153 = vpack.c.b16 %v1633, %v1617
    %v3154 = vpack.c.b16 %v1634, %v1618
    %v3155 = vpack.c.b16 %v1635, %v1619
    %v3156 = vpack.c.b16 %v1636, %v1620
    %v3157 = vpack.c.b16 %v1637, %v1621
    %v3158 = vpack.c.b16 %v1638, %v1622
    %v3159 = vpack.c.b16 %v1639, %v1623
    %v3160 = vpack.c.b16 %v1656, %v1640
    %v3161 = vpack.c.b16 %v1657, %v1641
    %v3162 = vpack.c.b16 %v1658, %v1642
    %v3163 = vpack.c.b16 %v1659, %v1643
    %v3164 = vpack.c.b16 %v1660, %v1644
    %v3165 = vpack.c.b16 %v1661, %v1645
    %v3166 = vpack.c.b16 %v1662, %v1646
    %v3167 = vpack.c.b16 %v1663, %v1647
    %v3168 = vpack.c.b16 %v1664, %v1648
    %v3169 = vpack.c.b16 %v1665, %v1649
    %v3170 = vpack.c.b16 %v1666, %v1650
    %v3171 = vpack.c.b16 %v1667, %v1651
    %v3172 = vpack.c.b16 %v1668, %v1652
    %v3173 = vpack.c.b16 %v1669, %v1653
    %v3174 = vpack.c.b16 %v1670, %v1654
    %v3175 = vpack.c.b16 %v1671, %v1655
    %v3176 = vpack.c.b16 %v1688, %v1672
    %v3177 = vpack.c.b16 %v1689, %v1673
    %v3178 = vpack.c.b16 %v1690, %v1674
    %v3179 = vpack.c.b16 %v1691, %v1675
    %v3180 = vpack.c.b16 %v1692, %v1676
    %v3181 = vpack.c.b16 %v1693, %v1677
    %v3182 = vpack.c.b16 %v1694, %v1678
    %v3183 = vpack.c.b16 %v1695, %v1679
    %v3184 = vpack.c.b16 %v1696, %v1680
    %v3185 = vpack.c.b16 %v1697, %v1681
    %v3186 = vpack.c.b16 %v1698, %v1682
    %v3187 = vpack.c.b16 %v1699, %v1683
    %v3188 = vpack.c.b16 %v1700, %v1684
    %v3189 = vpack.c.b16 %v1701, %v1685
    %v3190 = vpack.c.b16 %v1702, %v1686
    %v3191 = vpack.c.b16 %v1703, %v1687
    %v3192 = vpack.c.b16 %v1720, %v1704
    %v3193 = vpack.c.b16 %v1721, %v1705
    %v3194 = vpack.c.b16 %v1722, %v1706
    %v3195 = vpack.c.b16 %v1723, %v1707
    %v3196 = vpack.c.b16 %v1724, %v1708
    %v3197 = vpack.c.b16 %v1725, %v1709
    %v3198 = vpack.c.b16 %v1726, %v1710
    %v3199 = vpack.c.b16 %v1727, %v1711
    %v3200 = vpack.c.b16 %v1728, %v1712
    %v3201 = vpack.c.b16 %v1729, %v1713
    %v3202 = vpack.c.b16 %v1730, %v1714
    %v3203 = vpack.c.b16 %v1731, %v1715
    %v3204 = vpack.c.b16 %v1732, %v1716
    %v3205 = vpack.c.b16 %v1733, %v1717
    %v3206 = vpack.c.b16 %v1734, %v1718
    %v3207 = vpack.c.b16 %v1735, %v1719
    %v3208 = vpack.c.b16 %v1752, %v1736
    %v3209 = vpack.c.b16 %v1753, %v1737
    %v3210 = vpack.c.b16 %v1754, %v1738
    %v3211 = vpack.c.b16 %v1755, %v1739
    %v3212 = vpack.c.b16 %v1756, %v1740
    %v3213 = vpack.c.b16 %v1757, %v1741
    %v3214 = vpack.c.b16 %v1758, %v1742
    %v3215 = vpack.c.b16 %v1759, %v1743
    %v3216 = vpack.c.b16 %v1760, %v1744
    %v3217 = vpack.c.b16 %v1761, %v1745
    %v3218 = vpack.c.b16 %v1762, %v1746
    %v3219 = vpack.c.b16 %v1763, %v1747
    %v3220 = vpack.c.b16 %v1764, %v1748
    %v3221 = vpack.c.b16 %v1765, %v1749
    %v3222 = vpack.c.b16 %v1766, %v1750
    %v3223 = vpack.c.b16 %v1767, %v1751
    %v3224 = vpack.c.b16 %v1784, %v1768
    %v3225 = vpack.c.b16 %v1785, %v1769
    %v3226 = vpack.c.b16 %v1786, %v1770
    %v3227 = vpack.c.b16 %v1787, %v1771
    %v3228 = vpack.c.b16 %v1788, %v1772
    %v3229 = vpack.c.b16 %v1789, %v1773
    %v3230 = vpack.c.b16 %v1790, %v1774
    %v3231 = vpack.c.b16 %v1791, %v1775
    %v3232 = vpack.c.b16 %v1792, %v1776
    %v3233 = vpack.c.b16 %v1793, %v1777
    %v3234 = vpack.c.b16 %v1794, %v1778
    %v3235 = vpack.c.b16 %v1795, %v1779
    %v3236 = vpack.c.b16 %v1796, %v1780
    %v3237 = vpack.c.b16 %v1797, %v1781
    %v3238 = vpack.c.b16 %v1798, %v1782
    %v3239 = vpack.c.b16 %v1799, %v1783
    %v3240 = vpack.c.b16 %v1816, %v1800
    %v3241 = vpack.c.b16 %v1817, %v1801
    %v3242 = vpack.c.b16 %v1818, %v1802
    %v3243 = vpack.c.b16 %v1819, %v1803
    %v3244 = vpack.c.b16 %v1820, %v1804
    %v3245 = vpack.c.b16 %v1821, %v1805
    %v3246 = vpack.c.b16 %v1822, %v1806
    %v3247 = vpack.c.b16 %v1823, %v1807
    %v3248 = vpack.c.b16 %v1824, %v1808
    %v3249 = vpack.c.b16 %v1825, %v1809
    %v3250 = vpack.c.b16 %v1826, %v1810
    %v3251 = vpack.c.b16 %v1827, %v1811
    %v3252 = vpack.c.b16 %v1828, %v1812
    %v3253 = vpack.c.b16 %v1829, %v1813
    %v3254 = vpack.c.b16 %v1830, %v1814
    %v3255 = vpack.c.b16 %v1831, %v1815
    %v3256 = vpack.c.b16 %v1848, %v1832
    %v3257 = vpack.c.b16 %v1849, %v1833
    %v3258 = vpack.c.b16 %v1850, %v1834
    %v3259 = vpack.c.b16 %v1851, %v1835
    %v3260 = vpack.c.b16 %v1852, %v1836
    %v3261 = vpack.c.b16 %v1853, %v1837
    %v3262 = vpack.c.b16 %v1854, %v1838
    %v3263 = vpack.c.b16 %v1855, %v1839
    %v3264 = vpack.c.b16 %v1856, %v1840
    %v3265 = vpack.c.b16 %v1857, %v1841
    %v3266 = vpack.c.b16 %v1858, %v1842
    %v3267 = vpack.c.b16 %v1859, %v1843
    %v3268 = vpack.c.b16 %v1860, %v1844
    %v3269 = vpack.c.b16 %v1861, %v1845
    %v3270 = vpack.c.b16 %v1862, %v1846
    %v3271 = vpack.c.b16 %v1863, %v1847
    %v3272 = vpack.c.b16 %v1880, %v1864
    %v3273 = vpack.c.b16 %v1881, %v1865
    %v3274 = vpack.c.b16 %v1882, %v1866
    %v3275 = vpack.c.b16 %v1883, %v1867
    %v3276 = vpack.c.b16 %v1884, %v1868
    %v3277 = vpack.c.b16 %v1885, %v1869
    %v3278 = vpack.c.b16 %v1886, %v1870
    %v3279 = vpack.c.b16 %v1887, %v1871
    %v3280 = vpack.c.b16 %v1888, %v1872
    %v3281 = vpack.c.b16 %v1889, %v1873
    %v3282 = vpack.c.b16 %v1890, %v1874
    %v3283 = vpack.c.b16 %v1891, %v1875
    %v3284 = vpack.c.b16 %v1892, %v1876
    %v3285 = vpack.c.b16 %v1893, %v1877
    %v3286 = vpack.c.b16 %v1894, %v1878
    %v3287 = vpack.c.b16 %v1895, %v1879
    %v3288 = vpack.c.b16 %v1912, %v1896
    %v3289 = vpack.c.b16 %v1913, %v1897
    %v3290 = vpack.c.b16 %v1914, %v1898
    %v3291 = vpack.c.b16 %v1915, %v1899
    %v3292 = vpack.c.b16 %v1916, %v1900
    %v3293 = vpack.c.b16 %v1917, %v1901
    %v3294 = vpack.c.b16 %v1918, %v1902
    %v3295 = vpack.c.b16 %v1919, %v1903
    %v3296 = vpack.c.b16 %v1920, %v1904
    %v3297 = vpack.c.b16 %v1921, %v1905
    %v3298 = vpack.c.b16 %v1922, %v1906
    %v3299 = vpack.c.b16 %v1923, %v1907
    %v3300 = vpack.c.b16 %v1924, %v1908
    %v3301 = vpack.c.b16 %v1925, %v1909
    %v3302 = vpack.c.b16 %v1926, %v1910
    %v3303 = vpack.c.b16 %v1927, %v1911
    %v3304 = vpack.c.b16 %v1944, %v1928
    %v3305 = vpack.c.b16 %v1945, %v1929
    %v3306 = vpack.c.b16 %v1946, %v1930
    %v3307 = vpack.c.b16 %v1947, %v1931
    %v3308 = vpack.c.b16 %v1948, %v1932
    %v3309 = vpack.c.b16 %v1949, %v1933
    %v3310 = vpack.c.b16 %v1950, %v1934
    %v3311 = vpack.c.b16 %v1951, %v1935
    %v3312 = vpack.c.b16 %v1952, %v1936
    %v3313 = vpack.c.b16 %v1953, %v1937
    %v3314 = vpack.c.b16 %v1954, %v1938
    %v3315 = vpack.c.b16 %v1955, %v1939
    %v3316 = vpack.c.b16 %v1956, %v1940
    %v3317 = vpack.c.b16 %v1957, %v1941
    %v3318 = vpack.c.b16 %v1958, %v1942
    %v3319 = vpack.c.b16 %v1959, %v1943
    %v3320 = vpack.c.b16 %v1976, %v1960
    %v3321 = vpack.c.b16 %v1977, %v1961
    %v3322 = vpack.c.b16 %v1978, %v1962
    %v3323 = vpack.c.b16 %v1979, %v1963
    %v3324 = vpack.c.b16 %v1980, %v1964
    %v3325 = vpack.c.b16 %v1981, %v1965
    %v3326 = vpack.c.b16 %v1982, %v1966
    %v3327 = vpack.c.b16 %v1983, %v1967
    %v3328 = vpack.c.b16 %v1984, %v1968
    %v3329 = vpack.c.b16 %v1985, %v1969
    %v3330 = vpack.c.b16 %v1986, %v1970
    %v3331 = vpack.c.b16 %v1987, %v1971
    %v3332 = vpack.c.b16 %v1988, %v1972
    %v3333 = vpack.c.b16 %v1989, %v1973
    %v3334 = vpack.c.b16 %v1990, %v1974
    %v3335 = vpack.c.b16 %v1991, %v1975
    %v3336 = vpack.c.b16 %v2008, %v1992
    %v3337 = vpack.c.b16 %v2009, %v1993
    %v3338 = vpack.c.b16 %v2010, %v1994
    %v3339 = vpack.c.b16 %v2011, %v1995
    %v3340 = vpack.c.b16 %v2012, %v1996
    %v3341 = vpack.c.b16 %v2013, %v1997
    %v3342 = vpack.c.b16 %v2014, %v1998
    %v3343 = vpack.c.b16 %v2015, %v1999
    %v3344 = vpack.c.b16 %v2016, %v2000
    %v3345 = vpack.c.b16 %v2017, %v2001
    %v3346 = vpack.c.b16 %v2018, %v2002
    %v3347 = vpack.c.b16 %v2019, %v2003
    %v3348 = vpack.c.b16 %v2020, %v2004
    %v3349 = vpack.c.b16 %v2021, %v2005
    %v3350 = vpack.c.b16 %v2022, %v2006
    %v3351 = vpack.c.b16 %v2023, %v2007
    %v3352 = vpack.c.b16 %v2040, %v2024
    %v3353 = vpack.c.b16 %v2041, %v2025
    %v3354 = vpack.c.b16 %v2042, %v2026
    %v3355 = vpack.c.b16 %v2043, %v2027
    %v3356 = vpack.c.b16 %v2044, %v2028
    %v3357 = vpack.c.b16 %v2045, %v2029
    %v3358 = vpack.c.b16 %v2046, %v2030
    %v3359 = vpack.c.b16 %v2047, %v2031
    %v3360 = vpack.c.b16 %v2048, %v2032
    %v3361 = vpack.c.b16 %v2049, %v2033
    %v3362 = vpack.c.b16 %v2050, %v2034
    %v3363 = vpack.c.b16 %v2051, %v2035
    %v3364 = vpack.c.b16 %v2052, %v2036
    %v3365 = vpack.c.b16 %v2053, %v2037
    %v3366 = vpack.c.b16 %v2054, %v2038
    %v3367 = vpack.c.b16 %v2055, %v2039
    %v3368 = vpack.c.b16 %v2072, %v2056
    %v3369 = vpack.c.b16 %v2073, %v2057
    %v3370 = vpack.c.b16 %v2074, %v2058
    %v3371 = vpack.c.b16 %v2075, %v2059
    %v3372 = vpack.c.b16 %v2076, %v2060
    %v3373 = vpack.c.b16 %v2077, %v2061
    %v3374 = vpack.c.b16 %v2078, %v2062
    %v3375 = vpack.c.b16 %v2079, %v2063
    %v3376 = vpack.c.b16 %v2080, %v2064
    %v3377 = vpack.c.b16 %v2081, %v2065
    %v3378 = vpack.c.b16 %v2082, %v2066
    %v3379 = vpack.c.b16 %v2083, %v2067
    %v3380 = vpack.c.b16 %v2084, %v2068
    %v3381 = vpack.c.b16 %v2085, %v2069
    %v3382 = vpack.c.b16 %v2086, %v2070
    %v3383 = vpack.c.b16 %v2087, %v2071
    %v3384 = vpack.c.b16 %v2104, %v2088
    %v3385 = vpack.c.b16 %v2105, %v2089
    %v3386 = vpack.c.b16 %v2106, %v2090
    %v3387 = vpack.c.b16 %v2107, %v2091
    %v3388 = vpack.c.b16 %v2108, %v2092
    %v3389 = vpack.c.b16 %v2109, %v2093
    %v3390 = vpack.c.b16 %v2110, %v2094
    %v3391 = vpack.c.b16 %v2111, %v2095
    %v3392 = vpack.c.b16 %v2112, %v2096
    %v3393 = vpack.c.b16 %v2113, %v2097
    %v3394 = vpack.c.b16 %v2114, %v2098
    %v3395 = vpack.c.b16 %v2115, %v2099
    %v3396 = vpack.c.b16 %v2116, %v2100
    %v3397 = vpack.c.b16 %v2117, %v2101
    %v3398 = vpack.c.b16 %v2118, %v2102
    %v3399 = vpack.c.b16 %v2119, %v2103
    %v3400 = vpack.c.b16 %v2136, %v2120
    %v3401 = vpack.c.b16 %v2137, %v2121
    %v3402 = vpack.c.b16 %v2138, %v2122
    %v3403 = vpack.c.b16 %v2139, %v2123
    %v3404 = vpack.c.b16 %v2140, %v2124
    %v3405 = vpack.c.b16 %v2141, %v2125
    %v3406 = vpack.c.b16 %v2142, %v2126
    %v3407 = vpack.c.b16 %v2143, %v2127
    %v3408 = vpack.c.b16 %v2144, %v2128
    %v3409 = vpack.c.b16 %v2145, %v2129
    %v3410 = vpack.c.b16 %v2146, %v2130
    %v3411 = vpack.c.b16 %v2147, %v2131
    %v3412 = vpack.c.b16 %v2148, %v2132
    %v3413 = vpack.c.b16 %v2149, %v2133
    %v3414 = vpack.c.b16 %v2150, %v2134
    %v3415 = vpack.c.b16 %v2151, %v2135
    %v3416 = vpack.c.b16 %v2168, %v2152
    %v3417 = vpack.c.b16 %v2169, %v2153
    %v3418 = vpack.c.b16 %v2170, %v2154
    %v3419 = vpack.c.b16 %v2171, %v2155
    %v3420 = vpack.c.b16 %v2172, %v2156
    %v3421 = vpack.c.b16 %v2173, %v2157
    %v3422 = vpack.c.b16 %v2174, %v2158
    %v3423 = vpack.c.b16 %v2175, %v2159
    %v3424 = vpack.c.b16 %v2176, %v2160
    %v3425 = vpack.c.b16 %v2177, %v2161
    %v3426 = vpack.c.b16 %v2178, %v2162
    %v3427 = vpack.c.b16 %v2179, %v2163
    %v3428 = vpack.c.b16 %v2180, %v2164
    %v3429 = vpack.c.b16 %v2181, %v2165
    %v3430 = vpack.c.b16 %v2182, %v2166
    %v3431 = vpack.c.b16 %v2183, %v2167
    %v3432 = vpack.c.b16 %v2200, %v2184
    %v3433 = vpack.c.b16 %v2201, %v2185
    %v3434 = vpack.c.b16 %v2202, %v2186
    %v3435 = vpack.c.b16 %v2203, %v2187
    %v3436 = vpack.c.b16 %v2204, %v2188
    %v3437 = vpack.c.b16 %v2205, %v2189
    %v3438 = vpack.c.b16 %v2206, %v2190
    %v3439 = vpack.c.b16 %v2207, %v2191
    %v3440 = vpack.c.b16 %v2208, %v2192
    %v3441 = vpack.c.b16 %v2209, %v2193
    %v3442 = vpack.c.b16 %v2210, %v2194
    %v3443 = vpack.c.b16 %v2211, %v2195
    %v3444 = vpack.c.b16 %v2212, %v2196
    %v3445 = vpack.c.b16 %v2213, %v2197
    %v3446 = vpack.c.b16 %v2214, %v2198
    %v3447 = vpack.c.b16 %v2215, %v2199
    %v3448 = vpack.c.b16 %v2232, %v2216
    %v3449 = vpack.c.b16 %v2233, %v2217
    %v3450 = vpack.c.b16 %v2234, %v2218
    %v3451 = vpack.c.b16 %v2235, %v2219
    %v3452 = vpack.c.b16 %v2236, %v2220
    %v3453 = vpack.c.b16 %v2237, %v2221
    %v3454 = vpack.c.b16 %v2238, %v2222
    %v3455 = vpack.c.b16 %v2239, %v2223
    %v3456 = vpack.c.b16 %v2240, %v2224
    %v3457 = vpack.c.b16 %v2241, %v2225
    %v3458 = vpack.c.b16 %v2242, %v2226
    %v3459 = vpack.c.b16 %v2243, %v2227
    %v3460 = vpack.c.b16 %v2244, %v2228
    %v3461 = vpack.c.b16 %v2245, %v2229
    %v3462 = vpack.c.b16 %v2246, %v2230
    %v3463 = vpack.c.b16 %v2247, %v2231
    %v3464 = vpack.c.b16 %v2264, %v2248
    %v3465 = vpack.c.b16 %v2265, %v2249
    %v3466 = vpack.c.b16 %v2266, %v2250
    %v3467 = vpack.c.b16 %v2267, %v2251
    %v3468 = vpack.c.b16 %v2268, %v2252
    %v3469 = vpack.c.b16 %v2269, %v2253
    %v3470 = vpack.c.b16 %v2270, %v2254
    %v3471 = vpack.c.b16 %v2271, %v2255
    %v3472 = vpack.c.b16 %v2272, %v2256
    %v3473 = vpack.c.b16 %v2273, %v2257
    %v3474 = vpack.c.b16 %v2274, %v2258
    %v3475 = vpack.c.b16 %v2275, %v2259
    %v3476 = vpack.c.b16 %v2276, %v2260
    %v3477 = vpack.c.b16 %v2277, %v2261
    %v3478 = vpack.c.b16 %v2278, %v2262
    %v3479 = vpack.c.b16 %v2279, %v2263
    %v3480 = vpack.c.b16 %v2296, %v2280
    %v3481 = vpack.c.b16 %v2297, %v2281
    %v3482 = vpack.c.b16 %v2298, %v2282
    %v3483 = vpack.c.b16 %v2299, %v2283
    %v3484 = vpack.c.b16 %v2300, %v2284
    %v3485 = vpack.c.b16 %v2301, %v2285
    %v3486 = vpack.c.b16 %v2302, %v2286
    %v3487 = vpack.c.b16 %v2303, %v2287
    %v3488 = vpack.c.b16 %v2304, %v2288
    %v3489 = vpack.c.b16 %v2305, %v2289
    %v3490 = vpack.c.b16 %v2306, %v2290
    %v3491 = vpack.c.b16 %v2307, %v2291
    %v3492 = vpack.c.b16 %v2308, %v2292
    %v3493 = vpack.c.b16 %v2309, %v2293
    %v3494 = vpack.c.b16 %v2310, %v2294
    %v3495 = vpack.c.b16 %v2311, %v2295
    %v3496 = vpack.c.b16 %v2328, %v2312
    %v3497 = vpack.c.b16 %v2329, %v2313
    %v3498 = vpack.c.b16 %v2330, %v2314
    %v3499 = vpack.c.b16 %v2331, %v2315
    %v3500 = vpack.c.b16 %v2332, %v2316
    %v3501 = vpack.c.b16 %v2333, %v2317
    %v3502 = vpack.c.b16 %v2334, %v2318
    %v3503 = vpack.c.b16 %v2335, %v2319
    %v3504 = vpack.c.b16 %v2336, %v2320
    %v3505 = vpack.c.b16 %v2337, %v2321
    %v3506 = vpack.c.b16 %v2338, %v2322
    %v3507 = vpack.c.b16 %v2339, %v2323
    %v3508 = vpack.c.b16 %v2340, %v2324
    %v3509 = vpack.c.b16 %v2341, %v2325
    %v3510 = vpack.c.b16 %v2342, %v2326
    %v3511 = vpack.c.b16 %v2343, %v2327
    %v3512 = vpack.c.b16 %v2360, %v2344
    %v3513 = vpack.c.b16 %v2361, %v2345
    %v3514 = vpack.c.b16 %v2362, %v2346
    %v3515 = vpack.c.b16 %v2363, %v2347
    %v3516 = vpack.c.b16 %v2364, %v2348
    %v3517 = vpack.c.b16 %v2365, %v2349
    %v3518 = vpack.c.b16 %v2366, %v2350
    %v3519 = vpack.c.b16 %v2367, %v2351
    %v3520 = vpack.c.b16 %v2368, %v2352
    %v3521 = vpack.c.b16 %v2369, %v2353
    %v3522 = vpack.c.b16 %v2370, %v2354
    %v3523 = vpack.c.b16 %v2371, %v2355
    %v3524 = vpack.c.b16 %v2372, %v2356
    %v3525 = vpack.c.b16 %v2373, %v2357
    %v3526 = vpack.c.b16 %v2374, %v2358
    %v3527 = vpack.c.b16 %v2375, %v2359
    %v3528 = vpack.c.b16 %v2392, %v2376
    %v3529 = vpack.c.b16 %v2393, %v2377
    %v3530 = vpack.c.b16 %v2394, %v2378
    %v3531 = vpack.c.b16 %v2395, %v2379
    %v3532 = vpack.c.b16 %v2396, %v2380
    %v3533 = vpack.c.b16 %v2397, %v2381
    %v3534 = vpack.c.b16 %v2398, %v2382
    %v3535 = vpack.c.b16 %v2399, %v2383
    %v3536 = vpack.c.b16 %v2400, %v2384
    %v3537 = vpack.c.b16 %v2401, %v2385
    %v3538 = vpack.c.b16 %v2402, %v2386
    %v3539 = vpack.c.b16 %v2403, %v2387
    %v3540 = vpack.c.b16 %v2404, %v2388
    %v3541 = vpack.c.b16 %v2405, %v2389
    %v3542 = vpack.c.b16 %v2406, %v2390
    %v3543 = vpack.c.b16 %v2407, %v2391
    %v3544 = vpack.c.b16 %v2424, %v2408
    %v3545 = vpack.c.b16 %v2425, %v2409
    %v3546 = vpack.c.b16 %v2426, %v2410
    %v3547 = vpack.c.b16 %v2427, %v2411
    %v3548 = vpack.c.b16 %v2428, %v2412
    %v3549 = vpack.c.b16 %v2429, %v2413
    %v3550 = vpack.c.b16 %v2430, %v2414
    %v3551 = vpack.c.b16 %v2431, %v2415
    %v3552 = vpack.c.b16 %v2432, %v2416
    %v3553 = vpack.c.b16 %v2433, %v2417
    %v3554 = vpack.c.b16 %v2434, %v2418
    %v3555 = vpack.c.b16 %v2435, %v2419
    %v3556 = vpack.c.b16 %v2436, %v2420
    %v3557 = vpack.c.b16 %v2437, %v2421
    %v3558 = vpack.c.b16 %v2438, %v2422
    %v3559 = vpack.c.b16 %v2439, %v2423
    %v3560 = vpack.c.b16 %v2456, %v2440
    %v3561 = vpack.c.b16 %v2457, %v2441
    %v3562 = vpack.c.b16 %v2458, %v2442
    %v3563 = vpack.c.b16 %v2459, %v2443
    %v3564 = vpack.c.b16 %v2460, %v2444
    %v3565 = vpack.c.b16 %v2461, %v2445
    %v3566 = vpack.c.b16 %v2462, %v2446
    %v3567 = vpack.c.b16 %v2463, %v2447
    %v3568 = vpack.c.b16 %v2464, %v2448
    %v3569 = vpack.c.b16 %v2465, %v2449
    %v3570 = vpack.c.b16 %v2466, %v2450
    %v3571 = vpack.c.b16 %v2467, %v2451
    %v3572 = vpack.c.b16 %v2468, %v2452
    %v3573 = vpack.c.b16 %v2469, %v2453
    %v3574 = vpack.c.b16 %v2470, %v2454
    %v3575 = vpack.c.b16 %v2471, %v2455
    %v3576 = vpack.c.b16 %v2488, %v2472
    %v3577 = vpack.c.b16 %v2489, %v2473
    %v3578 = vpack.c.b16 %v2490, %v2474
    %v3579 = vpack.c.b16 %v2491, %v2475
    %v3580 = vpack.c.b16 %v2492, %v2476
    %v3581 = vpack.c.b16 %v2493, %v2477
    %v3582 = vpack.c.b16 %v2494, %v2478
    %v3583 = vpack.c.b16 %v2495, %v2479
    %v3584 = vpack.c.b16 %v2496, %v2480
    %v3585 = vpack.c.b16 %v2497, %v2481
    %v3586 = vpack.c.b16 %v2498, %v2482
    %v3587 = vpack.c.b16 %v2499, %v2483
    %v3588 = vpack.c.b16 %v2500, %v2484
    %v3589 = vpack.c.b16 %v2501, %v2485
    %v3590 = vpack.c.b16 %v2502, %v2486
    %v3591 = vpack.c.b16 %v2503, %v2487
    %v3592 = vpack.c.b16 %v2520, %v2504
    %v3593 = vpack.c.b16 %v2521, %v2505
    %v3594 = vpack.c.b16 %v2522, %v2506
    %v3595 = vpack.c.b16 %v2523, %v2507
    %v3596 = vpack.c.b16 %v2524, %v2508
    %v3597 = vpack.c.b16 %v2525, %v2509
    %v3598 = vpack.c.b16 %v2526, %v2510
    %v3599 = vpack.c.b16 %v2527, %v2511
    %v3600 = vpack.c.b16 %v2528, %v2512
    %v3601 = vpack.c.b16 %v2529, %v2513
    %v3602 = vpack.c.b16 %v2530, %v2514
    %v3603 = vpack.c.b16 %v2531, %v2515
    %v3604 = vpack.c.b16 %v2532, %v2516
    %v3605 = vpack.c.b16 %v2533, %v2517
    %v3606 = vpack.c.b16 %v2534, %v2518
    %v3607 = vpack.c.b16 %v2535, %v2519
    %v3608 = vpack.c.b16 %v2552, %v2536
    %v3609 = vpack.c.b16 %v2553, %v2537
    %v3610 = vpack.c.b16 %v2554, %v2538
    %v3611 = vpack.c.b16 %v2555, %v2539
    %v3612 = vpack.c.b16 %v2556, %v2540
    %v3613 = vpack.c.b16 %v2557, %v2541
    %v3614 = vpack.c.b16 %v2558, %v2542
    %v3615 = vpack.c.b16 %v2559, %v2543
    %v3616 = vpack.c.b16 %v2560, %v2544
    %v3617 = vpack.c.b16 %v2561, %v2545
    %v3618 = vpack.c.b16 %v2562, %v2546
    %v3619 = vpack.c.b16 %v2563, %v2547
    %v3620 = vpack.c.b16 %v2564, %v2548
    %v3621 = vpack.c.b16 %v2565, %v2549
    %v3622 = vpack.c.b16 %v2566, %v2550
    %v3623 = vpack.c.b16 %v2567, %v2551
    %v3624 = vpack.c.b16 %v2584, %v2568
    %v3625 = vpack.c.b16 %v2585, %v2569
    %v3626 = vpack.c.b16 %v2586, %v2570
    %v3627 = vpack.c.b16 %v2587, %v2571
    %v3628 = vpack.c.b16 %v2588, %v2572
    %v3629 = vpack.c.b16 %v2589, %v2573
    %v3630 = vpack.c.b16 %v2590, %v2574
    %v3631 = vpack.c.b16 %v2591, %v2575
    %v3632 = vpack.c.b16 %v2592, %v2576
    %v3633 = vpack.c.b16 %v2593, %v2577
    %v3634 = vpack.c.b16 %v2594, %v2578
    %v3635 = vpack.c.b16 %v2595, %v2579
    %v3636 = vpack.c.b16 %v2596, %v2580
    %v3637 = vpack.c.b16 %v2597, %v2581
    %v3638 = vpack.c.b16 %v2598, %v2582
    %v3639 = vpack.c.b16 %v2599, %v2583
    %v3640 = vpack.c.b16 %v2616, %v2600
    %v3641 = vpack.c.b16 %v2617, %v2601
    %v3642 = vpack.c.b16 %v2618, %v2602
    %v3643 = vpack.c.b16 %v2619, %v2603
    %v3644 = vpack.c.b16 %v2620, %v2604
    %v3645 = vpack.c.b16 %v2621, %v2605
    %v3646 = vpack.c.b16 %v2622, %v2606
    %v3647 = vpack.c.b16 %v2623, %v2607
    %v3648 = vpack.c.b16 %v2624, %v2608
    %v3649 = vpack.c.b16 %v2625, %v2609
    %v3650 = vpack.c.b16 %v2626, %v2610
    %v3651 = vpack.c.b16 %v2627, %v2611
    %v3652 = vpack.c.b16 %v2628, %v2612
    %v3653 = vpack.c.b16 %v2629, %v2613
    %v3654 = vpack.c.b16 %v2630, %v2614
    %v3655 = vpack.c.b16 %v2631, %v2615
    %v3656 = vpack.c.b16 %v2648, %v2632
    %v3657 = vpack.c.b16 %v2649, %v2633
    %v3658 = vpack.c.b16 %v2650, %v2634
    %v3659 = vpack.c.b16 %v2651, %v2635
    %v3660 = vpack.c.b16 %v2652, %v2636
    %v3661 = vpack.c.b16 %v2653, %v2637
    %v3662 = vpack.c.b16 %v2654, %v2638
    %v3663 = vpack.c.b16 %v2655, %v2639
    %v3664 = vpack.c.b16 %v2656, %v2640
    %v3665 = vpack.c.b16 %v2657, %v2641
    %v3666 = vpack.c.b16 %v2658, %v2642
    %v3667 = vpack.c.b16 %v2659, %v2643
    %v3668 = vpack.c.b16 %v2660, %v2644
    %v3669 = vpack.c.b16 %v2661, %v2645
    %v3670 = vpack.c.b16 %v2662, %v2646
    %v3671 = vpack.c.b16 %v2663, %v2647
    %v3672 = vpack.c.b16 %v2680, %v2664
    %v3673 = vpack.c.b16 %v2681, %v2665
    %v3674 = vpack.c.b16 %v2682, %v2666
    %v3675 = vpack.c.b16 %v2683, %v2667
    %v3676 = vpack.c.b16 %v2684, %v2668
    %v3677 = vpack.c.b16 %v2685, %v2669
    %v3678 = vpack.c.b16 %v2686, %v2670
    %v3679 = vpack.c.b16 %v2687, %v2671
    %v3680 = vpack.c.b16 %v2688, %v2672
    %v3681 = vpack.c.b16 %v2689, %v2673
    %v3682 = vpack.c.b16 %v2690, %v2674
    %v3683 = vpack.c.b16 %v2691, %v2675
    %v3684 = vpack.c.b16 %v2692, %v2676
    %v3685 = vpack.c.b16 %v2693, %v2677
    %v3686 = vpack.c.b16 %v2694, %v2678
    %v3687 = vpack.c.b16 %v2695, %v2679
    %v3688 = vpack.c.b16 %v2712, %v2696
    %v3689 = vpack.c.b16 %v2713, %v2697
    %v3690 = vpack.c.b16 %v2714, %v2698
    %v3691 = vpack.c.b16 %v2715, %v2699
    %v3692 = vpack.c.b16 %v2716, %v2700
    %v3693 = vpack.c.b16 %v2717, %v2701
    %v3694 = vpack.c.b16 %v2718, %v2702
    %v3695 = vpack.c.b16 %v2719, %v2703
    %v3696 = vpack.c.b16 %v2720, %v2704
    %v3697 = vpack.c.b16 %v2721, %v2705
    %v3698 = vpack.c.b16 %v2722, %v2706
    %v3699 = vpack.c.b16 %v2723, %v2707
    %v3700 = vpack.c.b16 %v2724, %v2708
    %v3701 = vpack.c.b16 %v2725, %v2709
    %v3702 = vpack.c.b16 %v2726, %v2710
    %v3703 = vpack.c.b16 %v2727, %v2711
    %v3704 = vpack.c.b16 %v2744, %v2728
    %v3705 = vpack.c.b16 %v2745, %v2729
    %v3706 = vpack.c.b16 %v2746, %v2730
    %v3707 = vpack.c.b16 %v2747, %v2731
    %v3708 = vpack.c.b16 %v2748, %v2732
    %v3709 = vpack.c.b16 %v2749, %v2733
    %v3710 = vpack.c.b16 %v2750, %v2734
    %v3711 = vpack.c.b16 %v2751, %v2735
    %v3712 = vpack.c.b16 %v2752, %v2736
    %v3713 = vpack.c.b16 %v2753, %v2737
    %v3714 = vpack.c.b16 %v2754, %v2738
    %v3715 = vpack.c.b16 %v2755, %v2739
    %v3716 = vpack.c.b16 %v2756, %v2740
    %v3717 = vpack.c.b16 %v2757, %v2741
    %v3718 = vpack.c.b16 %v2758, %v2742
    %v3719 = vpack.c.b16 %v2759, %v2743
    %v3720 = vpack.c.b16 %v2776, %v2760
    %v3721 = vpack.c.b16 %v2777, %v2761
    %v3722 = vpack.c.b16 %v2778, %v2762
    %v3723 = vpack.c.b16 %v2779, %v2763
    %v3724 = vpack.c.b16 %v2780, %v2764
    %v3725 = vpack.c.b16 %v2781, %v2765
    %v3726 = vpack.c.b16 %v2782, %v2766
    %v3727 = vpack.c.b16 %v2783, %v2767
    %v3728 = vpack.c.b16 %v2784, %v2768
    %v3729 = vpack.c.b16 %v2785, %v2769
    %v3730 = vpack.c.b16 %v2786, %v2770
    %v3731 = vpack.c.b16 %v2787, %v2771
    %v3732 = vpack.c.b16 %v2788, %v2772
    %v3733 = vpack.c.b16 %v2789, %v2773
    %v3734 = vpack.c.b16 %v2790, %v2774
    %v3735 = vpack.c.b16 %v2791, %v2775
    %v3736 = vpack.c.b16 %v2808, %v2792
    %v3737 = vpack.c.b16 %v2809, %v2793
    %v3738 = vpack.c.b16 %v2810, %v2794
    %v3739 = vpack.c.b16 %v2811, %v2795
    %v3740 = vpack.c.b16 %v2812, %v2796
    %v3741 = vpack.c.b16 %v2813, %v2797
    %v3742 = vpack.c.b16 %v2814, %v2798
    %v3743 = vpack.c.b16 %v2815, %v2799
    %v3744 = vpack.c.b16 %v2816, %v2800
    %v3745 = vpack.c.b16 %v2817, %v2801
    %v3746 = vpack.c.b16 %v2818, %v2802
    %v3747 = vpack.c.b16 %v2819, %v2803
    %v3748 = vpack.c.b16 %v2820, %v2804
    %v3749 = vpack.c.b16 %v2821, %v2805
    %v3750 = vpack.c.b16 %v2822, %v2806
    %v3751 = vpack.c.b16 %v2823, %v2807
    %v3752 = vpack.c.b16 %v2840, %v2824
    %v3753 = vpack.c.b16 %v2841, %v2825
    %v3754 = vpack.c.b16 %v2842, %v2826
    %v3755 = vpack.c.b16 %v2843, %v2827
    %v3756 = vpack.c.b16 %v2844, %v2828
    %v3757 = vpack.c.b16 %v2845, %v2829
    %v3758 = vpack.c.b16 %v2846, %v2830
    %v3759 = vpack.c.b16 %v2847, %v2831
    %v3760 = vpack.c.b16 %v2848, %v2832
    %v3761 = vpack.c.b16 %v2849, %v2833
    %v3762 = vpack.c.b16 %v2850, %v2834
    %v3763 = vpack.c.b16 %v2851, %v2835
    %v3764 = vpack.c.b16 %v2852, %v2836
    %v3765 = vpack.c.b16 %v2853, %v2837
    %v3766 = vpack.c.b16 %v2854, %v2838
    %v3767 = vpack.c.b16 %v2855, %v2839
    %v3768 = vpack.c.b16 %v2872, %v2856
    %v3769 = vpack.c.b16 %v2873, %v2857
    %v3770 = vpack.c.b16 %v2874, %v2858
    %v3771 = vpack.c.b16 %v2875, %v2859
    %v3772 = vpack.c.b16 %v2876, %v2860
    %v3773 = vpack.c.b16 %v2877, %v2861
    %v3774 = vpack.c.b16 %v2878, %v2862
    %v3775 = vpack.c.b16 %v2879, %v2863
    %v3776 = vpack.c.b16 %v2880, %v2864
    %v3777 = vpack.c.b16 %v2881, %v2865
    %v3778 = vpack.c.b16 %v2882, %v2866
    %v3779 = vpack.c.b16 %v2883, %v2867
    %v3780 = vpack.c.b16 %v2884, %v2868
    %v3781 = vpack.c.b16 %v2885, %v2869
    %v3782 = vpack.c.b16 %v2886, %v2870
    %v3783 = vpack.c.b16 %v2887, %v2871
    %v3784 = vpack.c.b16 %v2904, %v2888
    %v3785 = vpack.c.b16 %v2905, %v2889
    %v3786 = vpack.c.b16 %v2906, %v2890
    %v3787 = vpack.c.b16 %v2907, %v2891
    %v3788 = vpack.c.b16 %v2908, %v2892
    %v3789 = vpack.c.b16 %v2909, %v2893
    %v3790 = vpack.c.b16 %v2910, %v2894
    %v3791 = vpack.c.b16 %v2911, %v2895
    %v3792 = vpack.c.b16 %v2912, %v2896
    %v3793 = vpack.c.b16 %v2913, %v2897
    %v3794 = vpack.c.b16 %v2914, %v2898
    %v3795 = vpack.c.b16 %v2915, %v2899
    %v3796 = vpack.c.b16 %v2916, %v2900
    %v3797 = vpack.c.b16 %v2917, %v2901
    %v3798 = vpack.c.b16 %v2918, %v2902
    %v3799 = vpack.c.b16 %v2919, %v2903
    %v3800 = vpack.c.b16 %v2936, %v2920
    %v3801 = vpack.c.b16 %v2937, %v2921
    %v3802 = vpack.c.b16 %v2938, %v2922
    %v3803 = vpack.c.b16 %v2939, %v2923
    %v3804 = vpack.c.b16 %v2940, %v2924
    %v3805 = vpack.c.b16 %v2941, %v2925
    %v3806 = vpack.c.b16 %v2942, %v2926
    %v3807 = vpack.c.b16 %v2943, %v2927
    %v3808 = vpack.c.b16 %v2944, %v2928
    %v3809 = vpack.c.b16 %v2945, %v2929
    %v3810 = vpack.c.b16 %v2946, %v2930
    %v3811 = vpack.c.b16 %v2947, %v2931
    %v3812 = vpack.c.b16 %v2948, %v2932
    %v3813 = vpack.c.b16 %v2949, %v2933
    %v3814 = vpack.c.b16 %v2950, %v2934
    %v3815 = vpack.c.b16 %v2951, %v2935
    %v3816 = vpack.c.b16 %v2968, %v2952
    %v3817 = vpack.c.b16 %v2969, %v2953
    %v3818 = vpack.c.b16 %v2970, %v2954
    %v3819 = vpack.c.b16 %v2971, %v2955
    %v3820 = vpack.c.b16 %v2972, %v2956
    %v3821 = vpack.c.b16 %v2973, %v2957
    %v3822 = vpack.c.b16 %v2974, %v2958
    %v3823 = vpack.c.b16 %v2975, %v2959
    %v3824 = vpack.c.b16 %v2976, %v2960
    %v3825 = vpack.c.b16 %v2977, %v2961
    %v3826 = vpack.c.b16 %v2978, %v2962
    %v3827 = vpack.c.b16 %v2979, %v2963
    %v3828 = vpack.c.b16 %v2980, %v2964
    %v3829 = vpack.c.b16 %v2981, %v2965
    %v3830 = vpack.c.b16 %v2982, %v2966
    %v3831 = vpack.c.b16 %v2983, %v2967
    %v3832 = vpack.c.b16 %v3000, %v2984
    %v3833 = vpack.c.b16 %v3001, %v2985
    %v3834 = vpack.c.b16 %v3002, %v2986
    %v3835 = vpack.c.b16 %v3003, %v2987
    %v3836 = vpack.c.b16 %v3004, %v2988
    %v3837 = vpack.c.b16 %v3005, %v2989
    %v3838 = vpack.c.b16 %v3006, %v2990
    %v3839 = vpack.c.b16 %v3007, %v2991
    %v3840 = vpack.c.b16 %v3008, %v2992
    %v3841 = vpack.c.b16 %v3009, %v2993
    %v3842 = vpack.c.b16 %v3010, %v2994
    %v3843 = vpack.c.b16 %v3011, %v2995
    %v3844 = vpack.c.b16 %v3012, %v2996
    %v3845 = vpack.c.b16 %v3013, %v2997
    %v3846 = vpack.c.b16 %v3014, %v2998
    %v3847 = vpack.c.b16 %v3015, %v2999
    %v3848 = vpack.c.b16 %v3032, %v3016
    %v3849 = vpack.c.b16 %v3033, %v3017
    %v3850 = vpack.c.b16 %v3034, %v3018
    %v3851 = vpack.c.b16 %v3035, %v3019
    %v3852 = vpack.c.b16 %v3036, %v3020
    %v3853 = vpack.c.b16 %v3037, %v3021
    %v3854 = vpack.c.b16 %v3038, %v3022
    %v3855 = vpack.c.b16 %v3039, %v3023
    %v3856 = vpack.c.b16 %v3040, %v3024
    %v3857 = vpack.c.b16 %v3041, %v3025
    %v3858 = vpack.c.b16 %v3042, %v3026
    %v3859 = vpack.c.b16 %v3043, %v3027
    %v3860 = vpack.c.b16 %v3044, %v3028
    %v3861 = vpack.c.b16 %v3045, %v3029
    %v3862 = vpack.c.b16 %v3046, %v3030
    %v3863 = vpack.c.b16 %v3047, %v3031
    %v3864 = vpack.c.b16 %v3064, %v3048
    %v3865 = vpack.c.b16 %v3065, %v3049
    %v3866 = vpack.c.b16 %v3066, %v3050
    %v3867 = vpack.c.b16 %v3067, %v3051
    %v3868 = vpack.c.b16 %v3068, %v3052
    %v3869 = vpack.c.b16 %v3069, %v3053
    %v3870 = vpack.c.b16 %v3070, %v3054
    %v3871 = vpack.c.b16 %v3071, %v3055
    %v3872 = vpack.c.b16 %v3072, %v3056
    %v3873 = vpack.c.b16 %v3073, %v3057
    %v3874 = vpack.c.b16 %v3074, %v3058
    %v3875 = vpack.c.b16 %v3075, %v3059
    %v3876 = vpack.c.b16 %v3076, %v3060
    %v3877 = vpack.c.b16 %v3077, %v3061
    %v3878 = vpack.c.b16 %v3078, %v3062
    %v3879 = vpack.c.b16 %v3079, %v3063
    %v3880 = vpack.c.b16 %v3096, %v3080
    %v3881 = vpack.c.b16 %v3097, %v3081
    %v3882 = vpack.c.b16 %v3098, %v3082
    %v3883 = vpack.c.b16 %v3099, %v3083
    %v3884 = vpack.c.b16 %v3100, %v3084
    %v3885 = vpack.c.b16 %v3101, %v3085
    %v3886 = vpack.c.b16 %v3102, %v3086
    %v3887 = vpack.c.b16 %v3103, %v3087
    %v3888 = vpack.c.b16 %v3104, %v3088
    %v3889 = vpack.c.b16 %v3105, %v3089
    %v3890 = vpack.c.b16 %v3106, %v3090
    %v3891 = vpack.c.b16 %v3107, %v3091
    %v3892 = vpack.c.b16 %v3108, %v3092
    %v3893 = vpack.c.b16 %v3109, %v3093
    %v3894 = vpack.c.b16 %v3110, %v3094
    %v3895 = vpack.c.b16 %v3111, %v3095
    %v3896 = vpack.c.b16 %v3128, %v3112
    %v3897 = vpack.c.b16 %v3129, %v3113
    %v3898 = vpack.c.b16 %v3130, %v3114
    %v3899 = vpack.c.b16 %v3131, %v3115
    %v3900 = vpack.c.b16 %v3132, %v3116
    %v3901 = vpack.c.b16 %v3133, %v3117
    %v3902 = vpack.c.b16 %v3134, %v3118
    %v3903 = vpack.c.b16 %v3135, %v3119
    %v3904 = vpack.c.b16 %v3136, %v3120
    %v3905 = vpack.c.b16 %v3137, %v3121
    %v3906 = vpack.c.b16 %v3138, %v3122
    %v3907 = vpack.c.b16 %v3139, %v3123
    %v3908 = vpack.c.b16 %v3140, %v3124
    %v3909 = vpack.c.b16 %v3141, %v3125
    %v3910 = vpack.c.b16 %v3142, %v3126
    %v3911 = vpack.c.b16 %v3143, %v3127
    %4680 = vmatprep.subr.bf16.mxu0 %v3145
    %4681 = vmatpush1.bf16.msra.mxu0 %v3144
    %4682 = vmatprep.subr.bf16.mxu0 %v3161
    %4683 = vmatpush1.bf16.msra.mxu0 %v3160
    %4684 = vmatprep.subr.bf16.mxu0 %v3177
    %4685 = vmatpush1.bf16.msra.mxu0 %v3176
    %4686 = vmatprep.subr.bf16.mxu0 %v3193
    %4687 = vmatpush1.bf16.msra.mxu0 %v3192
    %4688 = vmatprep.subr.bf16.mxu0 %v3209
    %4689 = vmatpush1.bf16.msra.mxu0 %v3208
    %4690 = vmatprep.subr.bf16.mxu0 %v3225
    %4691 = vmatpush1.bf16.msra.mxu0 %v3224
    %4692 = vmatprep.subr.bf16.mxu0 %v3241
    %4693 = vmatpush1.bf16.msra.mxu0 %v3240
    %4694 = vmatprep.subr.bf16.mxu0 %v3257
    %4695 = vmatpush1.bf16.msra.mxu0 %v3256
    %4696 = vmatprep.subr.bf16.mxu0 %v3273
    %4697 = vmatpush1.bf16.msra.mxu0 %v3272
    %4698 = vmatprep.subr.bf16.mxu0 %v3289
    %4699 = vmatpush1.bf16.msra.mxu0 %v3288
    %4700 = vmatprep.subr.bf16.mxu0 %v3305
    %4701 = vmatpush1.bf16.msra.mxu0 %v3304
    %4702 = vmatprep.subr.bf16.mxu0 %v3321
    %4703 = vmatpush1.bf16.msra.mxu0 %v3320
    %4704 = vmatprep.subr.bf16.mxu0 %v3337
    %4705 = vmatpush1.bf16.msra.mxu0 %v3336
    %4706 = vmatprep.subr.bf16.mxu0 %v3353
    %4707 = vmatpush1.bf16.msra.mxu0 %v3352
    %4708 = vmatprep.subr.bf16.mxu0 %v3369
    %4709 = vmatpush1.bf16.msra.mxu0 %v3368
    %4710 = vmatprep.subr.bf16.mxu0 %v3385
    %4711 = vmatpush1.bf16.msra.mxu0 %v3384
    %4712 = vmatprep.mubr.bf16.mxu0 %v59
    %4713 = vmatmul.mubr.bf16.gmra.mrb[0].mxu0 %v58
    %v4714 = vpop.f32.mrb[0].mxu0
    %v4715 = vadd.f32 0.0, %v4714
    %v4716 = vpop.f32.mrb[0].mxu0
    %v4717 = vadd.f32 0.0, %v4716
    %v4718 = vpop.f32.mrb[0].mxu0
    %v4719 = vpop.f32.mrb[0].mxu0
    %4720 = vdwg.mxu0
    %4721 = vmatprep.subr.bf16.mxu0 %v3401
    %4722 = vmatpush1.bf16.msra.mxu0 %v3400
    %4723 = vmatprep.subr.bf16.mxu0 %v3417
    %4724 = vmatpush1.bf16.msra.mxu0 %v3416
    %4725 = vmatprep.subr.bf16.mxu0 %v3433
    %4726 = vmatpush1.bf16.msra.mxu0 %v3432
    %4727 = vmatprep.subr.bf16.mxu0 %v3449
    %4728 = vmatpush1.bf16.msra.mxu0 %v3448
    %4729 = vmatprep.subr.bf16.mxu0 %v3465
    %4730 = vmatpush1.bf16.msra.mxu0 %v3464
    %4731 = vmatprep.subr.bf16.mxu0 %v3481
    %4732 = vmatpush1.bf16.msra.mxu0 %v3480
    %4733 = vmatprep.subr.bf16.mxu0 %v3497
    %4734 = vmatpush1.bf16.msra.mxu0 %v3496
    %4735 = vmatprep.subr.bf16.mxu0 %v3513
    %4736 = vmatpush1.bf16.msra.mxu0 %v3512
    %4737 = vmatprep.subr.bf16.mxu0 %v3529
    %4738 = vmatpush1.bf16.msra.mxu0 %v3528
    %4739 = vmatprep.subr.bf16.mxu0 %v3545
    %4740 = vmatpush1.bf16.msra.mxu0 %v3544
    %4741 = vmatprep.subr.bf16.mxu0 %v3561
    %4742 = vmatpush1.bf16.msra.mxu0 %v3560
    %4743 = vmatprep.subr.bf16.mxu0 %v3577
    %4744 = vmatpush1.bf16.msra.mxu0 %v3576
    %4745 = vmatprep.subr.bf16.mxu0 %v3593
    %4746 = vmatpush1.bf16.msra.mxu0 %v3592
    %4747 = vmatprep.subr.bf16.mxu0 %v3609
    %4748 = vmatpush1.bf16.msra.mxu0 %v3608
    %4749 = vmatprep.subr.bf16.mxu0 %v3625
    %4750 = vmatpush1.bf16.msra.mxu0 %v3624
    %4751 = vmatprep.subr.bf16.mxu0 %v3641
    %4752 = vmatpush1.bf16.msra.mxu0 %v3640
    %4753 = vmatprep.mubr.bf16.mxu0 %v65
    %4754 = vmatmul.mubr.bf16.gmra.mrb[0].mxu0 %v64
    %v4755 = vpop.f32.mrb[0].mxu0
    %v4756 = vadd.f32 %v4715, %v4755
    %v4757 = vpop.f32.mrb[0].mxu0
    %v4758 = vadd.f32 %v4717, %v4757
    %v4759 = vpop.f32.mrb[0].mxu0
    %v4760 = vpop.f32.mrb[0].mxu0
    %4761 = vdwg.mxu0
    %4762 = vmatprep.subr.bf16.mxu0 %v3657
    %4763 = vmatpush1.bf16.msra.mxu0 %v3656
    %4764 = vmatprep.subr.bf16.mxu0 %v3673
    %4765 = vmatpush1.bf16.msra.mxu0 %v3672
    %4766 = vmatprep.subr.bf16.mxu0 %v3689
    %4767 = vmatpush1.bf16.msra.mxu0 %v3688
    %4768 = vmatprep.subr.bf16.mxu0 %v3705
    %4769 = vmatpush1.bf16.msra.mxu0 %v3704
    %4770 = vmatprep.subr.bf16.mxu0 %v3721
    %4771 = vmatpush1.bf16.msra.mxu0 %v3720
    %4772 = vmatprep.subr.bf16.mxu0 %v3737
    %4773 = vmatpush1.bf16.msra.mxu0 %v3736
    %4774 = vmatprep.subr.bf16.mxu0 %v3753
    %4775 = vmatpush1.bf16.msra.mxu0 %v3752
    %4776 = vmatprep.subr.bf16.mxu0 %v3769
    %4777 = vmatpush1.bf16.msra.mxu0 %v3768
    %4778 = vmatprep.subr.bf16.mxu0 %v3785
    %4779 = vmatpush1.bf16.msra.mxu0 %v3784
    %4780 = vmatprep.subr.bf16.mxu0 %v3801
    %4781 = vmatpush1.bf16.msra.mxu0 %v3800
    %4782 = vmatprep.subr.bf16.mxu0 %v3817
    %4783 = vmatpush1.bf16.msra.mxu0 %v3816
    %4784 = vmatprep.subr.bf16.mxu0 %v3833
    %4785 = vmatpush1.bf16.msra.mxu0 %v3832
    %4786 = vmatprep.subr.bf16.mxu0 %v3849
    %4787 = vmatpush1.bf16.msra.mxu0 %v3848
    %4788 = vmatprep.subr.bf16.mxu0 %v3865
    %4789 = vmatpush1.bf16.msra.mxu0 %v3864
    %4790 = vmatprep.subr.bf16.mxu0 %v3881
    %4791 = vmatpush1.bf16.msra.mxu0 %v3880
    %4792 = vmatprep.subr.bf16.mxu0 %v3897
    %4793 = vmatpush1.bf16.msra.mxu0 %v3896
    %4794 = vmatprep.mubr.bf16.mxu0 %v71
    %4795 = vmatmul.mubr.bf16.gmra.mrb[0].mxu0 %v70
    %v4796 = vpop.f32.mrb[0].mxu0
    %v4797 = vadd.f32 %v4756, %v4796
    %v4798 = vpop.f32.mrb[0].mxu0
    %v4799 = vadd.f32 %v4758, %v4798
    %v4800 = vpop.f32.mrb[0].mxu0
    %v4801 = vpop.f32.mrb[0].mxu0
    %4802 = vdwg.mxu0
    %4803 = vmatprep.subr.bf16.mxu0 %v3147
    %4804 = vmatpush1.bf16.msra.mxu0 %v3146
    %4805 = vmatprep.subr.bf16.mxu0 %v3163
    %4806 = vmatpush1.bf16.msra.mxu0 %v3162
    %4807 = vmatprep.subr.bf16.mxu0 %v3179
    %4808 = vmatpush1.bf16.msra.mxu0 %v3178
    %4809 = vmatprep.subr.bf16.mxu0 %v3195
    %4810 = vmatpush1.bf16.msra.mxu0 %v3194
    %4811 = vmatprep.subr.bf16.mxu0 %v3211
    %4812 = vmatpush1.bf16.msra.mxu0 %v3210
    %4813 = vmatprep.subr.bf16.mxu0 %v3227
    %4814 = vmatpush1.bf16.msra.mxu0 %v3226
    %4815 = vmatprep.subr.bf16.mxu0 %v3243
    %4816 = vmatpush1.bf16.msra.mxu0 %v3242
    %4817 = vmatprep.subr.bf16.mxu0 %v3259
    %4818 = vmatpush1.bf16.msra.mxu0 %v3258
    %4819 = vmatprep.subr.bf16.mxu0 %v3275
    %4820 = vmatpush1.bf16.msra.mxu0 %v3274
    %4821 = vmatprep.subr.bf16.mxu0 %v3291
    %4822 = vmatpush1.bf16.msra.mxu0 %v3290
    %4823 = vmatprep.subr.bf16.mxu0 %v3307
    %4824 = vmatpush1.bf16.msra.mxu0 %v3306
    %4825 = vmatprep.subr.bf16.mxu0 %v3323
    %4826 = vmatpush1.bf16.msra.mxu0 %v3322
    %4827 = vmatprep.subr.bf16.mxu0 %v3339
    %4828 = vmatpush1.bf16.msra.mxu0 %v3338
    %4829 = vmatprep.subr.bf16.mxu0 %v3355
    %4830 = vmatpush1.bf16.msra.mxu0 %v3354
    %4831 = vmatprep.subr.bf16.mxu0 %v3371
    %4832 = vmatpush1.bf16.msra.mxu0 %v3370
    %4833 = vmatprep.subr.bf16.mxu0 %v3387
    %4834 = vmatpush1.bf16.msra.mxu0 %v3386
    %4835 = vmatprep.mubr.bf16.mxu0 %v59
    %4836 = vmatmul.mubr.bf16.gmra.mrb[0].mxu0 %v58
    %v4837 = vpop.f32.mrb[0].mxu0
    %v4838 = vadd.f32 0.0, %v4837
    %v4839 = vpop.f32.mrb[0].mxu0
    %v4840 = vadd.f32 0.0, %v4839
    %v4841 = vpop.f32.mrb[0].mxu0
    %v4842 = vpop.f32.mrb[0].mxu0
    %4843 = vdwg.mxu0
    %4844 = vmatprep.subr.bf16.mxu0 %v3403
    %4845 = vmatpush1.bf16.msra.mxu0 %v3402
    %4846 = vmatprep.subr.bf16.mxu0 %v3419
    %4847 = vmatpush1.bf16.msra.mxu0 %v3418
    %4848 = vmatprep.subr.bf16.mxu0 %v3435
    %4849 = vmatpush1.bf16.msra.mxu0 %v3434
    %4850 = vmatprep.subr.bf16.mxu0 %v3451
    %4851 = vmatpush1.bf16.msra.mxu0 %v3450
    %4852 = vmatprep.subr.bf16.mxu0 %v3467
    %4853 = vmatpush1.bf16.msra.mxu0 %v3466
    %4854 = vmatprep.subr.bf16.mxu0 %v3483
    %4855 = vmatpush1.bf16.msra.mxu0 %v3482
    %4856 = vmatprep.subr.bf16.mxu0 %v3499
    %4857 = vmatpush1.bf16.msra.mxu0 %v3498
    %4858 = vmatprep.subr.bf16.mxu0 %v3515
    %4859 = vmatpush1.bf16.msra.mxu0 %v3514
    %4860 = vmatprep.subr.bf16.mxu0 %v3531
    %4861 = vmatpush1.bf16.msra.mxu0 %v3530
    %4862 = vmatprep.subr.bf16.mxu0 %v3547
    %4863 = vmatpush1.bf16.msra.mxu0 %v3546
    %4864 = vmatprep.subr.bf16.mxu0 %v3563
    %4865 = vmatpush1.bf16.msra.mxu0 %v3562
    %4866 = vmatprep.subr.bf16.mxu0 %v3579
    %4867 = vmatpush1.bf16.msra.mxu0 %v3578
    %4868 = vmatprep.subr.bf16.mxu0 %v3595
    %4869 = vmatpush1.bf16.msra.mxu0 %v3594
    %4870 = vmatprep.subr.bf16.mxu0 %v3611
    %4871 = vmatpush1.bf16.msra.mxu0 %v3610
    %4872 = vmatprep.subr.bf16.mxu0 %v3627
    %4873 = vmatpush1.bf16.msra.mxu0 %v3626
    %4874 = vmatprep.subr.bf16.mxu0 %v3643
    %4875 = vmatpush1.bf16.msra.mxu0 %v3642
    %4876 = vmatprep.mubr.bf16.mxu0 %v65
    %4877 = vmatmul.mubr.bf16.gmra.mrb[0].mxu0 %v64
    %v4878 = vpop.f32.mrb[0].mxu0
    %v4879 = vadd.f32 %v4838, %v4878
    %v4880 = vpop.f32.mrb[0].mxu0
    %v4881 = vadd.f32 %v4840, %v4880
    %v4882 = vpop.f32.mrb[0].mxu0
    %v4883 = vpop.f32.mrb[0].mxu0
    %4884 = vdwg.mxu0
    %4885 = vmatprep.subr.bf16.mxu0 %v3659
    %4886 = vmatpush1.bf16.msra.mxu0 %v3658
    %4887 = vmatprep.subr.bf16.mxu0 %v3675
    %4888 = vmatpush1.bf16.msra.mxu0 %v3674
    %4889 = vmatprep.subr.bf16.mxu0 %v3691
    %4890 = vmatpush1.bf16.msra.mxu0 %v3690
    %4891 = vmatprep.subr.bf16.mxu0 %v3707
    %4892 = vmatpush1.bf16.msra.mxu0 %v3706
    %4893 = vmatprep.subr.bf16.mxu0 %v3723
    %4894 = vmatpush1.bf16.msra.mxu0 %v3722
    %4895 = vmatprep.subr.bf16.mxu0 %v3739
    %4896 = vmatpush1.bf16.msra.mxu0 %v3738
    %4897 = vmatprep.subr.bf16.mxu0 %v3755
    %4898 = vmatpush1.bf16.msra.mxu0 %v3754
    %4899 = vmatprep.subr.bf16.mxu0 %v3771
    %4900 = vmatpush1.bf16.msra.mxu0 %v3770
    %4901 = vmatprep.subr.bf16.mxu0 %v3787
    %4902 = vmatpush1.bf16.msra.mxu0 %v3786
    %4903 = vmatprep.subr.bf16.mxu0 %v3803
    %4904 = vmatpush1.bf16.msra.mxu0 %v3802
    %4905 = vmatprep.subr.bf16.mxu0 %v3819
    %4906 = vmatpush1.bf16.msra.mxu0 %v3818
    %4907 = vmatprep.subr.bf16.mxu0 %v3835
    %4908 = vmatpush1.bf16.msra.mxu0 %v3834
    %4909 = vmatprep.subr.bf16.mxu0 %v3851
    %4910 = vmatpush1.bf16.msra.mxu0 %v3850
    %4911 = vmatprep.subr.bf16.mxu0 %v3867
    %4912 = vmatpush1.bf16.msra.mxu0 %v3866
    %4913 = vmatprep.subr.bf16.mxu0 %v3883
    %4914 = vmatpush1.bf16.msra.mxu0 %v3882
    %4915 = vmatprep.subr.bf16.mxu0 %v3899
    %4916 = vmatpush1.bf16.msra.mxu0 %v3898
    %4917 = vmatprep.mubr.bf16.mxu0 %v71
    %4918 = vmatmul.mubr.bf16.gmra.mrb[0].mxu0 %v70
    %v4919 = vpop.f32.mrb[0].mxu0
    %v4920 = vadd.f32 %v4879, %v4919
    %v4921 = vpop.f32.mrb[0].mxu0
    %v4922 = vadd.f32 %v4881, %v4921
    %v4923 = vpop.f32.mrb[0].mxu0
    %v4924 = vpop.f32.mrb[0].mxu0
    %4925 = vdwg.mxu0
    %4926 = vmatprep.subr.bf16.mxu0 %v3149
    %4927 = vmatpush1.bf16.msra.mxu0 %v3148
    %4928 = vmatprep.subr.bf16.mxu0 %v3165
    %4929 = vmatpush1.bf16.msra.mxu0 %v3164
    %4930 = vmatprep.subr.bf16.mxu0 %v3181
    %4931 = vmatpush1.bf16.msra.mxu0 %v3180
    %4932 = vmatprep.subr.bf16.mxu0 %v3197
    %4933 = vmatpush1.bf16.msra.mxu0 %v3196
    %4934 = vmatprep.subr.bf16.mxu0 %v3213
    %4935 = vmatpush1.bf16.msra.mxu0 %v3212
    %4936 = vmatprep.subr.bf16.mxu0 %v3229
    %4937 = vmatpush1.bf16.msra.mxu0 %v3228
    %4938 = vmatprep.subr.bf16.mxu0 %v3245
    %4939 = vmatpush1.bf16.msra.mxu0 %v3244
    %4940 = vmatprep.subr.bf16.mxu0 %v3261
    %4941 = vmatpush1.bf16.msra.mxu0 %v3260
    %4942 = vmatprep.subr.bf16.mxu0 %v3277
    %4943 = vmatpush1.bf16.msra.mxu0 %v3276
    %4944 = vmatprep.subr.bf16.mxu0 %v3293
    %4945 = vmatpush1.bf16.msra.mxu0 %v3292
    %4946 = vmatprep.subr.bf16.mxu0 %v3309
    %4947 = vmatpush1.bf16.msra.mxu0 %v3308
    %4948 = vmatprep.subr.bf16.mxu0 %v3325
    %4949 = vmatpush1.bf16.msra.mxu0 %v3324
    %4950 = vmatprep.subr.bf16.mxu0 %v3341
    %4951 = vmatpush1.bf16.msra.mxu0 %v3340
    %4952 = vmatprep.subr.bf16.mxu0 %v3357
    %4953 = vmatpush1.bf16.msra.mxu0 %v3356
    %4954 = vmatprep.subr.bf16.mxu0 %v3373
    %4955 = vmatpush1.bf16.msra.mxu0 %v3372
    %4956 = vmatprep.subr.bf16.mxu0 %v3389
    %4957 = vmatpush1.bf16.msra.mxu0 %v3388
    %4958 = vmatprep.mubr.bf16.mxu0 %v59
    %4959 = vmatmul.mubr.bf16.gmra.mrb[0].mxu0 %v58
    %v4960 = vpop.f32.mrb[0].mxu0
    %v4961 = vadd.f32 0.0, %v4960
    %v4962 = vpop.f32.mrb[0].mxu0
    %v4963 = vadd.f32 0.0, %v4962
    %v4964 = vpop.f32.mrb[0].mxu0
    %v4965 = vpop.f32.mrb[0].mxu0
    %4966 = vdwg.mxu0
    %4967 = vmatprep.subr.bf16.mxu0 %v3405
    %4968 = vmatpush1.bf16.msra.mxu0 %v3404
    %4969 = vmatprep.subr.bf16.mxu0 %v3421
    %4970 = vmatpush1.bf16.msra.mxu0 %v3420
    %4971 = vmatprep.subr.bf16.mxu0 %v3437
    %4972 = vmatpush1.bf16.msra.mxu0 %v3436
    %4973 = vmatprep.subr.bf16.mxu0 %v3453
    %4974 = vmatpush1.bf16.msra.mxu0 %v3452
    %4975 = vmatprep.subr.bf16.mxu0 %v3469
    %4976 = vmatpush1.bf16.msra.mxu0 %v3468
    %4977 = vmatprep.subr.bf16.mxu0 %v3485
    %4978 = vmatpush1.bf16.msra.mxu0 %v3484
    %4979 = vmatprep.subr.bf16.mxu0 %v3501
    %4980 = vmatpush1.bf16.msra.mxu0 %v3500
    %4981 = vmatprep.subr.bf16.mxu0 %v3517
    %4982 = vmatpush1.bf16.msra.mxu0 %v3516
    %4983 = vmatprep.subr.bf16.mxu0 %v3533
    %4984 = vmatpush1.bf16.msra.mxu0 %v3532
    %4985 = vmatprep.subr.bf16.mxu0 %v3549
    %4986 = vmatpush1.bf16.msra.mxu0 %v3548
    %4987 = vmatprep.subr.bf16.mxu0 %v3565
    %4988 = vmatpush1.bf16.msra.mxu0 %v3564
    %4989 = vmatprep.subr.bf16.mxu0 %v3581
    %4990 = vmatpush1.bf16.msra.mxu0 %v3580
    %4991 = vmatprep.subr.bf16.mxu0 %v3597
    %4992 = vmatpush1.bf16.msra.mxu0 %v3596
    %4993 = vmatprep.subr.bf16.mxu0 %v3613
    %4994 = vmatpush1.bf16.msra.mxu0 %v3612
    %4995 = vmatprep.subr.bf16.mxu0 %v3629
    %4996 = vmatpush1.bf16.msra.mxu0 %v3628
    %4997 = vmatprep.subr.bf16.mxu0 %v3645
    %4998 = vmatpush1.bf16.msra.mxu0 %v3644
    %4999 = vmatprep.mubr.bf16.mxu0 %v65
    %5000 = vmatmul.mubr.bf16.gmra.mrb[0].mxu0 %v64
    %v5001 = vpop.f32.mrb[0].mxu0
    %v5002 = vadd.f32 %v4961, %v5001
    %v5003 = vpop.f32.mrb[0].mxu0
    %v5004 = vadd.f32 %v4963, %v5003
    %v5005 = vpop.f32.mrb[0].mxu0
    %v5006 = vpop.f32.mrb[0].mxu0
    %5007 = vdwg.mxu0
    %5008 = vmatprep.subr.bf16.mxu0 %v3661
    %5009 = vmatpush1.bf16.msra.mxu0 %v3660
    %5010 = vmatprep.subr.bf16.mxu0 %v3677
    %5011 = vmatpush1.bf16.msra.mxu0 %v3676
    %5012 = vmatprep.subr.bf16.mxu0 %v3693
    %5013 = vmatpush1.bf16.msra.mxu0 %v3692
    %5014 = vmatprep.subr.bf16.mxu0 %v3709
    %5015 = vmatpush1.bf16.msra.mxu0 %v3708
    %5016 = vmatprep.subr.bf16.mxu0 %v3725
    %5017 = vmatpush1.bf16.msra.mxu0 %v3724
    %5018 = vmatprep.subr.bf16.mxu0 %v3741
    %5019 = vmatpush1.bf16.msra.mxu0 %v3740
    %5020 = vmatprep.subr.bf16.mxu0 %v3757
    %5021 = vmatpush1.bf16.msra.mxu0 %v3756
    %5022 = vmatprep.subr.bf16.mxu0 %v3773
    %5023 = vmatpush1.bf16.msra.mxu0 %v3772
    %5024 = vmatprep.subr.bf16.mxu0 %v3789
    %5025 = vmatpush1.bf16.msra.mxu0 %v3788
    %5026 = vmatprep.subr.bf16.mxu0 %v3805
    %5027 = vmatpush1.bf16.msra.mxu0 %v3804
    %5028 = vmatprep.subr.bf16.mxu0 %v3821
    %5029 = vmatpush1.bf16.msra.mxu0 %v3820
    %5030 = vmatprep.subr.bf16.mxu0 %v3837
    %5031 = vmatpush1.bf16.msra.mxu0 %v3836
    %5032 = vmatprep.subr.bf16.mxu0 %v3853
    %5033 = vmatpush1.bf16.msra.mxu0 %v3852
    %5034 = vmatprep.subr.bf16.mxu0 %v3869
    %5035 = vmatpush1.bf16.msra.mxu0 %v3868
    %5036 = vmatprep.subr.bf16.mxu0 %v3885
    %5037 = vmatpush1.bf16.msra.mxu0 %v3884
    %5038 = vmatprep.subr.bf16.mxu0 %v3901
    %5039 = vmatpush1.bf16.msra.mxu0 %v3900
    %5040 = vmatprep.mubr.bf16.mxu0 %v71
    %5041 = vmatmul.mubr.bf16.gmra.mrb[0].mxu0 %v70
    %v5042 = vpop.f32.mrb[0].mxu0
    %v5043 = vadd.f32 %v5002, %v5042
    %v5044 = vpop.f32.mrb[0].mxu0
    %v5045 = vadd.f32 %v5004, %v5044
    %v5046 = vpop.f32.mrb[0].mxu0
    %v5047 = vpop.f32.mrb[0].mxu0
    %5048 = vdwg.mxu0
    %5049 = vmatprep.subr.bf16.mxu0 %v3151
    %5050 = vmatpush1.bf16.msra.mxu0 %v3150
    %5051 = vmatprep.subr.bf16.mxu0 %v3167
    %5052 = vmatpush1.bf16.msra.mxu0 %v3166
    %5053 = vmatprep.subr.bf16.mxu0 %v3183
    %5054 = vmatpush1.bf16.msra.mxu0 %v3182
    %5055 = vmatprep.subr.bf16.mxu0 %v3199
    %5056 = vmatpush1.bf16.msra.mxu0 %v3198
    %5057 = vmatprep.subr.bf16.mxu0 %v3215
    %5058 = vmatpush1.bf16.msra.mxu0 %v3214
    %5059 = vmatprep.subr.bf16.mxu0 %v3231
    %5060 = vmatpush1.bf16.msra.mxu0 %v3230
    %5061 = vmatprep.subr.bf16.mxu0 %v3247
    %5062 = vmatpush1.bf16.msra.mxu0 %v3246
    %5063 = vmatprep.subr.bf16.mxu0 %v3263
    %5064 = vmatpush1.bf16.msra.mxu0 %v3262
    %5065 = vmatprep.subr.bf16.mxu0 %v3279
    %5066 = vmatpush1.bf16.msra.mxu0 %v3278
    %5067 = vmatprep.subr.bf16.mxu0 %v3295
    %5068 = vmatpush1.bf16.msra.mxu0 %v3294
    %5069 = vmatprep.subr.bf16.mxu0 %v3311
    %5070 = vmatpush1.bf16.msra.mxu0 %v3310
    %5071 = vmatprep.subr.bf16.mxu0 %v3327
    %5072 = vmatpush1.bf16.msra.mxu0 %v3326
    %5073 = vmatprep.subr.bf16.mxu0 %v3343
    %5074 = vmatpush1.bf16.msra.mxu0 %v3342
    %5075 = vmatprep.subr.bf16.mxu0 %v3359
    %5076 = vmatpush1.bf16.msra.mxu0 %v3358
    %5077 = vmatprep.subr.bf16.mxu0 %v3375
    %5078 = vmatpush1.bf16.msra.mxu0 %v3374
    %5079 = vmatprep.subr.bf16.mxu0 %v3391
    %5080 = vmatpush1.bf16.msra.mxu0 %v3390
    %5081 = vmatprep.mubr.bf16.mxu0 %v59
    %5082 = vmatmul.mubr.bf16.gmra.mrb[0].mxu0 %v58
    %v5083 = vpop.f32.mrb[0].mxu0
    %v5084 = vadd.f32 0.0, %v5083
    %v5085 = vpop.f32.mrb[0].mxu0
    %v5086 = vadd.f32 0.0, %v5085
    %v5087 = vpop.f32.mrb[0].mxu0
    %v5088 = vpop.f32.mrb[0].mxu0
    %5089 = vdwg.mxu0
    %5090 = vmatprep.subr.bf16.mxu0 %v3407
    %5091 = vmatpush1.bf16.msra.mxu0 %v3406
    %5092 = vmatprep.subr.bf16.mxu0 %v3423
    %5093 = vmatpush1.bf16.msra.mxu0 %v3422
    %5094 = vmatprep.subr.bf16.mxu0 %v3439
    %5095 = vmatpush1.bf16.msra.mxu0 %v3438
    %5096 = vmatprep.subr.bf16.mxu0 %v3455
    %5097 = vmatpush1.bf16.msra.mxu0 %v3454
    %5098 = vmatprep.subr.bf16.mxu0 %v3471
    %5099 = vmatpush1.bf16.msra.mxu0 %v3470
    %5100 = vmatprep.subr.bf16.mxu0 %v3487
    %5101 = vmatpush1.bf16.msra.mxu0 %v3486
    %5102 = vmatprep.subr.bf16.mxu0 %v3503
    %5103 = vmatpush1.bf16.msra.mxu0 %v3502
    %5104 = vmatprep.subr.bf16.mxu0 %v3519
    %5105 = vmatpush1.bf16.msra.mxu0 %v3518
    %5106 = vmatprep.subr.bf16.mxu0 %v3535
    %5107 = vmatpush1.bf16.msra.mxu0 %v3534
    %5108 = vmatprep.subr.bf16.mxu0 %v3551
    %5109 = vmatpush1.bf16.msra.mxu0 %v3550
    %5110 = vmatprep.subr.bf16.mxu0 %v3567
    %5111 = vmatpush1.bf16.msra.mxu0 %v3566
    %5112 = vmatprep.subr.bf16.mxu0 %v3583
    %5113 = vmatpush1.bf16.msra.mxu0 %v3582
    %5114 = vmatprep.subr.bf16.mxu0 %v3599
    %5115 = vmatpush1.bf16.msra.mxu0 %v3598
    %5116 = vmatprep.subr.bf16.mxu0 %v3615
    %5117 = vmatpush1.bf16.msra.mxu0 %v3614
    %5118 = vmatprep.subr.bf16.mxu0 %v3631
    %5119 = vmatpush1.bf16.msra.mxu0 %v3630
    %5120 = vmatprep.subr.bf16.mxu0 %v3647
    %5121 = vmatpush1.bf16.msra.mxu0 %v3646
    %5122 = vmatprep.mubr.bf16.mxu0 %v65
    %5123 = vmatmul.mubr.bf16.gmra.mrb[0].mxu0 %v64
    %v5124 = vpop.f32.mrb[0].mxu0
    %v5125 = vadd.f32 %v5084, %v5124
    %v5126 = vpop.f32.mrb[0].mxu0
    %v5127 = vadd.f32 %v5086, %v5126
    %v5128 = vpop.f32.mrb[0].mxu0
    %v5129 = vpop.f32.mrb[0].mxu0
    %5130 = vdwg.mxu0
    %5131 = vmatprep.subr.bf16.mxu0 %v3663
    %5132 = vmatpush1.bf16.msra.mxu0 %v3662
    %5133 = vmatprep.subr.bf16.mxu0 %v3679
    %5134 = vmatpush1.bf16.msra.mxu0 %v3678
    %5135 = vmatprep.subr.bf16.mxu0 %v3695
    %5136 = vmatpush1.bf16.msra.mxu0 %v3694
    %5137 = vmatprep.subr.bf16.mxu0 %v3711
    %5138 = vmatpush1.bf16.msra.mxu0 %v3710
    %5139 = vmatprep.subr.bf16.mxu0 %v3727
    %5140 = vmatpush1.bf16.msra.mxu0 %v3726
    %5141 = vmatprep.subr.bf16.mxu0 %v3743
    %5142 = vmatpush1.bf16.msra.mxu0 %v3742
    %5143 = vmatprep.subr.bf16.mxu0 %v3759
    %5144 = vmatpush1.bf16.msra.mxu0 %v3758
    %5145 = vmatprep.subr.bf16.mxu0 %v3775
    %5146 = vmatpush1.bf16.msra.mxu0 %v3774
    %5147 = vmatprep.subr.bf16.mxu0 %v3791
    %5148 = vmatpush1.bf16.msra.mxu0 %v3790
    %5149 = vmatprep.subr.bf16.mxu0 %v3807
    %5150 = vmatpush1.bf16.msra.mxu0 %v3806
    %5151 = vmatprep.subr.bf16.mxu0 %v3823
    %5152 = vmatpush1.bf16.msra.mxu0 %v3822
    %5153 = vmatprep.subr.bf16.mxu0 %v3839
    %5154 = vmatpush1.bf16.msra.mxu0 %v3838
    %5155 = vmatprep.subr.bf16.mxu0 %v3855
    %5156 = vmatpush1.bf16.msra.mxu0 %v3854
    %5157 = vmatprep.subr.bf16.mxu0 %v3871
    %5158 = vmatpush1.bf16.msra.mxu0 %v3870
    %5159 = vmatprep.subr.bf16.mxu0 %v3887
    %5160 = vmatpush1.bf16.msra.mxu0 %v3886
    %5161 = vmatprep.subr.bf16.mxu0 %v3903
    %5162 = vmatpush1.bf16.msra.mxu0 %v3902
    %5163 = vmatprep.mubr.bf16.mxu0 %v71
    %5164 = vmatmul.mubr.bf16.gmra.mrb[0].mxu0 %v70
    %v5165 = vpop.f32.mrb[0].mxu0
    %v5166 = vadd.f32 %v5125, %v5165
    %v5167 = vpop.f32.mrb[0].mxu0
    %v5168 = vadd.f32 %v5127, %v5167
    %v5169 = vpop.f32.mrb[0].mxu0
    %v5170 = vpop.f32.mrb[0].mxu0
    %5171 = vdwg.mxu0
    %5172 = vmatprep.subr.bf16.mxu0 %v3153
    %5173 = vmatpush1.bf16.msra.mxu0 %v3152
    %5174 = vmatprep.subr.bf16.mxu0 %v3169
    %5175 = vmatpush1.bf16.msra.mxu0 %v3168
    %5176 = vmatprep.subr.bf16.mxu0 %v3185
    %5177 = vmatpush1.bf16.msra.mxu0 %v3184
    %5178 = vmatprep.subr.bf16.mxu0 %v3201
    %5179 = vmatpush1.bf16.msra.mxu0 %v3200
    %5180 = vmatprep.subr.bf16.mxu0 %v3217
    %5181 = vmatpush1.bf16.msra.mxu0 %v3216
    %5182 = vmatprep.subr.bf16.mxu0 %v3233
    %5183 = vmatpush1.bf16.msra.mxu0 %v3232
    %5184 = vmatprep.subr.bf16.mxu0 %v3249
    %5185 = vmatpush1.bf16.msra.mxu0 %v3248
    %5186 = vmatprep.subr.bf16.mxu0 %v3265
    %5187 = vmatpush1.bf16.msra.mxu0 %v3264
    %5188 = vmatprep.subr.bf16.mxu0 %v3281
    %5189 = vmatpush1.bf16.msra.mxu0 %v3280
    %5190 = vmatprep.subr.bf16.mxu0 %v3297
    %5191 = vmatpush1.bf16.msra.mxu0 %v3296
    %5192 = vmatprep.subr.bf16.mxu0 %v3313
    %5193 = vmatpush1.bf16.msra.mxu0 %v3312
    %5194 = vmatprep.subr.bf16.mxu0 %v3329
    %5195 = vmatpush1.bf16.msra.mxu0 %v3328
    %5196 = vmatprep.subr.bf16.mxu0 %v3345
    %5197 = vmatpush1.bf16.msra.mxu0 %v3344
    %5198 = vmatprep.subr.bf16.mxu0 %v3361
    %5199 = vmatpush1.bf16.msra.mxu0 %v3360
    %5200 = vmatprep.subr.bf16.mxu0 %v3377
    %5201 = vmatpush1.bf16.msra.mxu0 %v3376
    %5202 = vmatprep.subr.bf16.mxu0 %v3393
    %5203 = vmatpush1.bf16.msra.mxu0 %v3392
    %5204 = vmatprep.mubr.bf16.mxu0 %v59
    %5205 = vmatmul.mubr.bf16.gmra.mrb[0].mxu0 %v58
    %v5206 = vpop.f32.mrb[0].mxu0
    %v5207 = vadd.f32 0.0, %v5206
    %v5208 = vpop.f32.mrb[0].mxu0
    %v5209 = vadd.f32 0.0, %v5208
    %v5210 = vpop.f32.mrb[0].mxu0
    %v5211 = vpop.f32.mrb[0].mxu0
    %5212 = vdwg.mxu0
    %5213 = vmatprep.subr.bf16.mxu0 %v3409
    %5214 = vmatpush1.bf16.msra.mxu0 %v3408
    %5215 = vmatprep.subr.bf16.mxu0 %v3425
    %5216 = vmatpush1.bf16.msra.mxu0 %v3424
    %5217 = vmatprep.subr.bf16.mxu0 %v3441
    %5218 = vmatpush1.bf16.msra.mxu0 %v3440
    %5219 = vmatprep.subr.bf16.mxu0 %v3457
    %5220 = vmatpush1.bf16.msra.mxu0 %v3456
    %5221 = vmatprep.subr.bf16.mxu0 %v3473
    %5222 = vmatpush1.bf16.msra.mxu0 %v3472
    %5223 = vmatprep.subr.bf16.mxu0 %v3489
    %5224 = vmatpush1.bf16.msra.mxu0 %v3488
    %5225 = vmatprep.subr.bf16.mxu0 %v3505
    %5226 = vmatpush1.bf16.msra.mxu0 %v3504
    %5227 = vmatprep.subr.bf16.mxu0 %v3521
    %5228 = vmatpush1.bf16.msra.mxu0 %v3520
    %5229 = vmatprep.subr.bf16.mxu0 %v3537
    %5230 = vmatpush1.bf16.msra.mxu0 %v3536
    %5231 = vmatprep.subr.bf16.mxu0 %v3553
    %5232 = vmatpush1.bf16.msra.mxu0 %v3552
    %5233 = vmatprep.subr.bf16.mxu0 %v3569
    %5234 = vmatpush1.bf16.msra.mxu0 %v3568
    %5235 = vmatprep.subr.bf16.mxu0 %v3585
    %5236 = vmatpush1.bf16.msra.mxu0 %v3584
    %5237 = vmatprep.subr.bf16.mxu0 %v3601
    %5238 = vmatpush1.bf16.msra.mxu0 %v3600
    %5239 = vmatprep.subr.bf16.mxu0 %v3617
    %5240 = vmatpush1.bf16.msra.mxu0 %v3616
    %5241 = vmatprep.subr.bf16.mxu0 %v3633
    %5242 = vmatpush1.bf16.msra.mxu0 %v3632
    %5243 = vmatprep.subr.bf16.mxu0 %v3649
    %5244 = vmatpush1.bf16.msra.mxu0 %v3648
    %5245 = vmatprep.mubr.bf16.mxu0 %v65
    %5246 = vmatmul.mubr.bf16.gmra.mrb[0].mxu0 %v64
    %v5247 = vpop.f32.mrb[0].mxu0
    %v5248 = vadd.f32 %v5207, %v5247
    %v5249 = vpop.f32.mrb[0].mxu0
    %v5250 = vadd.f32 %v5209, %v5249
    %v5251 = vpop.f32.mrb[0].mxu0
    %v5252 = vpop.f32.mrb[0].mxu0
    %5253 = vdwg.mxu0
    %5254 = vmatprep.subr.bf16.mxu0 %v3665
    %5255 = vmatpush1.bf16.msra.mxu0 %v3664
    %5256 = vmatprep.subr.bf16.mxu0 %v3681
    %5257 = vmatpush1.bf16.msra.mxu0 %v3680
    %5258 = vmatprep.subr.bf16.mxu0 %v3697
    %5259 = vmatpush1.bf16.msra.mxu0 %v3696
    %5260 = vmatprep.subr.bf16.mxu0 %v3713
    %5261 = vmatpush1.bf16.msra.mxu0 %v3712
    %5262 = vmatprep.subr.bf16.mxu0 %v3729
    %5263 = vmatpush1.bf16.msra.mxu0 %v3728
    %5264 = vmatprep.subr.bf16.mxu0 %v3745
    %5265 = vmatpush1.bf16.msra.mxu0 %v3744
    %5266 = vmatprep.subr.bf16.mxu0 %v3761
    %5267 = vmatpush1.bf16.msra.mxu0 %v3760
    %5268 = vmatprep.subr.bf16.mxu0 %v3777
    %5269 = vmatpush1.bf16.msra.mxu0 %v3776
    %5270 = vmatprep.subr.bf16.mxu0 %v3793
    %5271 = vmatpush1.bf16.msra.mxu0 %v3792
    %5272 = vmatprep.subr.bf16.mxu0 %v3809
    %5273 = vmatpush1.bf16.msra.mxu0 %v3808
    %5274 = vmatprep.subr.bf16.mxu0 %v3825
    %5275 = vmatpush1.bf16.msra.mxu0 %v3824
    %5276 = vmatprep.subr.bf16.mxu0 %v3841
    %5277 = vmatpush1.bf16.msra.mxu0 %v3840
    %5278 = vmatprep.subr.bf16.mxu0 %v3857
    %5279 = vmatpush1.bf16.msra.mxu0 %v3856
    %5280 = vmatprep.subr.bf16.mxu0 %v3873
    %5281 = vmatpush1.bf16.msra.mxu0 %v3872
    %5282 = vmatprep.subr.bf16.mxu0 %v3889
    %5283 = vmatpush1.bf16.msra.mxu0 %v3888
    %5284 = vmatprep.subr.bf16.mxu0 %v3905
    %5285 = vmatpush1.bf16.msra.mxu0 %v3904
    %5286 = vmatprep.mubr.bf16.mxu0 %v71
    %5287 = vmatmul.mubr.bf16.gmra.mrb[0].mxu0 %v70
    %v5288 = vpop.f32.mrb[0].mxu0
    %v5289 = vadd.f32 %v5248, %v5288
    %v5290 = vpop.f32.mrb[0].mxu0
    %v5291 = vadd.f32 %v5250, %v5290
    %v5292 = vpop.f32.mrb[0].mxu0
    %v5293 = vpop.f32.mrb[0].mxu0
    %5294 = vdwg.mxu0
    %5295 = vmatprep.subr.bf16.mxu0 %v3155
    %5296 = vmatpush1.bf16.msra.mxu0 %v3154
    %5297 = vmatprep.subr.bf16.mxu0 %v3171
    %5298 = vmatpush1.bf16.msra.mxu0 %v3170
    %5299 = vmatprep.subr.bf16.mxu0 %v3187
    %5300 = vmatpush1.bf16.msra.mxu0 %v3186
    %5301 = vmatprep.subr.bf16.mxu0 %v3203
    %5302 = vmatpush1.bf16.msra.mxu0 %v3202
    %5303 = vmatprep.subr.bf16.mxu0 %v3219
    %5304 = vmatpush1.bf16.msra.mxu0 %v3218
    %5305 = vmatprep.subr.bf16.mxu0 %v3235
    %5306 = vmatpush1.bf16.msra.mxu0 %v3234
    %5307 = vmatprep.subr.bf16.mxu0 %v3251
    %5308 = vmatpush1.bf16.msra.mxu0 %v3250
    %5309 = vmatprep.subr.bf16.mxu0 %v3267
    %5310 = vmatpush1.bf16.msra.mxu0 %v3266
    %5311 = vmatprep.subr.bf16.mxu0 %v3283
    %5312 = vmatpush1.bf16.msra.mxu0 %v3282
    %5313 = vmatprep.subr.bf16.mxu0 %v3299
    %5314 = vmatpush1.bf16.msra.mxu0 %v3298
    %5315 = vmatprep.subr.bf16.mxu0 %v3315
    %5316 = vmatpush1.bf16.msra.mxu0 %v3314
    %5317 = vmatprep.subr.bf16.mxu0 %v3331
    %5318 = vmatpush1.bf16.msra.mxu0 %v3330
    %5319 = vmatprep.subr.bf16.mxu0 %v3347
    %5320 = vmatpush1.bf16.msra.mxu0 %v3346
    %5321 = vmatprep.subr.bf16.mxu0 %v3363
    %5322 = vmatpush1.bf16.msra.mxu0 %v3362
    %5323 = vmatprep.subr.bf16.mxu0 %v3379
    %5324 = vmatpush1.bf16.msra.mxu0 %v3378
    %5325 = vmatprep.subr.bf16.mxu0 %v3395
    %5326 = vmatpush1.bf16.msra.mxu0 %v3394
    %5327 = vmatprep.mubr.bf16.mxu0 %v59
    %5328 = vmatmul.mubr.bf16.gmra.mrb[0].mxu0 %v58
    %v5329 = vpop.f32.mrb[0].mxu0
    %v5330 = vadd.f32 0.0, %v5329
    %v5331 = vpop.f32.mrb[0].mxu0
    %v5332 = vadd.f32 0.0, %v5331
    %v5333 = vpop.f32.mrb[0].mxu0
    %v5334 = vpop.f32.mrb[0].mxu0
    %5335 = vdwg.mxu0
    %5336 = vmatprep.subr.bf16.mxu0 %v3411
    %5337 = vmatpush1.bf16.msra.mxu0 %v3410
    %5338 = vmatprep.subr.bf16.mxu0 %v3427
    %5339 = vmatpush1.bf16.msra.mxu0 %v3426
    %5340 = vmatprep.subr.bf16.mxu0 %v3443
    %5341 = vmatpush1.bf16.msra.mxu0 %v3442
    %5342 = vmatprep.subr.bf16.mxu0 %v3459
    %5343 = vmatpush1.bf16.msra.mxu0 %v3458
    %5344 = vmatprep.subr.bf16.mxu0 %v3475
    %5345 = vmatpush1.bf16.msra.mxu0 %v3474
    %5346 = vmatprep.subr.bf16.mxu0 %v3491
    %5347 = vmatpush1.bf16.msra.mxu0 %v3490
    %5348 = vmatprep.subr.bf16.mxu0 %v3507
    %5349 = vmatpush1.bf16.msra.mxu0 %v3506
    %5350 = vmatprep.subr.bf16.mxu0 %v3523
    %5351 = vmatpush1.bf16.msra.mxu0 %v3522
    %5352 = vmatprep.subr.bf16.mxu0 %v3539
    %5353 = vmatpush1.bf16.msra.mxu0 %v3538
    %5354 = vmatprep.subr.bf16.mxu0 %v3555
    %5355 = vmatpush1.bf16.msra.mxu0 %v3554
    %5356 = vmatprep.subr.bf16.mxu0 %v3571
    %5357 = vmatpush1.bf16.msra.mxu0 %v3570
    %5358 = vmatprep.subr.bf16.mxu0 %v3587
    %5359 = vmatpush1.bf16.msra.mxu0 %v3586
    %5360 = vmatprep.subr.bf16.mxu0 %v3603
    %5361 = vmatpush1.bf16.msra.mxu0 %v3602
    %5362 = vmatprep.subr.bf16.mxu0 %v3619
    %5363 = vmatpush1.bf16.msra.mxu0 %v3618
    %5364 = vmatprep.subr.bf16.mxu0 %v3635
    %5365 = vmatpush1.bf16.msra.mxu0 %v3634
    %5366 = vmatprep.subr.bf16.mxu0 %v3651
    %5367 = vmatpush1.bf16.msra.mxu0 %v3650
    %5368 = vmatprep.mubr.bf16.mxu0 %v65
    %5369 = vmatmul.mubr.bf16.gmra.mrb[0].mxu0 %v64
    %v5370 = vpop.f32.mrb[0].mxu0
    %v5371 = vadd.f32 %v5330, %v5370
    %v5372 = vpop.f32.mrb[0].mxu0
    %v5373 = vadd.f32 %v5332, %v5372
    %v5374 = vpop.f32.mrb[0].mxu0
    %v5375 = vpop.f32.mrb[0].mxu0
    %5376 = vdwg.mxu0
    %5377 = vmatprep.subr.bf16.mxu0 %v3667
    %5378 = vmatpush1.bf16.msra.mxu0 %v3666
    %5379 = vmatprep.subr.bf16.mxu0 %v3683
    %5380 = vmatpush1.bf16.msra.mxu0 %v3682
    %5381 = vmatprep.subr.bf16.mxu0 %v3699
    %5382 = vmatpush1.bf16.msra.mxu0 %v3698
    %5383 = vmatprep.subr.bf16.mxu0 %v3715
    %5384 = vmatpush1.bf16.msra.mxu0 %v3714
    %5385 = vmatprep.subr.bf16.mxu0 %v3731
    %5386 = vmatpush1.bf16.msra.mxu0 %v3730
    %5387 = vmatprep.subr.bf16.mxu0 %v3747
    %5388 = vmatpush1.bf16.msra.mxu0 %v3746
    %5389 = vmatprep.subr.bf16.mxu0 %v3763
    %5390 = vmatpush1.bf16.msra.mxu0 %v3762
    %5391 = vmatprep.subr.bf16.mxu0 %v3779
    %5392 = vmatpush1.bf16.msra.mxu0 %v3778
    %5393 = vmatprep.subr.bf16.mxu0 %v3795
    %5394 = vmatpush1.bf16.msra.mxu0 %v3794
    %5395 = vmatprep.subr.bf16.mxu0 %v3811
    %5396 = vmatpush1.bf16.msra.mxu0 %v3810
    %5397 = vmatprep.subr.bf16.mxu0 %v3827
    %5398 = vmatpush1.bf16.msra.mxu0 %v3826
    %5399 = vmatprep.subr.bf16.mxu0 %v3843
    %5400 = vmatpush1.bf16.msra.mxu0 %v3842
    %5401 = vmatprep.subr.bf16.mxu0 %v3859
    %5402 = vmatpush1.bf16.msra.mxu0 %v3858
    %5403 = vmatprep.subr.bf16.mxu0 %v3875
    %5404 = vmatpush1.bf16.msra.mxu0 %v3874
    %5405 = vmatprep.subr.bf16.mxu0 %v3891
    %5406 = vmatpush1.bf16.msra.mxu0 %v3890
    %5407 = vmatprep.subr.bf16.mxu0 %v3907
    %5408 = vmatpush1.bf16.msra.mxu0 %v3906
    %5409 = vmatprep.mubr.bf16.mxu0 %v71
    %5410 = vmatmul.mubr.bf16.gmra.mrb[0].mxu0 %v70
    %v5411 = vpop.f32.mrb[0].mxu0
    %v5412 = vadd.f32 %v5371, %v5411
    %v5413 = vpop.f32.mrb[0].mxu0
    %v5414 = vadd.f32 %v5373, %v5413
    %v5415 = vpop.f32.mrb[0].mxu0
    %v5416 = vpop.f32.mrb[0].mxu0
    %5417 = vdwg.mxu0
    %5418 = vmatprep.subr.bf16.mxu0 %v3157
    %5419 = vmatpush1.bf16.msra.mxu0 %v3156
    %5420 = vmatprep.subr.bf16.mxu0 %v3173
    %5421 = vmatpush1.bf16.msra.mxu0 %v3172
    %5422 = vmatprep.subr.bf16.mxu0 %v3189
    %5423 = vmatpush1.bf16.msra.mxu0 %v3188
    %5424 = vmatprep.subr.bf16.mxu0 %v3205
    %5425 = vmatpush1.bf16.msra.mxu0 %v3204
    %5426 = vmatprep.subr.bf16.mxu0 %v3221
    %5427 = vmatpush1.bf16.msra.mxu0 %v3220
    %5428 = vmatprep.subr.bf16.mxu0 %v3237
    %5429 = vmatpush1.bf16.msra.mxu0 %v3236
    %5430 = vmatprep.subr.bf16.mxu0 %v3253
    %5431 = vmatpush1.bf16.msra.mxu0 %v3252
    %5432 = vmatprep.subr.bf16.mxu0 %v3269
    %5433 = vmatpush1.bf16.msra.mxu0 %v3268
    %5434 = vmatprep.subr.bf16.mxu0 %v3285
    %5435 = vmatpush1.bf16.msra.mxu0 %v3284
    %5436 = vmatprep.subr.bf16.mxu0 %v3301
    %5437 = vmatpush1.bf16.msra.mxu0 %v3300
    %5438 = vmatprep.subr.bf16.mxu0 %v3317
    %5439 = vmatpush1.bf16.msra.mxu0 %v3316
    %5440 = vmatprep.subr.bf16.mxu0 %v3333
    %5441 = vmatpush1.bf16.msra.mxu0 %v3332
    %5442 = vmatprep.subr.bf16.mxu0 %v3349
    %5443 = vmatpush1.bf16.msra.mxu0 %v3348
    %5444 = vmatprep.subr.bf16.mxu0 %v3365
    %5445 = vmatpush1.bf16.msra.mxu0 %v3364
    %5446 = vmatprep.subr.bf16.mxu0 %v3381
    %5447 = vmatpush1.bf16.msra.mxu0 %v3380
    %5448 = vmatprep.subr.bf16.mxu0 %v3397
    %5449 = vmatpush1.bf16.msra.mxu0 %v3396
    %5450 = vmatprep.mubr.bf16.mxu0 %v59
    %5451 = vmatmul.mubr.bf16.gmra.mrb[0].mxu0 %v58
    %v5452 = vpop.f32.mrb[0].mxu0
    %v5453 = vadd.f32 0.0, %v5452
    %v5454 = vpop.f32.mrb[0].mxu0
    %v5455 = vadd.f32 0.0, %v5454
    %v5456 = vpop.f32.mrb[0].mxu0
    %v5457 = vpop.f32.mrb[0].mxu0
    %5458 = vdwg.mxu0
    %5459 = vmatprep.subr.bf16.mxu0 %v3413
    %5460 = vmatpush1.bf16.msra.mxu0 %v3412
    %5461 = vmatprep.subr.bf16.mxu0 %v3429
    %5462 = vmatpush1.bf16.msra.mxu0 %v3428
    %5463 = vmatprep.subr.bf16.mxu0 %v3445
    %5464 = vmatpush1.bf16.msra.mxu0 %v3444
    %5465 = vmatprep.subr.bf16.mxu0 %v3461
    %5466 = vmatpush1.bf16.msra.mxu0 %v3460
    %5467 = vmatprep.subr.bf16.mxu0 %v3477
    %5468 = vmatpush1.bf16.msra.mxu0 %v3476
    %5469 = vmatprep.subr.bf16.mxu0 %v3493
    %5470 = vmatpush1.bf16.msra.mxu0 %v3492
    %5471 = vmatprep.subr.bf16.mxu0 %v3509
    %5472 = vmatpush1.bf16.msra.mxu0 %v3508
    %5473 = vmatprep.subr.bf16.mxu0 %v3525
    %5474 = vmatpush1.bf16.msra.mxu0 %v3524
    %5475 = vmatprep.subr.bf16.mxu0 %v3541
    %5476 = vmatpush1.bf16.msra.mxu0 %v3540
    %5477 = vmatprep.subr.bf16.mxu0 %v3557
    %5478 = vmatpush1.bf16.msra.mxu0 %v3556
    %5479 = vmatprep.subr.bf16.mxu0 %v3573
    %5480 = vmatpush1.bf16.msra.mxu0 %v3572
    %5481 = vmatprep.subr.bf16.mxu0 %v3589
    %5482 = vmatpush1.bf16.msra.mxu0 %v3588
    %5483 = vmatprep.subr.bf16.mxu0 %v3605
    %5484 = vmatpush1.bf16.msra.mxu0 %v3604
    %5485 = vmatprep.subr.bf16.mxu0 %v3621
    %5486 = vmatpush1.bf16.msra.mxu0 %v3620
    %5487 = vmatprep.subr.bf16.mxu0 %v3637
    %5488 = vmatpush1.bf16.msra.mxu0 %v3636
    %5489 = vmatprep.subr.bf16.mxu0 %v3653
    %5490 = vmatpush1.bf16.msra.mxu0 %v3652
    %5491 = vmatprep.mubr.bf16.mxu0 %v65
    %5492 = vmatmul.mubr.bf16.gmra.mrb[0].mxu0 %v64
    %v5493 = vpop.f32.mrb[0].mxu0
    %v5494 = vadd.f32 %v5453, %v5493
    %v5495 = vpop.f32.mrb[0].mxu0
    %v5496 = vadd.f32 %v5455, %v5495
    %v5497 = vpop.f32.mrb[0].mxu0
    %v5498 = vpop.f32.mrb[0].mxu0
    %5499 = vdwg.mxu0
    %5500 = vmatprep.subr.bf16.mxu0 %v3669
    %5501 = vmatpush1.bf16.msra.mxu0 %v3668
    %5502 = vmatprep.subr.bf16.mxu0 %v3685
    %5503 = vmatpush1.bf16.msra.mxu0 %v3684
    %5504 = vmatprep.subr.bf16.mxu0 %v3701
    %5505 = vmatpush1.bf16.msra.mxu0 %v3700
    %5506 = vmatprep.subr.bf16.mxu0 %v3717
    %5507 = vmatpush1.bf16.msra.mxu0 %v3716
    %5508 = vmatprep.subr.bf16.mxu0 %v3733
    %5509 = vmatpush1.bf16.msra.mxu0 %v3732
    %5510 = vmatprep.subr.bf16.mxu0 %v3749
    %5511 = vmatpush1.bf16.msra.mxu0 %v3748
    %5512 = vmatprep.subr.bf16.mxu0 %v3765
    %5513 = vmatpush1.bf16.msra.mxu0 %v3764
    %5514 = vmatprep.subr.bf16.mxu0 %v3781
    %5515 = vmatpush1.bf16.msra.mxu0 %v3780
    %5516 = vmatprep.subr.bf16.mxu0 %v3797
    %5517 = vmatpush1.bf16.msra.mxu0 %v3796
    %5518 = vmatprep.subr.bf16.mxu0 %v3813
    %5519 = vmatpush1.bf16.msra.mxu0 %v3812
    %5520 = vmatprep.subr.bf16.mxu0 %v3829
    %5521 = vmatpush1.bf16.msra.mxu0 %v3828
    %5522 = vmatprep.subr.bf16.mxu0 %v3845
    %5523 = vmatpush1.bf16.msra.mxu0 %v3844
    %5524 = vmatprep.subr.bf16.mxu0 %v3861
    %5525 = vmatpush1.bf16.msra.mxu0 %v3860
    %5526 = vmatprep.subr.bf16.mxu0 %v3877
    %5527 = vmatpush1.bf16.msra.mxu0 %v3876
    %5528 = vmatprep.subr.bf16.mxu0 %v3893
    %5529 = vmatpush1.bf16.msra.mxu0 %v3892
    %5530 = vmatprep.subr.bf16.mxu0 %v3909
    %5531 = vmatpush1.bf16.msra.mxu0 %v3908
    %5532 = vmatprep.mubr.bf16.mxu0 %v71
    %5533 = vmatmul.mubr.bf16.gmra.mrb[0].mxu0 %v70
    %v5534 = vpop.f32.mrb[0].mxu0
    %v5535 = vadd.f32 %v5494, %v5534
    %v5536 = vpop.f32.mrb[0].mxu0
    %v5537 = vadd.f32 %v5496, %v5536
    %v5538 = vpop.f32.mrb[0].mxu0
    %v5539 = vpop.f32.mrb[0].mxu0
    %5540 = vdwg.mxu0
    %5541 = vmatprep.subr.bf16.mxu0 %v3159
    %5542 = vmatpush1.bf16.msra.mxu0 %v3158
    %5543 = vmatprep.subr.bf16.mxu0 %v3175
    %5544 = vmatpush1.bf16.msra.mxu0 %v3174
    %5545 = vmatprep.subr.bf16.mxu0 %v3191
    %5546 = vmatpush1.bf16.msra.mxu0 %v3190
    %5547 = vmatprep.subr.bf16.mxu0 %v3207
    %5548 = vmatpush1.bf16.msra.mxu0 %v3206
    %5549 = vmatprep.subr.bf16.mxu0 %v3223
    %5550 = vmatpush1.bf16.msra.mxu0 %v3222
    %5551 = vmatprep.subr.bf16.mxu0 %v3239
    %5552 = vmatpush1.bf16.msra.mxu0 %v3238
    %5553 = vmatprep.subr.bf16.mxu0 %v3255
    %5554 = vmatpush1.bf16.msra.mxu0 %v3254
    %5555 = vmatprep.subr.bf16.mxu0 %v3271
    %5556 = vmatpush1.bf16.msra.mxu0 %v3270
    %5557 = vmatprep.subr.bf16.mxu0 %v3287
    %5558 = vmatpush1.bf16.msra.mxu0 %v3286
    %5559 = vmatprep.subr.bf16.mxu0 %v3303
    %5560 = vmatpush1.bf16.msra.mxu0 %v3302
    %5561 = vmatprep.subr.bf16.mxu0 %v3319
    %5562 = vmatpush1.bf16.msra.mxu0 %v3318
    %5563 = vmatprep.subr.bf16.mxu0 %v3335
    %5564 = vmatpush1.bf16.msra.mxu0 %v3334
    %5565 = vmatprep.subr.bf16.mxu0 %v3351
    %5566 = vmatpush1.bf16.msra.mxu0 %v3350
    %5567 = vmatprep.subr.bf16.mxu0 %v3367
    %5568 = vmatpush1.bf16.msra.mxu0 %v3366
    %5569 = vmatprep.subr.bf16.mxu0 %v3383
    %5570 = vmatpush1.bf16.msra.mxu0 %v3382
    %5571 = vmatprep.subr.bf16.mxu0 %v3399
    %5572 = vmatpush1.bf16.msra.mxu0 %v3398
    %5573 = vmatprep.mubr.bf16.mxu0 %v59
    %5574 = vmatmul.mubr.bf16.gmra.mrb[0].mxu0 %v58
    %v5575 = vpop.f32.mrb[0].mxu0
    %v5576 = vadd.f32 0.0, %v5575
    %v5577 = vpop.f32.mrb[0].mxu0
    %v5578 = vadd.f32 0.0, %v5577
    %v5579 = vpop.f32.mrb[0].mxu0
    %v5580 = vpop.f32.mrb[0].mxu0
    %5581 = vdwg.mxu0
    %5582 = vmatprep.subr.bf16.mxu0 %v3415
    %5583 = vmatpush1.bf16.msra.mxu0 %v3414
    %5584 = vmatprep.subr.bf16.mxu0 %v3431
    %5585 = vmatpush1.bf16.msra.mxu0 %v3430
    %5586 = vmatprep.subr.bf16.mxu0 %v3447
    %5587 = vmatpush1.bf16.msra.mxu0 %v3446
    %5588 = vmatprep.subr.bf16.mxu0 %v3463
    %5589 = vmatpush1.bf16.msra.mxu0 %v3462
    %5590 = vmatprep.subr.bf16.mxu0 %v3479
    %5591 = vmatpush1.bf16.msra.mxu0 %v3478
    %5592 = vmatprep.subr.bf16.mxu0 %v3495
    %5593 = vmatpush1.bf16.msra.mxu0 %v3494
    %5594 = vmatprep.subr.bf16.mxu0 %v3511
    %5595 = vmatpush1.bf16.msra.mxu0 %v3510
    %5596 = vmatprep.subr.bf16.mxu0 %v3527
    %5597 = vmatpush1.bf16.msra.mxu0 %v3526
    %5598 = vmatprep.subr.bf16.mxu0 %v3543
    %5599 = vmatpush1.bf16.msra.mxu0 %v3542
    %5600 = vmatprep.subr.bf16.mxu0 %v3559
    %5601 = vmatpush1.bf16.msra.mxu0 %v3558
    %5602 = vmatprep.subr.bf16.mxu0 %v3575
    %5603 = vmatpush1.bf16.msra.mxu0 %v3574
    %5604 = vmatprep.subr.bf16.mxu0 %v3591
    %5605 = vmatpush1.bf16.msra.mxu0 %v3590
    %5606 = vmatprep.subr.bf16.mxu0 %v3607
    %5607 = vmatpush1.bf16.msra.mxu0 %v3606
    %5608 = vmatprep.subr.bf16.mxu0 %v3623
    %5609 = vmatpush1.bf16.msra.mxu0 %v3622
    %5610 = vmatprep.subr.bf16.mxu0 %v3639
    %5611 = vmatpush1.bf16.msra.mxu0 %v3638
    %5612 = vmatprep.subr.bf16.mxu0 %v3655
    %5613 = vmatpush1.bf16.msra.mxu0 %v3654
    %5614 = vmatprep.mubr.bf16.mxu0 %v65
    %5615 = vmatmul.mubr.bf16.gmra.mrb[0].mxu0 %v64
    %v5616 = vpop.f32.mrb[0].mxu0
    %v5617 = vadd.f32 %v5576, %v5616
    %v5618 = vpop.f32.mrb[0].mxu0
    %v5619 = vadd.f32 %v5578, %v5618
    %v5620 = vpop.f32.mrb[0].mxu0
    %v5621 = vpop.f32.mrb[0].mxu0
    %5622 = vdwg.mxu0
    %5623 = vmatprep.subr.bf16.mxu0 %v3671
    %5624 = vmatpush1.bf16.msra.mxu0 %v3670
    %5625 = vmatprep.subr.bf16.mxu0 %v3687
    %5626 = vmatpush1.bf16.msra.mxu0 %v3686
    %5627 = vmatprep.subr.bf16.mxu0 %v3703
    %5628 = vmatpush1.bf16.msra.mxu0 %v3702
    %5629 = vmatprep.subr.bf16.mxu0 %v3719
    %5630 = vmatpush1.bf16.msra.mxu0 %v3718
    %5631 = vmatprep.subr.bf16.mxu0 %v3735
    %5632 = vmatpush1.bf16.msra.mxu0 %v3734
    %5633 = vmatprep.subr.bf16.mxu0 %v3751
    %5634 = vmatpush1.bf16.msra.mxu0 %v3750
    %5635 = vmatprep.subr.bf16.mxu0 %v3767
    %5636 = vmatpush1.bf16.msra.mxu0 %v3766
    %5637 = vmatprep.subr.bf16.mxu0 %v3783
    %5638 = vmatpush1.bf16.msra.mxu0 %v3782
    %5639 = vmatprep.subr.bf16.mxu0 %v3799
    %5640 = vmatpush1.bf16.msra.mxu0 %v3798
    %5641 = vmatprep.subr.bf16.mxu0 %v3815
    %5642 = vmatpush1.bf16.msra.mxu0 %v3814
    %5643 = vmatprep.subr.bf16.mxu0 %v3831
    %5644 = vmatpush1.bf16.msra.mxu0 %v3830
    %5645 = vmatprep.subr.bf16.mxu0 %v3847
    %5646 = vmatpush1.bf16.msra.mxu0 %v3846
    %5647 = vmatprep.subr.bf16.mxu0 %v3863
    %5648 = vmatpush1.bf16.msra.mxu0 %v3862
    %5649 = vmatprep.subr.bf16.mxu0 %v3879
    %5650 = vmatpush1.bf16.msra.mxu0 %v3878
    %5651 = vmatprep.subr.bf16.mxu0 %v3895
    %5652 = vmatpush1.bf16.msra.mxu0 %v3894
    %5653 = vmatprep.subr.bf16.mxu0 %v3911
    %5654 = vmatpush1.bf16.msra.mxu0 %v3910
    %5655 = vmatprep.mubr.bf16.mxu0 %v71
    %5656 = vmatmul.mubr.bf16.gmra.mrb[0].mxu0 %v70
    %v5657 = vpop.f32.mrb[0].mxu0
    %v5658 = vadd.f32 %v5617, %v5657
    %v5659 = vpop.f32.mrb[0].mxu0
    %v5660 = vadd.f32 %v5619, %v5659
    %v5661 = vpop.f32.mrb[0].mxu0
    %v5662 = vpop.f32.mrb[0].mxu0
    %5663 = vdwg.mxu0
    %v5664 = vld [vmem:[#allocation7] sm:$0xff]
    %v5665 = vld [vmem:[#allocation7 + $0x8] sm:$0xff]
    %v5668 = vlaneseq
    %v5669 = vshrl.u32 %v5668, 7
    %v5670 = vsub.s32 0, %v5669
    %v5671 = vrot.slane %v5664, %v5670
    %v5672 = vlaneseq
    %v5673 = vshrl.u32 %v5672, 7
    %v5674 = vsub.s32 1, %v5673
    %v5675 = vrot.slane %v5664, %v5674
    %v5676 = vlaneseq
    %v5677 = vshrl.u32 %v5676, 7
    %v5678 = vsub.s32 2, %v5677
    %v5679 = vrot.slane %v5664, %v5678
    %v5680 = vlaneseq
    %v5681 = vshrl.u32 %v5680, 7
    %v5682 = vsub.s32 3, %v5681
    %v5683 = vrot.slane %v5664, %v5682
    %v5684 = vlaneseq
    %v5685 = vshrl.u32 %v5684, 7
    %v5686 = vsub.s32 4, %v5685
    %v5687 = vrot.slane %v5664, %v5686
    %v5688 = vlaneseq
    %v5689 = vshrl.u32 %v5688, 7
    %v5690 = vsub.s32 5, %v5689
    %v5691 = vrot.slane %v5664, %v5690
    %v5692 = vlaneseq
    %v5693 = vshrl.u32 %v5692, 7
    %v5694 = vsub.s32 6, %v5693
    %v5695 = vrot.slane %v5664, %v5694
    %v5696 = vlaneseq
    %v5697 = vshrl.u32 %v5696, 7
    %v5698 = vsub.s32 7, %v5697
    %v5699 = vrot.slane %v5664, %v5698
    %v5700 = vlaneseq
    %v5701 = vshrl.u32 %v5700, 7
    %v5702 = vsub.s32 0, %v5701
    %v5703 = vrot.slane %v5665, %v5702
    %v5704 = vlaneseq
    %v5705 = vshrl.u32 %v5704, 7
    %v5706 = vsub.s32 1, %v5705
    %v5707 = vrot.slane %v5665, %v5706
    %v5708 = vlaneseq
    %v5709 = vshrl.u32 %v5708, 7
    %v5710 = vsub.s32 2, %v5709
    %v5711 = vrot.slane %v5665, %v5710
    %v5712 = vlaneseq
    %v5713 = vshrl.u32 %v5712, 7
    %v5714 = vsub.s32 3, %v5713
    %v5715 = vrot.slane %v5665, %v5714
    %v5716 = vlaneseq
    %v5717 = vshrl.u32 %v5716, 7
    %v5718 = vsub.s32 4, %v5717
    %v5719 = vrot.slane %v5665, %v5718
    %v5720 = vlaneseq
    %v5721 = vshrl.u32 %v5720, 7
    %v5722 = vsub.s32 5, %v5721
    %v5723 = vrot.slane %v5665, %v5722
    %v5724 = vlaneseq
    %v5725 = vshrl.u32 %v5724, 7
    %v5726 = vsub.s32 6, %v5725
    %v5727 = vrot.slane %v5665, %v5726
    %v5728 = vlaneseq
    %v5729 = vshrl.u32 %v5728, 7
    %v5730 = vsub.s32 7, %v5729
    %v5731 = vrot.slane %v5665, %v5730
    %v5748 = vmul.f32 %v4797, %v5671
    %v5749 = vmul.f32 %v4799, %v5675
    %v5750 = vmul.f32 %v4920, %v5679
    %v5751 = vmul.f32 %v4922, %v5683
    %v5752 = vmul.f32 %v5043, %v5687
    %v5753 = vmul.f32 %v5045, %v5691
    %v5754 = vmul.f32 %v5166, %v5695
    %v5755 = vmul.f32 %v5168, %v5699
    %v5756 = vmul.f32 %v5289, %v5703
    %v5757 = vmul.f32 %v5291, %v5707
    %v5758 = vmul.f32 %v5412, %v5711
    %v5759 = vmul.f32 %v5414, %v5715
    %v5760 = vmul.f32 %v5535, %v5719
    %v5761 = vmul.f32 %v5537, %v5723
    %v5762 = vmul.f32 %v5658, %v5727
    %v5763 = vmul.f32 %v5660, %v5731
    %v5764 = vrcp.pop %v4797
    %v5765 = vrcp.pop %v4799
    %v5766 = vrcp.pop %v4920
    %v5767 = vrcp.pop %v4922
    %v5768 = vrcp.pop %v5043
    %v5769 = vrcp.pop %v5045
    %v5770 = vrcp.pop %v5166
    %v5771 = vrcp.pop %v5168
    %v5772 = vrcp.pop %v5289
    %v5773 = vrcp.pop %v5291
    %v5774 = vrcp.pop %v5412
    %v5775 = vrcp.pop %v5414
    %v5776 = vrcp.pop %v5535
    %v5777 = vrcp.pop %v5537
    %v5778 = vrcp.pop %v5658
    %v5779 = vrcp.pop %v5660
    %v5780 = vand.u32 2147483647, %v5748
    %vm5781 = vcmp.le.f32.partialorder %v5780, 0.7853982
    %vm5782 = vcmp.lt.s32.totalorder %v5748, 0
    %v5783 = vand.u32 %v5748, 2139095040
    %v5784 = vshrl.u32 %v5783, 23
    %v5785 = vsub.s32 %v5784, 127
    %v5786 = vand.u32 2147483647, %v5748
    %v5787 = vand.u32 %v5786, 8388607
    %v5788 = vor.u32 %v5787, 8388608
    %v5789 = vsub.s32 0, %v5788
    %v5790 = vadd.s32 %v5785, 1
    %vm5791 = vcmp.gt.s32.totalorder %v5790, 0
    %v5792 = vsel %vm5791, %v5790, 0
    %v5793 = vshrl.u32 %v5792, 5
    %v5794 = vand.u32 %v5792, 31
    %v5795 = vsub.s32 32, %v5794
    %v5796 = vshrl.u32 683565275, %v5795
    %v5797 = vshll.u32 683565275, %v5794
    %v5798 = vshrl.u32 2475754826, %v5795
    %v5799 = vor.u32 %v5797, %v5798
    %v5800 = vshll.u32 2475754826, %v5794
    %v5801 = vshrl.u32 2131351028, %v5795
    %v5802 = vor.u32 %v5800, %v5801
    %v5803 = vshll.u32 2131351028, %v5794
    %v5804 = vshrl.u32 2102212464, %v5795
    %v5805 = vor.u32 %v5803, %v5804
    %v5806 = vshll.u32 2102212464, %v5794
    %v5807 = vshrl.u32 920167782, %v5795
    %v5808 = vor.u32 %v5806, %v5807
    %v5809 = vshll.u32 920167782, %v5794
    %v5810 = vshrl.u32 1326507024, %v5795
    %v5811 = vor.u32 %v5809, %v5810
    %vm5812 = vcmp.lt.s32.totalorder %v5793, 1
    %vm5813 = vcmp.lt.s32.totalorder %v5793, 2
    %vm5814 = vcmp.lt.s32.totalorder %v5793, 3
    %vm5815 = vcmp.lt.s32.totalorder %v5793, 4
    %v5816 = vsel %vm5812, %v5796, %v5799
    %v5817 = vsel %vm5815, %v5805, 2102212464
    %v5818 = vsel %vm5814, %v5802, %v5817
    %v5819 = vsel %vm5813, %v5816, %v5818
    %v5820 = vsel %vm5812, %v5799, %v5802
    %v5821 = vsel %vm5815, %v5808, 920167782
    %v5822 = vsel %vm5814, %v5805, %v5821
    %v5823 = vsel %vm5813, %v5820, %v5822
    %v5824 = vsel %vm5812, %v5802, %v5805
    %v5825 = vsel %vm5815, %v5811, 1326507024
    %v5826 = vsel %vm5814, %v5808, %v5825
    %v5827 = vsel %vm5813, %v5824, %v5826
    %v5828 = vshll.u32 %v5788, 8
    %v5829 = vmul.u32.u64.compose %v5828, %v5827
    %v5830 = vextract.low.u32 %v5829
    %v5831 = vextract.high.u32 %v5829
    %v5832 = vmul.u32.u64.compose %v5828, %v5823
    %v5833 = vextract.low.u32 %v5832
    %v5834 = vextract.high.u32 %v5832
    %v5835 = vmul.u32 %v5828, %v5819
    %v5836 = vadd.s32 %v5831, %v5833
    %vm5837 = vc.u32 %v5831, %v5833
    %v5838 = vadd.s32 %v5834, 1
    %v5839 = vsel %vm5837, %v5838, %v5834
    %v5840 = vadd.s32 %v5835, %v5839
    %v5841 = vadd.s32 %v5840, 536870912
    %v5842 = vshrl.u32 %v5841, 30
    %v5843 = vshll.u32 %v5842, 30
    %v5844 = vsub.s32 %v5840, %v5843
    %vm5845 = vcmp.lt.s32.totalorder %v5844, 0
    %v5846 = vsub.s32 0, %v5844
    %v5847 = vsel %vm5845, %v5846, %v5844
    %v5848 = vclz %v5847
    %v5849 = vsub.s32 %v5848, 2
    %vm5850 = vcmp.gt.s32.totalorder 0, %v5849
    %v5851 = vsel %vm5850, 0, %v5849
    %v5852 = vsub.s32 32, %v5851
    %v5853 = vshll.u32 %v5844, %v5851
    %v5854 = vshrl.u32 %v5836, %v5852
    %v5855 = vor.u32 %v5853, %v5854
    %v5856 = vsub.s32 4294967266, %v5851
    %v5857 = vadd.s32 %v5856, 127
    %v5858 = vshll.u32 %v5857, 23
    %v5859 = vor.u32 4788187, %v5858
    %v5860 = vand.u32 2147483647, %v5859
    %v5862 = vcvt.s32.f32 %v5855
    %v5863 = vmul.f32 %v5862, %v5860
    %v5864 = vxor.u32 %v5863, 2147483648
    %v5865 = vsel %vm5782, %v5864, %v5863
    %v5866 = vsub.s32 4, %v5842
    %v5867 = vsel %vm5782, %v5866, %v5842
    %v5868 = vsel %vm5781, %v5748, %v5865
    %v5869 = vsel %vm5781, 0, %v5867
    %v5870 = vcosq.f32.pop %v5868
    %v5871 = vsinq.f32.pop %v5868
    %vm5872 = vweird.f32 %v5748
    %v5873 = vadd.s32 %v5869, 3
    %v5874 = vand.u32 %v5873, 3
    %vm5875 = vcmp.lt.s32.totalorder %v5874, 2
    %vm5876 = vcmp.eq.s32.totalorder %v5874, 0
    %v5877 = vxor.u32 %v5871, 2147483648
    %v5878 = vsel %vm5876, %v5870, %v5877
    %vm5879 = vcmp.eq.s32.totalorder %v5874, 2
    %v5880 = vxor.u32 %v5870, 2147483648
    %v5881 = vsel %vm5879, %v5880, %v5871
    %v5882 = vsel %vm5875, %v5878, %v5881
    %v5883 = vsel %vm5872, nan, %v5882
    %v5884 = vand.u32 2147483647, %v5749
    %vm5885 = vcmp.le.f32.partialorder %v5884, 0.7853982
    %vm5886 = vcmp.lt.s32.totalorder %v5749, 0
    %v5887 = vand.u32 %v5749, 2139095040
    %v5888 = vshrl.u32 %v5887, 23
    %v5889 = vsub.s32 %v5888, 127
    %v5890 = vand.u32 2147483647, %v5749
    %v5891 = vand.u32 %v5890, 8388607
    %v5892 = vor.u32 %v5891, 8388608
    %v5893 = vsub.s32 0, %v5892
    %v5894 = vadd.s32 %v5889, 1
    %vm5895 = vcmp.gt.s32.totalorder %v5894, 0
    %v5896 = vsel %vm5895, %v5894, 0
    %v5897 = vshrl.u32 %v5896, 5
    %v5898 = vand.u32 %v5896, 31
    %v5899 = vsub.s32 32, %v5898
    %v5900 = vshrl.u32 683565275, %v5899
    %v5901 = vshll.u32 683565275, %v5898
    %v5902 = vshrl.u32 2475754826, %v5899
    %v5903 = vor.u32 %v5901, %v5902
    %v5904 = vshll.u32 2475754826, %v5898
    %v5905 = vshrl.u32 2131351028, %v5899
    %v5906 = vor.u32 %v5904, %v5905
    %v5907 = vshll.u32 2131351028, %v5898
    %v5908 = vshrl.u32 2102212464, %v5899
    %v5909 = vor.u32 %v5907, %v5908
    %v5910 = vshll.u32 2102212464, %v5898
    %v5911 = vshrl.u32 920167782, %v5899
    %v5912 = vor.u32 %v5910, %v5911
    %v5913 = vshll.u32 920167782, %v5898
    %v5914 = vshrl.u32 1326507024, %v5899
    %v5915 = vor.u32 %v5913, %v5914
    %vm5916 = vcmp.lt.s32.totalorder %v5897, 1
    %vm5917 = vcmp.lt.s32.totalorder %v5897, 2
    %vm5918 = vcmp.lt.s32.totalorder %v5897, 3
    %vm5919 = vcmp.lt.s32.totalorder %v5897, 4
    %v5920 = vsel %vm5916, %v5900, %v5903
    %v5921 = vsel %vm5919, %v5909, 2102212464
    %v5922 = vsel %vm5918, %v5906, %v5921
    %v5923 = vsel %vm5917, %v5920, %v5922
    %v5924 = vsel %vm5916, %v5903, %v5906
    %v5925 = vsel %vm5919, %v5912, 920167782
    %v5926 = vsel %vm5918, %v5909, %v5925
    %v5927 = vsel %vm5917, %v5924, %v5926
    %v5928 = vsel %vm5916, %v5906, %v5909
    %v5929 = vsel %vm5919, %v5915, 1326507024
    %v5930 = vsel %vm5918, %v5912, %v5929
    %v5931 = vsel %vm5917, %v5928, %v5930
    %v5932 = vshll.u32 %v5892, 8
    %v5933 = vmul.u32.u64.compose %v5932, %v5931
    %v5934 = vextract.low.u32 %v5933
    %v5935 = vextract.high.u32 %v5933
    %v5936 = vmul.u32.u64.compose %v5932, %v5927
    %v5937 = vextract.low.u32 %v5936
    %v5938 = vextract.high.u32 %v5936
    %v5939 = vmul.u32 %v5932, %v5923
    %v5940 = vadd.s32 %v5935, %v5937
    %vm5941 = vc.u32 %v5935, %v5937
    %v5942 = vadd.s32 %v5938, 1
    %v5943 = vsel %vm5941, %v5942, %v5938
    %v5944 = vadd.s32 %v5939, %v5943
    %v5945 = vadd.s32 %v5944, 536870912
    %v5946 = vshrl.u32 %v5945, 30
    %v5947 = vshll.u32 %v5946, 30
    %v5948 = vsub.s32 %v5944, %v5947
    %vm5949 = vcmp.lt.s32.totalorder %v5948, 0
    %v5950 = vsub.s32 0, %v5948
    %v5951 = vsel %vm5949, %v5950, %v5948
    %v5952 = vclz %v5951
    %v5953 = vsub.s32 %v5952, 2
    %vm5954 = vcmp.gt.s32.totalorder 0, %v5953
    %v5955 = vsel %vm5954, 0, %v5953
    %v5956 = vsub.s32 32, %v5955
    %v5957 = vshll.u32 %v5948, %v5955
    %v5958 = vshrl.u32 %v5940, %v5956
    %v5959 = vor.u32 %v5957, %v5958
    %v5960 = vsub.s32 4294967266, %v5955
    %v5961 = vadd.s32 %v5960, 127
    %v5962 = vshll.u32 %v5961, 23
    %v5963 = vor.u32 4788187, %v5962
    %v5964 = vand.u32 2147483647, %v5963
    %v5966 = vcvt.s32.f32 %v5959
    %v5967 = vmul.f32 %v5966, %v5964
    %v5968 = vxor.u32 %v5967, 2147483648
    %v5969 = vsel %vm5886, %v5968, %v5967
    %v5970 = vsub.s32 4, %v5946
    %v5971 = vsel %vm5886, %v5970, %v5946
    %v5972 = vsel %vm5885, %v5749, %v5969
    %v5973 = vsel %vm5885, 0, %v5971
    %v5974 = vcosq.f32.pop %v5972
    %v5975 = vsinq.f32.pop %v5972
    %vm5976 = vweird.f32 %v5749
    %v5977 = vadd.s32 %v5973, 3
    %v5978 = vand.u32 %v5977, 3
    %vm5979 = vcmp.lt.s32.totalorder %v5978, 2
    %vm5980 = vcmp.eq.s32.totalorder %v5978, 0
    %v5981 = vxor.u32 %v5975, 2147483648
    %v5982 = vsel %vm5980, %v5974, %v5981
    %vm5983 = vcmp.eq.s32.totalorder %v5978, 2
    %v5984 = vxor.u32 %v5974, 2147483648
    %v5985 = vsel %vm5983, %v5984, %v5975
    %v5986 = vsel %vm5979, %v5982, %v5985
    %v5987 = vsel %vm5976, nan, %v5986
    %v5988 = vand.u32 2147483647, %v5750
    %vm5989 = vcmp.le.f32.partialorder %v5988, 0.7853982
    %vm5990 = vcmp.lt.s32.totalorder %v5750, 0
    %v5991 = vand.u32 %v5750, 2139095040
    %v5992 = vshrl.u32 %v5991, 23
    %v5993 = vsub.s32 %v5992, 127
    %v5994 = vand.u32 2147483647, %v5750
    %v5995 = vand.u32 %v5994, 8388607
    %v5996 = vor.u32 %v5995, 8388608
    %v5997 = vsub.s32 0, %v5996
    %v5998 = vadd.s32 %v5993, 1
    %vm5999 = vcmp.gt.s32.totalorder %v5998, 0
    %v6000 = vsel %vm5999, %v5998, 0
    %v6001 = vshrl.u32 %v6000, 5
    %v6002 = vand.u32 %v6000, 31
    %v6003 = vsub.s32 32, %v6002
    %v6004 = vshrl.u32 683565275, %v6003
    %v6005 = vshll.u32 683565275, %v6002
    %v6006 = vshrl.u32 2475754826, %v6003
    %v6007 = vor.u32 %v6005, %v6006
    %v6008 = vshll.u32 2475754826, %v6002
    %v6009 = vshrl.u32 2131351028, %v6003
    %v6010 = vor.u32 %v6008, %v6009
    %v6011 = vshll.u32 2131351028, %v6002
    %v6012 = vshrl.u32 2102212464, %v6003
    %v6013 = vor.u32 %v6011, %v6012
    %v6014 = vshll.u32 2102212464, %v6002
    %v6015 = vshrl.u32 920167782, %v6003
    %v6016 = vor.u32 %v6014, %v6015
    %v6017 = vshll.u32 920167782, %v6002
    %v6018 = vshrl.u32 1326507024, %v6003
    %v6019 = vor.u32 %v6017, %v6018
    %vm6020 = vcmp.lt.s32.totalorder %v6001, 1
    %vm6021 = vcmp.lt.s32.totalorder %v6001, 2
    %vm6022 = vcmp.lt.s32.totalorder %v6001, 3
    %vm6023 = vcmp.lt.s32.totalorder %v6001, 4
    %v6024 = vsel %vm6020, %v6004, %v6007
    %v6025 = vsel %vm6023, %v6013, 2102212464
    %v6026 = vsel %vm6022, %v6010, %v6025
    %v6027 = vsel %vm6021, %v6024, %v6026
    %v6028 = vsel %vm6020, %v6007, %v6010
    %v6029 = vsel %vm6023, %v6016, 920167782
    %v6030 = vsel %vm6022, %v6013, %v6029
    %v6031 = vsel %vm6021, %v6028, %v6030
    %v6032 = vsel %vm6020, %v6010, %v6013
    %v6033 = vsel %vm6023, %v6019, 1326507024
    %v6034 = vsel %vm6022, %v6016, %v6033
    %v6035 = vsel %vm6021, %v6032, %v6034
    %v6036 = vshll.u32 %v5996, 8
    %v6037 = vmul.u32.u64.compose %v6036, %v6035
    %v6038 = vextract.low.u32 %v6037
    %v6039 = vextract.high.u32 %v6037
    %v6040 = vmul.u32.u64.compose %v6036, %v6031
    %v6041 = vextract.low.u32 %v6040
    %v6042 = vextract.high.u32 %v6040
    %v6043 = vmul.u32 %v6036, %v6027
    %v6044 = vadd.s32 %v6039, %v6041
    %vm6045 = vc.u32 %v6039, %v6041
    %v6046 = vadd.s32 %v6042, 1
    %v6047 = vsel %vm6045, %v6046, %v6042
    %v6048 = vadd.s32 %v6043, %v6047
    %v6049 = vadd.s32 %v6048, 536870912
    %v6050 = vshrl.u32 %v6049, 30
    %v6051 = vshll.u32 %v6050, 30
    %v6052 = vsub.s32 %v6048, %v6051
    %vm6053 = vcmp.lt.s32.totalorder %v6052, 0
    %v6054 = vsub.s32 0, %v6052
    %v6055 = vsel %vm6053, %v6054, %v6052
    %v6056 = vclz %v6055
    %v6057 = vsub.s32 %v6056, 2
    %vm6058 = vcmp.gt.s32.totalorder 0, %v6057
    %v6059 = vsel %vm6058, 0, %v6057
    %v6060 = vsub.s32 32, %v6059
    %v6061 = vshll.u32 %v6052, %v6059
    %v6062 = vshrl.u32 %v6044, %v6060
    %v6063 = vor.u32 %v6061, %v6062
    %v6064 = vsub.s32 4294967266, %v6059
    %v6065 = vadd.s32 %v6064, 127
    %v6066 = vshll.u32 %v6065, 23
    %v6067 = vor.u32 4788187, %v6066
    %v6068 = vand.u32 2147483647, %v6067
    %v6070 = vcvt.s32.f32 %v6063
    %v6071 = vmul.f32 %v6070, %v6068
    %v6072 = vxor.u32 %v6071, 2147483648
    %v6073 = vsel %vm5990, %v6072, %v6071
    %v6074 = vsub.s32 4, %v6050
    %v6075 = vsel %vm5990, %v6074, %v6050
    %v6076 = vsel %vm5989, %v5750, %v6073
    %v6077 = vsel %vm5989, 0, %v6075
    %v6078 = vcosq.f32.pop %v6076
    %v6079 = vsinq.f32.pop %v6076
    %vm6080 = vweird.f32 %v5750
    %v6081 = vadd.s32 %v6077, 3
    %v6082 = vand.u32 %v6081, 3
    %vm6083 = vcmp.lt.s32.totalorder %v6082, 2
    %vm6084 = vcmp.eq.s32.totalorder %v6082, 0
    %v6085 = vxor.u32 %v6079, 2147483648
    %v6086 = vsel %vm6084, %v6078, %v6085
    %vm6087 = vcmp.eq.s32.totalorder %v6082, 2
    %v6088 = vxor.u32 %v6078, 2147483648
    %v6089 = vsel %vm6087, %v6088, %v6079
    %v6090 = vsel %vm6083, %v6086, %v6089
    %v6091 = vsel %vm6080, nan, %v6090
    %v6092 = vand.u32 2147483647, %v5751
    %vm6093 = vcmp.le.f32.partialorder %v6092, 0.7853982
    %vm6094 = vcmp.lt.s32.totalorder %v5751, 0
    %v6095 = vand.u32 %v5751, 2139095040
    %v6096 = vshrl.u32 %v6095, 23
    %v6097 = vsub.s32 %v6096, 127
    %v6098 = vand.u32 2147483647, %v5751
    %v6099 = vand.u32 %v6098, 8388607
    %v6100 = vor.u32 %v6099, 8388608
    %v6101 = vsub.s32 0, %v6100
    %v6102 = vadd.s32 %v6097, 1
    %vm6103 = vcmp.gt.s32.totalorder %v6102, 0
    %v6104 = vsel %vm6103, %v6102, 0
    %v6105 = vshrl.u32 %v6104, 5
    %v6106 = vand.u32 %v6104, 31
    %v6107 = vsub.s32 32, %v6106
    %v6108 = vshrl.u32 683565275, %v6107
    %v6109 = vshll.u32 683565275, %v6106
    %v6110 = vshrl.u32 2475754826, %v6107
    %v6111 = vor.u32 %v6109, %v6110
    %v6112 = vshll.u32 2475754826, %v6106
    %v6113 = vshrl.u32 2131351028, %v6107
    %v6114 = vor.u32 %v6112, %v6113
    %v6115 = vshll.u32 2131351028, %v6106
    %v6116 = vshrl.u32 2102212464, %v6107
    %v6117 = vor.u32 %v6115, %v6116
    %v6118 = vshll.u32 2102212464, %v6106
    %v6119 = vshrl.u32 920167782, %v6107
    %v6120 = vor.u32 %v6118, %v6119
    %v6121 = vshll.u32 920167782, %v6106
    %v6122 = vshrl.u32 1326507024, %v6107
    %v6123 = vor.u32 %v6121, %v6122
    %vm6124 = vcmp.lt.s32.totalorder %v6105, 1
    %vm6125 = vcmp.lt.s32.totalorder %v6105, 2
    %vm6126 = vcmp.lt.s32.totalorder %v6105, 3
    %vm6127 = vcmp.lt.s32.totalorder %v6105, 4
    %v6128 = vsel %vm6124, %v6108, %v6111
    %v6129 = vsel %vm6127, %v6117, 2102212464
    %v6130 = vsel %vm6126, %v6114, %v6129
    %v6131 = vsel %vm6125, %v6128, %v6130
    %v6132 = vsel %vm6124, %v6111, %v6114
    %v6133 = vsel %vm6127, %v6120, 920167782
    %v6134 = vsel %vm6126, %v6117, %v6133
    %v6135 = vsel %vm6125, %v6132, %v6134
    %v6136 = vsel %vm6124, %v6114, %v6117
    %v6137 = vsel %vm6127, %v6123, 1326507024
    %v6138 = vsel %vm6126, %v6120, %v6137
    %v6139 = vsel %vm6125, %v6136, %v6138
    %v6140 = vshll.u32 %v6100, 8
    %v6141 = vmul.u32.u64.compose %v6140, %v6139
    %v6142 = vextract.low.u32 %v6141
    %v6143 = vextract.high.u32 %v6141
    %v6144 = vmul.u32.u64.compose %v6140, %v6135
    %v6145 = vextract.low.u32 %v6144
    %v6146 = vextract.high.u32 %v6144
    %v6147 = vmul.u32 %v6140, %v6131
    %v6148 = vadd.s32 %v6143, %v6145
    %vm6149 = vc.u32 %v6143, %v6145
    %v6150 = vadd.s32 %v6146, 1
    %v6151 = vsel %vm6149, %v6150, %v6146
    %v6152 = vadd.s32 %v6147, %v6151
    %v6153 = vadd.s32 %v6152, 536870912
    %v6154 = vshrl.u32 %v6153, 30
    %v6155 = vshll.u32 %v6154, 30
    %v6156 = vsub.s32 %v6152, %v6155
    %vm6157 = vcmp.lt.s32.totalorder %v6156, 0
    %v6158 = vsub.s32 0, %v6156
    %v6159 = vsel %vm6157, %v6158, %v6156
    %v6160 = vclz %v6159
    %v6161 = vsub.s32 %v6160, 2
    %vm6162 = vcmp.gt.s32.totalorder 0, %v6161
    %v6163 = vsel %vm6162, 0, %v6161
    %v6164 = vsub.s32 32, %v6163
    %v6165 = vshll.u32 %v6156, %v6163
    %v6166 = vshrl.u32 %v6148, %v6164
    %v6167 = vor.u32 %v6165, %v6166
    %v6168 = vsub.s32 4294967266, %v6163
    %v6169 = vadd.s32 %v6168, 127
    %v6170 = vshll.u32 %v6169, 23
    %v6171 = vor.u32 4788187, %v6170
    %v6172 = vand.u32 2147483647, %v6171
    %v6174 = vcvt.s32.f32 %v6167
    %v6175 = vmul.f32 %v6174, %v6172
    %v6176 = vxor.u32 %v6175, 2147483648
    %v6177 = vsel %vm6094, %v6176, %v6175
    %v6178 = vsub.s32 4, %v6154
    %v6179 = vsel %vm6094, %v6178, %v6154
    %v6180 = vsel %vm6093, %v5751, %v6177
    %v6181 = vsel %vm6093, 0, %v6179
    %v6182 = vcosq.f32.pop %v6180
    %v6183 = vsinq.f32.pop %v6180
    %vm6184 = vweird.f32 %v5751
    %v6185 = vadd.s32 %v6181, 3
    %v6186 = vand.u32 %v6185, 3
    %vm6187 = vcmp.lt.s32.totalorder %v6186, 2
    %vm6188 = vcmp.eq.s32.totalorder %v6186, 0
    %v6189 = vxor.u32 %v6183, 2147483648
    %v6190 = vsel %vm6188, %v6182, %v6189
    %vm6191 = vcmp.eq.s32.totalorder %v6186, 2
    %v6192 = vxor.u32 %v6182, 2147483648
    %v6193 = vsel %vm6191, %v6192, %v6183
    %v6194 = vsel %vm6187, %v6190, %v6193
    %v6195 = vsel %vm6184, nan, %v6194
    %v6196 = vand.u32 2147483647, %v5752
    %vm6197 = vcmp.le.f32.partialorder %v6196, 0.7853982
    %vm6198 = vcmp.lt.s32.totalorder %v5752, 0
    %v6199 = vand.u32 %v5752, 2139095040
    %v6200 = vshrl.u32 %v6199, 23
    %v6201 = vsub.s32 %v6200, 127
    %v6202 = vand.u32 2147483647, %v5752
    %v6203 = vand.u32 %v6202, 8388607
    %v6204 = vor.u32 %v6203, 8388608
    %v6205 = vsub.s32 0, %v6204
    %v6206 = vadd.s32 %v6201, 1
    %vm6207 = vcmp.gt.s32.totalorder %v6206, 0
    %v6208 = vsel %vm6207, %v6206, 0
    %v6209 = vshrl.u32 %v6208, 5
    %v6210 = vand.u32 %v6208, 31
    %v6211 = vsub.s32 32, %v6210
    %v6212 = vshrl.u32 683565275, %v6211
    %v6213 = vshll.u32 683565275, %v6210
    %v6214 = vshrl.u32 2475754826, %v6211
    %v6215 = vor.u32 %v6213, %v6214
    %v6216 = vshll.u32 2475754826, %v6210
    %v6217 = vshrl.u32 2131351028, %v6211
    %v6218 = vor.u32 %v6216, %v6217
    %v6219 = vshll.u32 2131351028, %v6210
    %v6220 = vshrl.u32 2102212464, %v6211
    %v6221 = vor.u32 %v6219, %v6220
    %v6222 = vshll.u32 2102212464, %v6210
    %v6223 = vshrl.u32 920167782, %v6211
    %v6224 = vor.u32 %v6222, %v6223
    %v6225 = vshll.u32 920167782, %v6210
    %v6226 = vshrl.u32 1326507024, %v6211
    %v6227 = vor.u32 %v6225, %v6226
    %vm6228 = vcmp.lt.s32.totalorder %v6209, 1
    %vm6229 = vcmp.lt.s32.totalorder %v6209, 2
    %vm6230 = vcmp.lt.s32.totalorder %v6209, 3
    %vm6231 = vcmp.lt.s32.totalorder %v6209, 4
    %v6232 = vsel %vm6228, %v6212, %v6215
    %v6233 = vsel %vm6231, %v6221, 2102212464
    %v6234 = vsel %vm6230, %v6218, %v6233
    %v6235 = vsel %vm6229, %v6232, %v6234
    %v6236 = vsel %vm6228, %v6215, %v6218
    %v6237 = vsel %vm6231, %v6224, 920167782
    %v6238 = vsel %vm6230, %v6221, %v6237
    %v6239 = vsel %vm6229, %v6236, %v6238
    %v6240 = vsel %vm6228, %v6218, %v6221
    %v6241 = vsel %vm6231, %v6227, 1326507024
    %v6242 = vsel %vm6230, %v6224, %v6241
    %v6243 = vsel %vm6229, %v6240, %v6242
    %v6244 = vshll.u32 %v6204, 8
    %v6245 = vmul.u32.u64.compose %v6244, %v6243
    %v6246 = vextract.low.u32 %v6245
    %v6247 = vextract.high.u32 %v6245
    %v6248 = vmul.u32.u64.compose %v6244, %v6239
    %v6249 = vextract.low.u32 %v6248
    %v6250 = vextract.high.u32 %v6248
    %v6251 = vmul.u32 %v6244, %v6235
    %v6252 = vadd.s32 %v6247, %v6249
    %vm6253 = vc.u32 %v6247, %v6249
    %v6254 = vadd.s32 %v6250, 1
    %v6255 = vsel %vm6253, %v6254, %v6250
    %v6256 = vadd.s32 %v6251, %v6255
    %v6257 = vadd.s32 %v6256, 536870912
    %v6258 = vshrl.u32 %v6257, 30
    %v6259 = vshll.u32 %v6258, 30
    %v6260 = vsub.s32 %v6256, %v6259
    %vm6261 = vcmp.lt.s32.totalorder %v6260, 0
    %v6262 = vsub.s32 0, %v6260
    %v6263 = vsel %vm6261, %v6262, %v6260
    %v6264 = vclz %v6263
    %v6265 = vsub.s32 %v6264, 2
    %vm6266 = vcmp.gt.s32.totalorder 0, %v6265
    %v6267 = vsel %vm6266, 0, %v6265
    %v6268 = vsub.s32 32, %v6267
    %v6269 = vshll.u32 %v6260, %v6267
    %v6270 = vshrl.u32 %v6252, %v6268
    %v6271 = vor.u32 %v6269, %v6270
    %v6272 = vsub.s32 4294967266, %v6267
    %v6273 = vadd.s32 %v6272, 127
    %v6274 = vshll.u32 %v6273, 23
    %v6275 = vor.u32 4788187, %v6274
    %v6276 = vand.u32 2147483647, %v6275
    %v6278 = vcvt.s32.f32 %v6271
    %v6279 = vmul.f32 %v6278, %v6276
    %v6280 = vxor.u32 %v6279, 2147483648
    %v6281 = vsel %vm6198, %v6280, %v6279
    %v6282 = vsub.s32 4, %v6258
    %v6283 = vsel %vm6198, %v6282, %v6258
    %v6284 = vsel %vm6197, %v5752, %v6281
    %v6285 = vsel %vm6197, 0, %v6283
    %v6286 = vcosq.f32.pop %v6284
    %v6287 = vsinq.f32.pop %v6284
    %vm6288 = vweird.f32 %v5752
    %v6289 = vadd.s32 %v6285, 3
    %v6290 = vand.u32 %v6289, 3
    %vm6291 = vcmp.lt.s32.totalorder %v6290, 2
    %vm6292 = vcmp.eq.s32.totalorder %v6290, 0
    %v6293 = vxor.u32 %v6287, 2147483648
    %v6294 = vsel %vm6292, %v6286, %v6293
    %vm6295 = vcmp.eq.s32.totalorder %v6290, 2
    %v6296 = vxor.u32 %v6286, 2147483648
    %v6297 = vsel %vm6295, %v6296, %v6287
    %v6298 = vsel %vm6291, %v6294, %v6297
    %v6299 = vsel %vm6288, nan, %v6298
    %v6300 = vand.u32 2147483647, %v5753
    %vm6301 = vcmp.le.f32.partialorder %v6300, 0.7853982
    %vm6302 = vcmp.lt.s32.totalorder %v5753, 0
    %v6303 = vand.u32 %v5753, 2139095040
    %v6304 = vshrl.u32 %v6303, 23
    %v6305 = vsub.s32 %v6304, 127
    %v6306 = vand.u32 2147483647, %v5753
    %v6307 = vand.u32 %v6306, 8388607
    %v6308 = vor.u32 %v6307, 8388608
    %v6309 = vsub.s32 0, %v6308
    %v6310 = vadd.s32 %v6305, 1
    %vm6311 = vcmp.gt.s32.totalorder %v6310, 0
    %v6312 = vsel %vm6311, %v6310, 0
    %v6313 = vshrl.u32 %v6312, 5
    %v6314 = vand.u32 %v6312, 31
    %v6315 = vsub.s32 32, %v6314
    %v6316 = vshrl.u32 683565275, %v6315
    %v6317 = vshll.u32 683565275, %v6314
    %v6318 = vshrl.u32 2475754826, %v6315
    %v6319 = vor.u32 %v6317, %v6318
    %v6320 = vshll.u32 2475754826, %v6314
    %v6321 = vshrl.u32 2131351028, %v6315
    %v6322 = vor.u32 %v6320, %v6321
    %v6323 = vshll.u32 2131351028, %v6314
    %v6324 = vshrl.u32 2102212464, %v6315
    %v6325 = vor.u32 %v6323, %v6324
    %v6326 = vshll.u32 2102212464, %v6314
    %v6327 = vshrl.u32 920167782, %v6315
    %v6328 = vor.u32 %v6326, %v6327
    %v6329 = vshll.u32 920167782, %v6314
    %v6330 = vshrl.u32 1326507024, %v6315
    %v6331 = vor.u32 %v6329, %v6330
    %vm6332 = vcmp.lt.s32.totalorder %v6313, 1
    %vm6333 = vcmp.lt.s32.totalorder %v6313, 2
    %vm6334 = vcmp.lt.s32.totalorder %v6313, 3
    %vm6335 = vcmp.lt.s32.totalorder %v6313, 4
    %v6336 = vsel %vm6332, %v6316, %v6319
    %v6337 = vsel %vm6335, %v6325, 2102212464
    %v6338 = vsel %vm6334, %v6322, %v6337
    %v6339 = vsel %vm6333, %v6336, %v6338
    %v6340 = vsel %vm6332, %v6319, %v6322
    %v6341 = vsel %vm6335, %v6328, 920167782
    %v6342 = vsel %vm6334, %v6325, %v6341
    %v6343 = vsel %vm6333, %v6340, %v6342
    %v6344 = vsel %vm6332, %v6322, %v6325
    %v6345 = vsel %vm6335, %v6331, 1326507024
    %v6346 = vsel %vm6334, %v6328, %v6345
    %v6347 = vsel %vm6333, %v6344, %v6346
    %v6348 = vshll.u32 %v6308, 8
    %v6349 = vmul.u32.u64.compose %v6348, %v6347
    %v6350 = vextract.low.u32 %v6349
    %v6351 = vextract.high.u32 %v6349
    %v6352 = vmul.u32.u64.compose %v6348, %v6343
    %v6353 = vextract.low.u32 %v6352
    %v6354 = vextract.high.u32 %v6352
    %v6355 = vmul.u32 %v6348, %v6339
    %v6356 = vadd.s32 %v6351, %v6353
    %vm6357 = vc.u32 %v6351, %v6353
    %v6358 = vadd.s32 %v6354, 1
    %v6359 = vsel %vm6357, %v6358, %v6354
    %v6360 = vadd.s32 %v6355, %v6359
    %v6361 = vadd.s32 %v6360, 536870912
    %v6362 = vshrl.u32 %v6361, 30
    %v6363 = vshll.u32 %v6362, 30
    %v6364 = vsub.s32 %v6360, %v6363
    %vm6365 = vcmp.lt.s32.totalorder %v6364, 0
    %v6366 = vsub.s32 0, %v6364
    %v6367 = vsel %vm6365, %v6366, %v6364
    %v6368 = vclz %v6367
    %v6369 = vsub.s32 %v6368, 2
    %vm6370 = vcmp.gt.s32.totalorder 0, %v6369
    %v6371 = vsel %vm6370, 0, %v6369
    %v6372 = vsub.s32 32, %v6371
    %v6373 = vshll.u32 %v6364, %v6371
    %v6374 = vshrl.u32 %v6356, %v6372
    %v6375 = vor.u32 %v6373, %v6374
    %v6376 = vsub.s32 4294967266, %v6371
    %v6377 = vadd.s32 %v6376, 127
    %v6378 = vshll.u32 %v6377, 23
    %v6379 = vor.u32 4788187, %v6378
    %v6380 = vand.u32 2147483647, %v6379
    %v6382 = vcvt.s32.f32 %v6375
    %v6383 = vmul.f32 %v6382, %v6380
    %v6384 = vxor.u32 %v6383, 2147483648
    %v6385 = vsel %vm6302, %v6384, %v6383
    %v6386 = vsub.s32 4, %v6362
    %v6387 = vsel %vm6302, %v6386, %v6362
    %v6388 = vsel %vm6301, %v5753, %v6385
    %v6389 = vsel %vm6301, 0, %v6387
    %v6390 = vcosq.f32.pop %v6388
    %v6391 = vsinq.f32.pop %v6388
    %vm6392 = vweird.f32 %v5753
    %v6393 = vadd.s32 %v6389, 3
    %v6394 = vand.u32 %v6393, 3
    %vm6395 = vcmp.lt.s32.totalorder %v6394, 2
    %vm6396 = vcmp.eq.s32.totalorder %v6394, 0
    %v6397 = vxor.u32 %v6391, 2147483648
    %v6398 = vsel %vm6396, %v6390, %v6397
    %vm6399 = vcmp.eq.s32.totalorder %v6394, 2
    %v6400 = vxor.u32 %v6390, 2147483648
    %v6401 = vsel %vm6399, %v6400, %v6391
    %v6402 = vsel %vm6395, %v6398, %v6401
    %v6403 = vsel %vm6392, nan, %v6402
    %v6404 = vand.u32 2147483647, %v5754
    %vm6405 = vcmp.le.f32.partialorder %v6404, 0.7853982
    %vm6406 = vcmp.lt.s32.totalorder %v5754, 0
    %v6407 = vand.u32 %v5754, 2139095040
    %v6408 = vshrl.u32 %v6407, 23
    %v6409 = vsub.s32 %v6408, 127
    %v6410 = vand.u32 2147483647, %v5754
    %v6411 = vand.u32 %v6410, 8388607
    %v6412 = vor.u32 %v6411, 8388608
    %v6413 = vsub.s32 0, %v6412
    %v6414 = vadd.s32 %v6409, 1
    %vm6415 = vcmp.gt.s32.totalorder %v6414, 0
    %v6416 = vsel %vm6415, %v6414, 0
    %v6417 = vshrl.u32 %v6416, 5
    %v6418 = vand.u32 %v6416, 31
    %v6419 = vsub.s32 32, %v6418
    %v6420 = vshrl.u32 683565275, %v6419
    %v6421 = vshll.u32 683565275, %v6418
    %v6422 = vshrl.u32 2475754826, %v6419
    %v6423 = vor.u32 %v6421, %v6422
    %v6424 = vshll.u32 2475754826, %v6418
    %v6425 = vshrl.u32 2131351028, %v6419
    %v6426 = vor.u32 %v6424, %v6425
    %v6427 = vshll.u32 2131351028, %v6418
    %v6428 = vshrl.u32 2102212464, %v6419
    %v6429 = vor.u32 %v6427, %v6428
    %v6430 = vshll.u32 2102212464, %v6418
    %v6431 = vshrl.u32 920167782, %v6419
    %v6432 = vor.u32 %v6430, %v6431
    %v6433 = vshll.u32 920167782, %v6418
    %v6434 = vshrl.u32 1326507024, %v6419
    %v6435 = vor.u32 %v6433, %v6434
    %vm6436 = vcmp.lt.s32.totalorder %v6417, 1
    %vm6437 = vcmp.lt.s32.totalorder %v6417, 2
    %vm6438 = vcmp.lt.s32.totalorder %v6417, 3
    %vm6439 = vcmp.lt.s32.totalorder %v6417, 4
    %v6440 = vsel %vm6436, %v6420, %v6423
    %v6441 = vsel %vm6439, %v6429, 2102212464
    %v6442 = vsel %vm6438, %v6426, %v6441
    %v6443 = vsel %vm6437, %v6440, %v6442
    %v6444 = vsel %vm6436, %v6423, %v6426
    %v6445 = vsel %vm6439, %v6432, 920167782
    %v6446 = vsel %vm6438, %v6429, %v6445
    %v6447 = vsel %vm6437, %v6444, %v6446
    %v6448 = vsel %vm6436, %v6426, %v6429
    %v6449 = vsel %vm6439, %v6435, 1326507024
    %v6450 = vsel %vm6438, %v6432, %v6449
    %v6451 = vsel %vm6437, %v6448, %v6450
    %v6452 = vshll.u32 %v6412, 8
    %v6453 = vmul.u32.u64.compose %v6452, %v6451
    %v6454 = vextract.low.u32 %v6453
    %v6455 = vextract.high.u32 %v6453
    %v6456 = vmul.u32.u64.compose %v6452, %v6447
    %v6457 = vextract.low.u32 %v6456
    %v6458 = vextract.high.u32 %v6456
    %v6459 = vmul.u32 %v6452, %v6443
    %v6460 = vadd.s32 %v6455, %v6457
    %vm6461 = vc.u32 %v6455, %v6457
    %v6462 = vadd.s32 %v6458, 1
    %v6463 = vsel %vm6461, %v6462, %v6458
    %v6464 = vadd.s32 %v6459, %v6463
    %v6465 = vadd.s32 %v6464, 536870912
    %v6466 = vshrl.u32 %v6465, 30
    %v6467 = vshll.u32 %v6466, 30
    %v6468 = vsub.s32 %v6464, %v6467
    %vm6469 = vcmp.lt.s32.totalorder %v6468, 0
    %v6470 = vsub.s32 0, %v6468
    %v6471 = vsel %vm6469, %v6470, %v6468
    %v6472 = vclz %v6471
    %v6473 = vsub.s32 %v6472, 2
    %vm6474 = vcmp.gt.s32.totalorder 0, %v6473
    %v6475 = vsel %vm6474, 0, %v6473
    %v6476 = vsub.s32 32, %v6475
    %v6477 = vshll.u32 %v6468, %v6475
    %v6478 = vshrl.u32 %v6460, %v6476
    %v6479 = vor.u32 %v6477, %v6478
    %v6480 = vsub.s32 4294967266, %v6475
    %v6481 = vadd.s32 %v6480, 127
    %v6482 = vshll.u32 %v6481, 23
    %v6483 = vor.u32 4788187, %v6482
    %v6484 = vand.u32 2147483647, %v6483
    %v6486 = vcvt.s32.f32 %v6479
    %v6487 = vmul.f32 %v6486, %v6484
    %v6488 = vxor.u32 %v6487, 2147483648
    %v6489 = vsel %vm6406, %v6488, %v6487
    %v6490 = vsub.s32 4, %v6466
    %v6491 = vsel %vm6406, %v6490, %v6466
    %v6492 = vsel %vm6405, %v5754, %v6489
    %v6493 = vsel %vm6405, 0, %v6491
    %v6494 = vcosq.f32.pop %v6492
    %v6495 = vsinq.f32.pop %v6492
    %vm6496 = vweird.f32 %v5754
    %v6497 = vadd.s32 %v6493, 3
    %v6498 = vand.u32 %v6497, 3
    %vm6499 = vcmp.lt.s32.totalorder %v6498, 2
    %vm6500 = vcmp.eq.s32.totalorder %v6498, 0
    %v6501 = vxor.u32 %v6495, 2147483648
    %v6502 = vsel %vm6500, %v6494, %v6501
    %vm6503 = vcmp.eq.s32.totalorder %v6498, 2
    %v6504 = vxor.u32 %v6494, 2147483648
    %v6505 = vsel %vm6503, %v6504, %v6495
    %v6506 = vsel %vm6499, %v6502, %v6505
    %v6507 = vsel %vm6496, nan, %v6506
    %v6508 = vand.u32 2147483647, %v5755
    %vm6509 = vcmp.le.f32.partialorder %v6508, 0.7853982
    %vm6510 = vcmp.lt.s32.totalorder %v5755, 0
    %v6511 = vand.u32 %v5755, 2139095040
    %v6512 = vshrl.u32 %v6511, 23
    %v6513 = vsub.s32 %v6512, 127
    %v6514 = vand.u32 2147483647, %v5755
    %v6515 = vand.u32 %v6514, 8388607
    %v6516 = vor.u32 %v6515, 8388608
    %v6517 = vsub.s32 0, %v6516
    %v6518 = vadd.s32 %v6513, 1
    %vm6519 = vcmp.gt.s32.totalorder %v6518, 0
    %v6520 = vsel %vm6519, %v6518, 0
    %v6521 = vshrl.u32 %v6520, 5
    %v6522 = vand.u32 %v6520, 31
    %v6523 = vsub.s32 32, %v6522
    %v6524 = vshrl.u32 683565275, %v6523
    %v6525 = vshll.u32 683565275, %v6522
    %v6526 = vshrl.u32 2475754826, %v6523
    %v6527 = vor.u32 %v6525, %v6526
    %v6528 = vshll.u32 2475754826, %v6522
    %v6529 = vshrl.u32 2131351028, %v6523
    %v6530 = vor.u32 %v6528, %v6529
    %v6531 = vshll.u32 2131351028, %v6522
    %v6532 = vshrl.u32 2102212464, %v6523
    %v6533 = vor.u32 %v6531, %v6532
    %v6534 = vshll.u32 2102212464, %v6522
    %v6535 = vshrl.u32 920167782, %v6523
    %v6536 = vor.u32 %v6534, %v6535
    %v6537 = vshll.u32 920167782, %v6522
    %v6538 = vshrl.u32 1326507024, %v6523
    %v6539 = vor.u32 %v6537, %v6538
    %vm6540 = vcmp.lt.s32.totalorder %v6521, 1
    %vm6541 = vcmp.lt.s32.totalorder %v6521, 2
    %vm6542 = vcmp.lt.s32.totalorder %v6521, 3
    %vm6543 = vcmp.lt.s32.totalorder %v6521, 4
    %v6544 = vsel %vm6540, %v6524, %v6527
    %v6545 = vsel %vm6543, %v6533, 2102212464
    %v6546 = vsel %vm6542, %v6530, %v6545
    %v6547 = vsel %vm6541, %v6544, %v6546
    %v6548 = vsel %vm6540, %v6527, %v6530
    %v6549 = vsel %vm6543, %v6536, 920167782
    %v6550 = vsel %vm6542, %v6533, %v6549
    %v6551 = vsel %vm6541, %v6548, %v6550
    %v6552 = vsel %vm6540, %v6530, %v6533
    %v6553 = vsel %vm6543, %v6539, 1326507024
    %v6554 = vsel %vm6542, %v6536, %v6553
    %v6555 = vsel %vm6541, %v6552, %v6554
    %v6556 = vshll.u32 %v6516, 8
    %v6557 = vmul.u32.u64.compose %v6556, %v6555
    %v6558 = vextract.low.u32 %v6557
    %v6559 = vextract.high.u32 %v6557
    %v6560 = vmul.u32.u64.compose %v6556, %v6551
    %v6561 = vextract.low.u32 %v6560
    %v6562 = vextract.high.u32 %v6560
    %v6563 = vmul.u32 %v6556, %v6547
    %v6564 = vadd.s32 %v6559, %v6561
    %vm6565 = vc.u32 %v6559, %v6561
    %v6566 = vadd.s32 %v6562, 1
    %v6567 = vsel %vm6565, %v6566, %v6562
    %v6568 = vadd.s32 %v6563, %v6567
    %v6569 = vadd.s32 %v6568, 536870912
    %v6570 = vshrl.u32 %v6569, 30
    %v6571 = vshll.u32 %v6570, 30
    %v6572 = vsub.s32 %v6568, %v6571
    %vm6573 = vcmp.lt.s32.totalorder %v6572, 0
    %v6574 = vsub.s32 0, %v6572
    %v6575 = vsel %vm6573, %v6574, %v6572
    %v6576 = vclz %v6575
    %v6577 = vsub.s32 %v6576, 2
    %vm6578 = vcmp.gt.s32.totalorder 0, %v6577
    %v6579 = vsel %vm6578, 0, %v6577
    %v6580 = vsub.s32 32, %v6579
    %v6581 = vshll.u32 %v6572, %v6579
    %v6582 = vshrl.u32 %v6564, %v6580
    %v6583 = vor.u32 %v6581, %v6582
    %v6584 = vsub.s32 4294967266, %v6579
    %v6585 = vadd.s32 %v6584, 127
    %v6586 = vshll.u32 %v6585, 23
    %v6587 = vor.u32 4788187, %v6586
    %v6588 = vand.u32 2147483647, %v6587
    %v6590 = vcvt.s32.f32 %v6583
    %v6591 = vmul.f32 %v6590, %v6588
    %v6592 = vxor.u32 %v6591, 2147483648
    %v6593 = vsel %vm6510, %v6592, %v6591
    %v6594 = vsub.s32 4, %v6570
    %v6595 = vsel %vm6510, %v6594, %v6570
    %v6596 = vsel %vm6509, %v5755, %v6593
    %v6597 = vsel %vm6509, 0, %v6595
    %v6598 = vcosq.f32.pop %v6596
    %v6599 = vsinq.f32.pop %v6596
    %vm6600 = vweird.f32 %v5755
    %v6601 = vadd.s32 %v6597, 3
    %v6602 = vand.u32 %v6601, 3
    %vm6603 = vcmp.lt.s32.totalorder %v6602, 2
    %vm6604 = vcmp.eq.s32.totalorder %v6602, 0
    %v6605 = vxor.u32 %v6599, 2147483648
    %v6606 = vsel %vm6604, %v6598, %v6605
    %vm6607 = vcmp.eq.s32.totalorder %v6602, 2
    %v6608 = vxor.u32 %v6598, 2147483648
    %v6609 = vsel %vm6607, %v6608, %v6599
    %v6610 = vsel %vm6603, %v6606, %v6609
    %v6611 = vsel %vm6600, nan, %v6610
    %v6612 = vand.u32 2147483647, %v5756
    %vm6613 = vcmp.le.f32.partialorder %v6612, 0.7853982
    %vm6614 = vcmp.lt.s32.totalorder %v5756, 0
    %v6615 = vand.u32 %v5756, 2139095040
    %v6616 = vshrl.u32 %v6615, 23
    %v6617 = vsub.s32 %v6616, 127
    %v6618 = vand.u32 2147483647, %v5756
    %v6619 = vand.u32 %v6618, 8388607
    %v6620 = vor.u32 %v6619, 8388608
    %v6621 = vsub.s32 0, %v6620
    %v6622 = vadd.s32 %v6617, 1
    %vm6623 = vcmp.gt.s32.totalorder %v6622, 0
    %v6624 = vsel %vm6623, %v6622, 0
    %v6625 = vshrl.u32 %v6624, 5
    %v6626 = vand.u32 %v6624, 31
    %v6627 = vsub.s32 32, %v6626
    %v6628 = vshrl.u32 683565275, %v6627
    %v6629 = vshll.u32 683565275, %v6626
    %v6630 = vshrl.u32 2475754826, %v6627
    %v6631 = vor.u32 %v6629, %v6630
    %v6632 = vshll.u32 2475754826, %v6626
    %v6633 = vshrl.u32 2131351028, %v6627
    %v6634 = vor.u32 %v6632, %v6633
    %v6635 = vshll.u32 2131351028, %v6626
    %v6636 = vshrl.u32 2102212464, %v6627
    %v6637 = vor.u32 %v6635, %v6636
    %v6638 = vshll.u32 2102212464, %v6626
    %v6639 = vshrl.u32 920167782, %v6627
    %v6640 = vor.u32 %v6638, %v6639
    %v6641 = vshll.u32 920167782, %v6626
    %v6642 = vshrl.u32 1326507024, %v6627
    %v6643 = vor.u32 %v6641, %v6642
    %vm6644 = vcmp.lt.s32.totalorder %v6625, 1
    %vm6645 = vcmp.lt.s32.totalorder %v6625, 2
    %vm6646 = vcmp.lt.s32.totalorder %v6625, 3
    %vm6647 = vcmp.lt.s32.totalorder %v6625, 4
    %v6648 = vsel %vm6644, %v6628, %v6631
    %v6649 = vsel %vm6647, %v6637, 2102212464
    %v6650 = vsel %vm6646, %v6634, %v6649
    %v6651 = vsel %vm6645, %v6648, %v6650
    %v6652 = vsel %vm6644, %v6631, %v6634
    %v6653 = vsel %vm6647, %v6640, 920167782
    %v6654 = vsel %vm6646, %v6637, %v6653
    %v6655 = vsel %vm6645, %v6652, %v6654
    %v6656 = vsel %vm6644, %v6634, %v6637
    %v6657 = vsel %vm6647, %v6643, 1326507024
    %v6658 = vsel %vm6646, %v6640, %v6657
    %v6659 = vsel %vm6645, %v6656, %v6658
    %v6660 = vshll.u32 %v6620, 8
    %v6661 = vmul.u32.u64.compose %v6660, %v6659
    %v6662 = vextract.low.u32 %v6661
    %v6663 = vextract.high.u32 %v6661
    %v6664 = vmul.u32.u64.compose %v6660, %v6655
    %v6665 = vextract.low.u32 %v6664
    %v6666 = vextract.high.u32 %v6664
    %v6667 = vmul.u32 %v6660, %v6651
    %v6668 = vadd.s32 %v6663, %v6665
    %vm6669 = vc.u32 %v6663, %v6665
    %v6670 = vadd.s32 %v6666, 1
    %v6671 = vsel %vm6669, %v6670, %v6666
    %v6672 = vadd.s32 %v6667, %v6671
    %v6673 = vadd.s32 %v6672, 536870912
    %v6674 = vshrl.u32 %v6673, 30
    %v6675 = vshll.u32 %v6674, 30
    %v6676 = vsub.s32 %v6672, %v6675
    %vm6677 = vcmp.lt.s32.totalorder %v6676, 0
    %v6678 = vsub.s32 0, %v6676
    %v6679 = vsel %vm6677, %v6678, %v6676
    %v6680 = vclz %v6679
    %v6681 = vsub.s32 %v6680, 2
    %vm6682 = vcmp.gt.s32.totalorder 0, %v6681
    %v6683 = vsel %vm6682, 0, %v6681
    %v6684 = vsub.s32 32, %v6683
    %v6685 = vshll.u32 %v6676, %v6683
    %v6686 = vshrl.u32 %v6668, %v6684
    %v6687 = vor.u32 %v6685, %v6686
    %v6688 = vsub.s32 4294967266, %v6683
    %v6689 = vadd.s32 %v6688, 127
    %v6690 = vshll.u32 %v6689, 23
    %v6691 = vor.u32 4788187, %v6690
    %v6692 = vand.u32 2147483647, %v6691
    %v6694 = vcvt.s32.f32 %v6687
    %v6695 = vmul.f32 %v6694, %v6692
    %v6696 = vxor.u32 %v6695, 2147483648
    %v6697 = vsel %vm6614, %v6696, %v6695
    %v6698 = vsub.s32 4, %v6674
    %v6699 = vsel %vm6614, %v6698, %v6674
    %v6700 = vsel %vm6613, %v5756, %v6697
    %v6701 = vsel %vm6613, 0, %v6699
    %v6702 = vcosq.f32.pop %v6700
    %v6703 = vsinq.f32.pop %v6700
    %vm6704 = vweird.f32 %v5756
    %v6705 = vadd.s32 %v6701, 3
    %v6706 = vand.u32 %v6705, 3
    %vm6707 = vcmp.lt.s32.totalorder %v6706, 2
    %vm6708 = vcmp.eq.s32.totalorder %v6706, 0
    %v6709 = vxor.u32 %v6703, 2147483648
    %v6710 = vsel %vm6708, %v6702, %v6709
    %vm6711 = vcmp.eq.s32.totalorder %v6706, 2
    %v6712 = vxor.u32 %v6702, 2147483648
    %v6713 = vsel %vm6711, %v6712, %v6703
    %v6714 = vsel %vm6707, %v6710, %v6713
    %v6715 = vsel %vm6704, nan, %v6714
    %v6716 = vand.u32 2147483647, %v5757
    %vm6717 = vcmp.le.f32.partialorder %v6716, 0.7853982
    %vm6718 = vcmp.lt.s32.totalorder %v5757, 0
    %v6719 = vand.u32 %v5757, 2139095040
    %v6720 = vshrl.u32 %v6719, 23
    %v6721 = vsub.s32 %v6720, 127
    %v6722 = vand.u32 2147483647, %v5757
    %v6723 = vand.u32 %v6722, 8388607
    %v6724 = vor.u32 %v6723, 8388608
    %v6725 = vsub.s32 0, %v6724
    %v6726 = vadd.s32 %v6721, 1
    %vm6727 = vcmp.gt.s32.totalorder %v6726, 0
    %v6728 = vsel %vm6727, %v6726, 0
    %v6729 = vshrl.u32 %v6728, 5
    %v6730 = vand.u32 %v6728, 31
    %v6731 = vsub.s32 32, %v6730
    %v6732 = vshrl.u32 683565275, %v6731
    %v6733 = vshll.u32 683565275, %v6730
    %v6734 = vshrl.u32 2475754826, %v6731
    %v6735 = vor.u32 %v6733, %v6734
    %v6736 = vshll.u32 2475754826, %v6730
    %v6737 = vshrl.u32 2131351028, %v6731
    %v6738 = vor.u32 %v6736, %v6737
    %v6739 = vshll.u32 2131351028, %v6730
    %v6740 = vshrl.u32 2102212464, %v6731
    %v6741 = vor.u32 %v6739, %v6740
    %v6742 = vshll.u32 2102212464, %v6730
    %v6743 = vshrl.u32 920167782, %v6731
    %v6744 = vor.u32 %v6742, %v6743
    %v6745 = vshll.u32 920167782, %v6730
    %v6746 = vshrl.u32 1326507024, %v6731
    %v6747 = vor.u32 %v6745, %v6746
    %vm6748 = vcmp.lt.s32.totalorder %v6729, 1
    %vm6749 = vcmp.lt.s32.totalorder %v6729, 2
    %vm6750 = vcmp.lt.s32.totalorder %v6729, 3
    %vm6751 = vcmp.lt.s32.totalorder %v6729, 4
    %v6752 = vsel %vm6748, %v6732, %v6735
    %v6753 = vsel %vm6751, %v6741, 2102212464
    %v6754 = vsel %vm6750, %v6738, %v6753
    %v6755 = vsel %vm6749, %v6752, %v6754
    %v6756 = vsel %vm6748, %v6735, %v6738
    %v6757 = vsel %vm6751, %v6744, 920167782
    %v6758 = vsel %vm6750, %v6741, %v6757
    %v6759 = vsel %vm6749, %v6756, %v6758
    %v6760 = vsel %vm6748, %v6738, %v6741
    %v6761 = vsel %vm6751, %v6747, 1326507024
    %v6762 = vsel %vm6750, %v6744, %v6761
    %v6763 = vsel %vm6749, %v6760, %v6762
    %v6764 = vshll.u32 %v6724, 8
    %v6765 = vmul.u32.u64.compose %v6764, %v6763
    %v6766 = vextract.low.u32 %v6765
    %v6767 = vextract.high.u32 %v6765
    %v6768 = vmul.u32.u64.compose %v6764, %v6759
    %v6769 = vextract.low.u32 %v6768
    %v6770 = vextract.high.u32 %v6768
    %v6771 = vmul.u32 %v6764, %v6755
    %v6772 = vadd.s32 %v6767, %v6769
    %vm6773 = vc.u32 %v6767, %v6769
    %v6774 = vadd.s32 %v6770, 1
    %v6775 = vsel %vm6773, %v6774, %v6770
    %v6776 = vadd.s32 %v6771, %v6775
    %v6777 = vadd.s32 %v6776, 536870912
    %v6778 = vshrl.u32 %v6777, 30
    %v6779 = vshll.u32 %v6778, 30
    %v6780 = vsub.s32 %v6776, %v6779
    %vm6781 = vcmp.lt.s32.totalorder %v6780, 0
    %v6782 = vsub.s32 0, %v6780
    %v6783 = vsel %vm6781, %v6782, %v6780
    %v6784 = vclz %v6783
    %v6785 = vsub.s32 %v6784, 2
    %vm6786 = vcmp.gt.s32.totalorder 0, %v6785
    %v6787 = vsel %vm6786, 0, %v6785
    %v6788 = vsub.s32 32, %v6787
    %v6789 = vshll.u32 %v6780, %v6787
    %v6790 = vshrl.u32 %v6772, %v6788
    %v6791 = vor.u32 %v6789, %v6790
    %v6792 = vsub.s32 4294967266, %v6787
    %v6793 = vadd.s32 %v6792, 127
    %v6794 = vshll.u32 %v6793, 23
    %v6795 = vor.u32 4788187, %v6794
    %v6796 = vand.u32 2147483647, %v6795
    %v6798 = vcvt.s32.f32 %v6791
    %v6799 = vmul.f32 %v6798, %v6796
    %v6800 = vxor.u32 %v6799, 2147483648
    %v6801 = vsel %vm6718, %v6800, %v6799
    %v6802 = vsub.s32 4, %v6778
    %v6803 = vsel %vm6718, %v6802, %v6778
    %v6804 = vsel %vm6717, %v5757, %v6801
    %v6805 = vsel %vm6717, 0, %v6803
    %v6806 = vcosq.f32.pop %v6804
    %v6807 = vsinq.f32.pop %v6804
    %vm6808 = vweird.f32 %v5757
    %v6809 = vadd.s32 %v6805, 3
    %v6810 = vand.u32 %v6809, 3
    %vm6811 = vcmp.lt.s32.totalorder %v6810, 2
    %vm6812 = vcmp.eq.s32.totalorder %v6810, 0
    %v6813 = vxor.u32 %v6807, 2147483648
    %v6814 = vsel %vm6812, %v6806, %v6813
    %vm6815 = vcmp.eq.s32.totalorder %v6810, 2
    %v6816 = vxor.u32 %v6806, 2147483648
    %v6817 = vsel %vm6815, %v6816, %v6807
    %v6818 = vsel %vm6811, %v6814, %v6817
    %v6819 = vsel %vm6808, nan, %v6818
    %v6820 = vand.u32 2147483647, %v5758
    %vm6821 = vcmp.le.f32.partialorder %v6820, 0.7853982
    %vm6822 = vcmp.lt.s32.totalorder %v5758, 0
    %v6823 = vand.u32 %v5758, 2139095040
    %v6824 = vshrl.u32 %v6823, 23
    %v6825 = vsub.s32 %v6824, 127
    %v6826 = vand.u32 2147483647, %v5758
    %v6827 = vand.u32 %v6826, 8388607
    %v6828 = vor.u32 %v6827, 8388608
    %v6829 = vsub.s32 0, %v6828
    %v6830 = vadd.s32 %v6825, 1
    %vm6831 = vcmp.gt.s32.totalorder %v6830, 0
    %v6832 = vsel %vm6831, %v6830, 0
    %v6833 = vshrl.u32 %v6832, 5
    %v6834 = vand.u32 %v6832, 31
    %v6835 = vsub.s32 32, %v6834
    %v6836 = vshrl.u32 683565275, %v6835
    %v6837 = vshll.u32 683565275, %v6834
    %v6838 = vshrl.u32 2475754826, %v6835
    %v6839 = vor.u32 %v6837, %v6838
    %v6840 = vshll.u32 2475754826, %v6834
    %v6841 = vshrl.u32 2131351028, %v6835
    %v6842 = vor.u32 %v6840, %v6841
    %v6843 = vshll.u32 2131351028, %v6834
    %v6844 = vshrl.u32 2102212464, %v6835
    %v6845 = vor.u32 %v6843, %v6844
    %v6846 = vshll.u32 2102212464, %v6834
    %v6847 = vshrl.u32 920167782, %v6835
    %v6848 = vor.u32 %v6846, %v6847
    %v6849 = vshll.u32 920167782, %v6834
    %v6850 = vshrl.u32 1326507024, %v6835
    %v6851 = vor.u32 %v6849, %v6850
    %vm6852 = vcmp.lt.s32.totalorder %v6833, 1
    %vm6853 = vcmp.lt.s32.totalorder %v6833, 2
    %vm6854 = vcmp.lt.s32.totalorder %v6833, 3
    %vm6855 = vcmp.lt.s32.totalorder %v6833, 4
    %v6856 = vsel %vm6852, %v6836, %v6839
    %v6857 = vsel %vm6855, %v6845, 2102212464
    %v6858 = vsel %vm6854, %v6842, %v6857
    %v6859 = vsel %vm6853, %v6856, %v6858
    %v6860 = vsel %vm6852, %v6839, %v6842
    %v6861 = vsel %vm6855, %v6848, 920167782
    %v6862 = vsel %vm6854, %v6845, %v6861
    %v6863 = vsel %vm6853, %v6860, %v6862
    %v6864 = vsel %vm6852, %v6842, %v6845
    %v6865 = vsel %vm6855, %v6851, 1326507024
    %v6866 = vsel %vm6854, %v6848, %v6865
    %v6867 = vsel %vm6853, %v6864, %v6866
    %v6868 = vshll.u32 %v6828, 8
    %v6869 = vmul.u32.u64.compose %v6868, %v6867
    %v6870 = vextract.low.u32 %v6869
    %v6871 = vextract.high.u32 %v6869
    %v6872 = vmul.u32.u64.compose %v6868, %v6863
    %v6873 = vextract.low.u32 %v6872
    %v6874 = vextract.high.u32 %v6872
    %v6875 = vmul.u32 %v6868, %v6859
    %v6876 = vadd.s32 %v6871, %v6873
    %vm6877 = vc.u32 %v6871, %v6873
    %v6878 = vadd.s32 %v6874, 1
    %v6879 = vsel %vm6877, %v6878, %v6874
    %v6880 = vadd.s32 %v6875, %v6879
    %v6881 = vadd.s32 %v6880, 536870912
    %v6882 = vshrl.u32 %v6881, 30
    %v6883 = vshll.u32 %v6882, 30
    %v6884 = vsub.s32 %v6880, %v6883
    %vm6885 = vcmp.lt.s32.totalorder %v6884, 0
    %v6886 = vsub.s32 0, %v6884
    %v6887 = vsel %vm6885, %v6886, %v6884
    %v6888 = vclz %v6887
    %v6889 = vsub.s32 %v6888, 2
    %vm6890 = vcmp.gt.s32.totalorder 0, %v6889
    %v6891 = vsel %vm6890, 0, %v6889
    %v6892 = vsub.s32 32, %v6891
    %v6893 = vshll.u32 %v6884, %v6891
    %v6894 = vshrl.u32 %v6876, %v6892
    %v6895 = vor.u32 %v6893, %v6894
    %v6896 = vsub.s32 4294967266, %v6891
    %v6897 = vadd.s32 %v6896, 127
    %v6898 = vshll.u32 %v6897, 23
    %v6899 = vor.u32 4788187, %v6898
    %v6900 = vand.u32 2147483647, %v6899
    %v6902 = vcvt.s32.f32 %v6895
    %v6903 = vmul.f32 %v6902, %v6900
    %v6904 = vxor.u32 %v6903, 2147483648
    %v6905 = vsel %vm6822, %v6904, %v6903
    %v6906 = vsub.s32 4, %v6882
    %v6907 = vsel %vm6822, %v6906, %v6882
    %v6908 = vsel %vm6821, %v5758, %v6905
    %v6909 = vsel %vm6821, 0, %v6907
    %v6910 = vcosq.f32.pop %v6908
    %v6911 = vsinq.f32.pop %v6908
    %vm6912 = vweird.f32 %v5758
    %v6913 = vadd.s32 %v6909, 3
    %v6914 = vand.u32 %v6913, 3
    %vm6915 = vcmp.lt.s32.totalorder %v6914, 2
    %vm6916 = vcmp.eq.s32.totalorder %v6914, 0
    %v6917 = vxor.u32 %v6911, 2147483648
    %v6918 = vsel %vm6916, %v6910, %v6917
    %vm6919 = vcmp.eq.s32.totalorder %v6914, 2
    %v6920 = vxor.u32 %v6910, 2147483648
    %v6921 = vsel %vm6919, %v6920, %v6911
    %v6922 = vsel %vm6915, %v6918, %v6921
    %v6923 = vsel %vm6912, nan, %v6922
    %v6924 = vand.u32 2147483647, %v5759
    %vm6925 = vcmp.le.f32.partialorder %v6924, 0.7853982
    %vm6926 = vcmp.lt.s32.totalorder %v5759, 0
    %v6927 = vand.u32 %v5759, 2139095040
    %v6928 = vshrl.u32 %v6927, 23
    %v6929 = vsub.s32 %v6928, 127
    %v6930 = vand.u32 2147483647, %v5759
    %v6931 = vand.u32 %v6930, 8388607
    %v6932 = vor.u32 %v6931, 8388608
    %v6933 = vsub.s32 0, %v6932
    %v6934 = vadd.s32 %v6929, 1
    %vm6935 = vcmp.gt.s32.totalorder %v6934, 0
    %v6936 = vsel %vm6935, %v6934, 0
    %v6937 = vshrl.u32 %v6936, 5
    %v6938 = vand.u32 %v6936, 31
    %v6939 = vsub.s32 32, %v6938
    %v6940 = vshrl.u32 683565275, %v6939
    %v6941 = vshll.u32 683565275, %v6938
    %v6942 = vshrl.u32 2475754826, %v6939
    %v6943 = vor.u32 %v6941, %v6942
    %v6944 = vshll.u32 2475754826, %v6938
    %v6945 = vshrl.u32 2131351028, %v6939
    %v6946 = vor.u32 %v6944, %v6945
    %v6947 = vshll.u32 2131351028, %v6938
    %v6948 = vshrl.u32 2102212464, %v6939
    %v6949 = vor.u32 %v6947, %v6948
    %v6950 = vshll.u32 2102212464, %v6938
    %v6951 = vshrl.u32 920167782, %v6939
    %v6952 = vor.u32 %v6950, %v6951
    %v6953 = vshll.u32 920167782, %v6938
    %v6954 = vshrl.u32 1326507024, %v6939
    %v6955 = vor.u32 %v6953, %v6954
    %vm6956 = vcmp.lt.s32.totalorder %v6937, 1
    %vm6957 = vcmp.lt.s32.totalorder %v6937, 2
    %vm6958 = vcmp.lt.s32.totalorder %v6937, 3
    %vm6959 = vcmp.lt.s32.totalorder %v6937, 4
    %v6960 = vsel %vm6956, %v6940, %v6943
    %v6961 = vsel %vm6959, %v6949, 2102212464
    %v6962 = vsel %vm6958, %v6946, %v6961
    %v6963 = vsel %vm6957, %v6960, %v6962
    %v6964 = vsel %vm6956, %v6943, %v6946
    %v6965 = vsel %vm6959, %v6952, 920167782
    %v6966 = vsel %vm6958, %v6949, %v6965
    %v6967 = vsel %vm6957, %v6964, %v6966
    %v6968 = vsel %vm6956, %v6946, %v6949
    %v6969 = vsel %vm6959, %v6955, 1326507024
    %v6970 = vsel %vm6958, %v6952, %v6969
    %v6971 = vsel %vm6957, %v6968, %v6970
    %v6972 = vshll.u32 %v6932, 8
    %v6973 = vmul.u32.u64.compose %v6972, %v6971
    %v6974 = vextract.low.u32 %v6973
    %v6975 = vextract.high.u32 %v6973
    %v6976 = vmul.u32.u64.compose %v6972, %v6967
    %v6977 = vextract.low.u32 %v6976
    %v6978 = vextract.high.u32 %v6976
    %v6979 = vmul.u32 %v6972, %v6963
    %v6980 = vadd.s32 %v6975, %v6977
    %vm6981 = vc.u32 %v6975, %v6977
    %v6982 = vadd.s32 %v6978, 1
    %v6983 = vsel %vm6981, %v6982, %v6978
    %v6984 = vadd.s32 %v6979, %v6983
    %v6985 = vadd.s32 %v6984, 536870912
    %v6986 = vshrl.u32 %v6985, 30
    %v6987 = vshll.u32 %v6986, 30
    %v6988 = vsub.s32 %v6984, %v6987
    %vm6989 = vcmp.lt.s32.totalorder %v6988, 0
    %v6990 = vsub.s32 0, %v6988
    %v6991 = vsel %vm6989, %v6990, %v6988
    %v6992 = vclz %v6991
    %v6993 = vsub.s32 %v6992, 2
    %vm6994 = vcmp.gt.s32.totalorder 0, %v6993
    %v6995 = vsel %vm6994, 0, %v6993
    %v6996 = vsub.s32 32, %v6995
    %v6997 = vshll.u32 %v6988, %v6995
    %v6998 = vshrl.u32 %v6980, %v6996
    %v6999 = vor.u32 %v6997, %v6998
    %v7000 = vsub.s32 4294967266, %v6995
    %v7001 = vadd.s32 %v7000, 127
    %v7002 = vshll.u32 %v7001, 23
    %v7003 = vor.u32 4788187, %v7002
    %v7004 = vand.u32 2147483647, %v7003
    %v7006 = vcvt.s32.f32 %v6999
    %v7007 = vmul.f32 %v7006, %v7004
    %v7008 = vxor.u32 %v7007, 2147483648
    %v7009 = vsel %vm6926, %v7008, %v7007
    %v7010 = vsub.s32 4, %v6986
    %v7011 = vsel %vm6926, %v7010, %v6986
    %v7012 = vsel %vm6925, %v5759, %v7009
    %v7013 = vsel %vm6925, 0, %v7011
    %v7014 = vcosq.f32.pop %v7012
    %v7015 = vsinq.f32.pop %v7012
    %vm7016 = vweird.f32 %v5759
    %v7017 = vadd.s32 %v7013, 3
    %v7018 = vand.u32 %v7017, 3
    %vm7019 = vcmp.lt.s32.totalorder %v7018, 2
    %vm7020 = vcmp.eq.s32.totalorder %v7018, 0
    %v7021 = vxor.u32 %v7015, 2147483648
    %v7022 = vsel %vm7020, %v7014, %v7021
    %vm7023 = vcmp.eq.s32.totalorder %v7018, 2
    %v7024 = vxor.u32 %v7014, 2147483648
    %v7025 = vsel %vm7023, %v7024, %v7015
    %v7026 = vsel %vm7019, %v7022, %v7025
    %v7027 = vsel %vm7016, nan, %v7026
    %v7028 = vand.u32 2147483647, %v5760
    %vm7029 = vcmp.le.f32.partialorder %v7028, 0.7853982
    %vm7030 = vcmp.lt.s32.totalorder %v5760, 0
    %v7031 = vand.u32 %v5760, 2139095040
    %v7032 = vshrl.u32 %v7031, 23
    %v7033 = vsub.s32 %v7032, 127
    %v7034 = vand.u32 2147483647, %v5760
    %v7035 = vand.u32 %v7034, 8388607
    %v7036 = vor.u32 %v7035, 8388608
    %v7037 = vsub.s32 0, %v7036
    %v7038 = vadd.s32 %v7033, 1
    %vm7039 = vcmp.gt.s32.totalorder %v7038, 0
    %v7040 = vsel %vm7039, %v7038, 0
    %v7041 = vshrl.u32 %v7040, 5
    %v7042 = vand.u32 %v7040, 31
    %v7043 = vsub.s32 32, %v7042
    %v7044 = vshrl.u32 683565275, %v7043
    %v7045 = vshll.u32 683565275, %v7042
    %v7046 = vshrl.u32 2475754826, %v7043
    %v7047 = vor.u32 %v7045, %v7046
    %v7048 = vshll.u32 2475754826, %v7042
    %v7049 = vshrl.u32 2131351028, %v7043
    %v7050 = vor.u32 %v7048, %v7049
    %v7051 = vshll.u32 2131351028, %v7042
    %v7052 = vshrl.u32 2102212464, %v7043
    %v7053 = vor.u32 %v7051, %v7052
    %v7054 = vshll.u32 2102212464, %v7042
    %v7055 = vshrl.u32 920167782, %v7043
    %v7056 = vor.u32 %v7054, %v7055
    %v7057 = vshll.u32 920167782, %v7042
    %v7058 = vshrl.u32 1326507024, %v7043
    %v7059 = vor.u32 %v7057, %v7058
    %vm7060 = vcmp.lt.s32.totalorder %v7041, 1
    %vm7061 = vcmp.lt.s32.totalorder %v7041, 2
    %vm7062 = vcmp.lt.s32.totalorder %v7041, 3
    %vm7063 = vcmp.lt.s32.totalorder %v7041, 4
    %v7064 = vsel %vm7060, %v7044, %v7047
    %v7065 = vsel %vm7063, %v7053, 2102212464
    %v7066 = vsel %vm7062, %v7050, %v7065
    %v7067 = vsel %vm7061, %v7064, %v7066
    %v7068 = vsel %vm7060, %v7047, %v7050
    %v7069 = vsel %vm7063, %v7056, 920167782
    %v7070 = vsel %vm7062, %v7053, %v7069
    %v7071 = vsel %vm7061, %v7068, %v7070
    %v7072 = vsel %vm7060, %v7050, %v7053
    %v7073 = vsel %vm7063, %v7059, 1326507024
    %v7074 = vsel %vm7062, %v7056, %v7073
    %v7075 = vsel %vm7061, %v7072, %v7074
    %v7076 = vshll.u32 %v7036, 8
    %v7077 = vmul.u32.u64.compose %v7076, %v7075
    %v7078 = vextract.low.u32 %v7077
    %v7079 = vextract.high.u32 %v7077
    %v7080 = vmul.u32.u64.compose %v7076, %v7071
    %v7081 = vextract.low.u32 %v7080
    %v7082 = vextract.high.u32 %v7080
    %v7083 = vmul.u32 %v7076, %v7067
    %v7084 = vadd.s32 %v7079, %v7081
    %vm7085 = vc.u32 %v7079, %v7081
    %v7086 = vadd.s32 %v7082, 1
    %v7087 = vsel %vm7085, %v7086, %v7082
    %v7088 = vadd.s32 %v7083, %v7087
    %v7089 = vadd.s32 %v7088, 536870912
    %v7090 = vshrl.u32 %v7089, 30
    %v7091 = vshll.u32 %v7090, 30
    %v7092 = vsub.s32 %v7088, %v7091
    %vm7093 = vcmp.lt.s32.totalorder %v7092, 0
    %v7094 = vsub.s32 0, %v7092
    %v7095 = vsel %vm7093, %v7094, %v7092
    %v7096 = vclz %v7095
    %v7097 = vsub.s32 %v7096, 2
    %vm7098 = vcmp.gt.s32.totalorder 0, %v7097
    %v7099 = vsel %vm7098, 0, %v7097
    %v7100 = vsub.s32 32, %v7099
    %v7101 = vshll.u32 %v7092, %v7099
    %v7102 = vshrl.u32 %v7084, %v7100
    %v7103 = vor.u32 %v7101, %v7102
    %v7104 = vsub.s32 4294967266, %v7099
    %v7105 = vadd.s32 %v7104, 127
    %v7106 = vshll.u32 %v7105, 23
    %v7107 = vor.u32 4788187, %v7106
    %v7108 = vand.u32 2147483647, %v7107
    %v7110 = vcvt.s32.f32 %v7103
    %v7111 = vmul.f32 %v7110, %v7108
    %v7112 = vxor.u32 %v7111, 2147483648
    %v7113 = vsel %vm7030, %v7112, %v7111
    %v7114 = vsub.s32 4, %v7090
    %v7115 = vsel %vm7030, %v7114, %v7090
    %v7116 = vsel %vm7029, %v5760, %v7113
    %v7117 = vsel %vm7029, 0, %v7115
    %v7118 = vcosq.f32.pop %v7116
    %v7119 = vsinq.f32.pop %v7116
    %vm7120 = vweird.f32 %v5760
    %v7121 = vadd.s32 %v7117, 3
    %v7122 = vand.u32 %v7121, 3
    %vm7123 = vcmp.lt.s32.totalorder %v7122, 2
    %vm7124 = vcmp.eq.s32.totalorder %v7122, 0
    %v7125 = vxor.u32 %v7119, 2147483648
    %v7126 = vsel %vm7124, %v7118, %v7125
    %vm7127 = vcmp.eq.s32.totalorder %v7122, 2
    %v7128 = vxor.u32 %v7118, 2147483648
    %v7129 = vsel %vm7127, %v7128, %v7119
    %v7130 = vsel %vm7123, %v7126, %v7129
    %v7131 = vsel %vm7120, nan, %v7130
    %v7132 = vand.u32 2147483647, %v5761
    %vm7133 = vcmp.le.f32.partialorder %v7132, 0.7853982
    %vm7134 = vcmp.lt.s32.totalorder %v5761, 0
    %v7135 = vand.u32 %v5761, 2139095040
    %v7136 = vshrl.u32 %v7135, 23
    %v7137 = vsub.s32 %v7136, 127
    %v7138 = vand.u32 2147483647, %v5761
    %v7139 = vand.u32 %v7138, 8388607
    %v7140 = vor.u32 %v7139, 8388608
    %v7141 = vsub.s32 0, %v7140
    %v7142 = vadd.s32 %v7137, 1
    %vm7143 = vcmp.gt.s32.totalorder %v7142, 0
    %v7144 = vsel %vm7143, %v7142, 0
    %v7145 = vshrl.u32 %v7144, 5
    %v7146 = vand.u32 %v7144, 31
    %v7147 = vsub.s32 32, %v7146
    %v7148 = vshrl.u32 683565275, %v7147
    %v7149 = vshll.u32 683565275, %v7146
    %v7150 = vshrl.u32 2475754826, %v7147
    %v7151 = vor.u32 %v7149, %v7150
    %v7152 = vshll.u32 2475754826, %v7146
    %v7153 = vshrl.u32 2131351028, %v7147
    %v7154 = vor.u32 %v7152, %v7153
    %v7155 = vshll.u32 2131351028, %v7146
    %v7156 = vshrl.u32 2102212464, %v7147
    %v7157 = vor.u32 %v7155, %v7156
    %v7158 = vshll.u32 2102212464, %v7146
    %v7159 = vshrl.u32 920167782, %v7147
    %v7160 = vor.u32 %v7158, %v7159
    %v7161 = vshll.u32 920167782, %v7146
    %v7162 = vshrl.u32 1326507024, %v7147
    %v7163 = vor.u32 %v7161, %v7162
    %vm7164 = vcmp.lt.s32.totalorder %v7145, 1
    %vm7165 = vcmp.lt.s32.totalorder %v7145, 2
    %vm7166 = vcmp.lt.s32.totalorder %v7145, 3
    %vm7167 = vcmp.lt.s32.totalorder %v7145, 4
    %v7168 = vsel %vm7164, %v7148, %v7151
    %v7169 = vsel %vm7167, %v7157, 2102212464
    %v7170 = vsel %vm7166, %v7154, %v7169
    %v7171 = vsel %vm7165, %v7168, %v7170
    %v7172 = vsel %vm7164, %v7151, %v7154
    %v7173 = vsel %vm7167, %v7160, 920167782
    %v7174 = vsel %vm7166, %v7157, %v7173
    %v7175 = vsel %vm7165, %v7172, %v7174
    %v7176 = vsel %vm7164, %v7154, %v7157
    %v7177 = vsel %vm7167, %v7163, 1326507024
    %v7178 = vsel %vm7166, %v7160, %v7177
    %v7179 = vsel %vm7165, %v7176, %v7178
    %v7180 = vshll.u32 %v7140, 8
    %v7181 = vmul.u32.u64.compose %v7180, %v7179
    %v7182 = vextract.low.u32 %v7181
    %v7183 = vextract.high.u32 %v7181
    %v7184 = vmul.u32.u64.compose %v7180, %v7175
    %v7185 = vextract.low.u32 %v7184
    %v7186 = vextract.high.u32 %v7184
    %v7187 = vmul.u32 %v7180, %v7171
    %v7188 = vadd.s32 %v7183, %v7185
    %vm7189 = vc.u32 %v7183, %v7185
    %v7190 = vadd.s32 %v7186, 1
    %v7191 = vsel %vm7189, %v7190, %v7186
    %v7192 = vadd.s32 %v7187, %v7191
    %v7193 = vadd.s32 %v7192, 536870912
    %v7194 = vshrl.u32 %v7193, 30
    %v7195 = vshll.u32 %v7194, 30
    %v7196 = vsub.s32 %v7192, %v7195
    %vm7197 = vcmp.lt.s32.totalorder %v7196, 0
    %v7198 = vsub.s32 0, %v7196
    %v7199 = vsel %vm7197, %v7198, %v7196
    %v7200 = vclz %v7199
    %v7201 = vsub.s32 %v7200, 2
    %vm7202 = vcmp.gt.s32.totalorder 0, %v7201
    %v7203 = vsel %vm7202, 0, %v7201
    %v7204 = vsub.s32 32, %v7203
    %v7205 = vshll.u32 %v7196, %v7203
    %v7206 = vshrl.u32 %v7188, %v7204
    %v7207 = vor.u32 %v7205, %v7206
    %v7208 = vsub.s32 4294967266, %v7203
    %v7209 = vadd.s32 %v7208, 127
    %v7210 = vshll.u32 %v7209, 23
    %v7211 = vor.u32 4788187, %v7210
    %v7212 = vand.u32 2147483647, %v7211
    %v7214 = vcvt.s32.f32 %v7207
    %v7215 = vmul.f32 %v7214, %v7212
    %v7216 = vxor.u32 %v7215, 2147483648
    %v7217 = vsel %vm7134, %v7216, %v7215
    %v7218 = vsub.s32 4, %v7194
    %v7219 = vsel %vm7134, %v7218, %v7194
    %v7220 = vsel %vm7133, %v5761, %v7217
    %v7221 = vsel %vm7133, 0, %v7219
    %v7222 = vcosq.f32.pop %v7220
    %v7223 = vsinq.f32.pop %v7220
    %vm7224 = vweird.f32 %v5761
    %v7225 = vadd.s32 %v7221, 3
    %v7226 = vand.u32 %v7225, 3
    %vm7227 = vcmp.lt.s32.totalorder %v7226, 2
    %vm7228 = vcmp.eq.s32.totalorder %v7226, 0
    %v7229 = vxor.u32 %v7223, 2147483648
    %v7230 = vsel %vm7228, %v7222, %v7229
    %vm7231 = vcmp.eq.s32.totalorder %v7226, 2
    %v7232 = vxor.u32 %v7222, 2147483648
    %v7233 = vsel %vm7231, %v7232, %v7223
    %v7234 = vsel %vm7227, %v7230, %v7233
    %v7235 = vsel %vm7224, nan, %v7234
    %v7236 = vand.u32 2147483647, %v5762
    %vm7237 = vcmp.le.f32.partialorder %v7236, 0.7853982
    %vm7238 = vcmp.lt.s32.totalorder %v5762, 0
    %v7239 = vand.u32 %v5762, 2139095040
    %v7240 = vshrl.u32 %v7239, 23
    %v7241 = vsub.s32 %v7240, 127
    %v7242 = vand.u32 2147483647, %v5762
    %v7243 = vand.u32 %v7242, 8388607
    %v7244 = vor.u32 %v7243, 8388608
    %v7245 = vsub.s32 0, %v7244
    %v7246 = vadd.s32 %v7241, 1
    %vm7247 = vcmp.gt.s32.totalorder %v7246, 0
    %v7248 = vsel %vm7247, %v7246, 0
    %v7249 = vshrl.u32 %v7248, 5
    %v7250 = vand.u32 %v7248, 31
    %v7251 = vsub.s32 32, %v7250
    %v7252 = vshrl.u32 683565275, %v7251
    %v7253 = vshll.u32 683565275, %v7250
    %v7254 = vshrl.u32 2475754826, %v7251
    %v7255 = vor.u32 %v7253, %v7254
    %v7256 = vshll.u32 2475754826, %v7250
    %v7257 = vshrl.u32 2131351028, %v7251
    %v7258 = vor.u32 %v7256, %v7257
    %v7259 = vshll.u32 2131351028, %v7250
    %v7260 = vshrl.u32 2102212464, %v7251
    %v7261 = vor.u32 %v7259, %v7260
    %v7262 = vshll.u32 2102212464, %v7250
    %v7263 = vshrl.u32 920167782, %v7251
    %v7264 = vor.u32 %v7262, %v7263
    %v7265 = vshll.u32 920167782, %v7250
    %v7266 = vshrl.u32 1326507024, %v7251
    %v7267 = vor.u32 %v7265, %v7266
    %vm7268 = vcmp.lt.s32.totalorder %v7249, 1
    %vm7269 = vcmp.lt.s32.totalorder %v7249, 2
    %vm7270 = vcmp.lt.s32.totalorder %v7249, 3
    %vm7271 = vcmp.lt.s32.totalorder %v7249, 4
    %v7272 = vsel %vm7268, %v7252, %v7255
    %v7273 = vsel %vm7271, %v7261, 2102212464
    %v7274 = vsel %vm7270, %v7258, %v7273
    %v7275 = vsel %vm7269, %v7272, %v7274
    %v7276 = vsel %vm7268, %v7255, %v7258
    %v7277 = vsel %vm7271, %v7264, 920167782
    %v7278 = vsel %vm7270, %v7261, %v7277
    %v7279 = vsel %vm7269, %v7276, %v7278
    %v7280 = vsel %vm7268, %v7258, %v7261
    %v7281 = vsel %vm7271, %v7267, 1326507024
    %v7282 = vsel %vm7270, %v7264, %v7281
    %v7283 = vsel %vm7269, %v7280, %v7282
    %v7284 = vshll.u32 %v7244, 8
    %v7285 = vmul.u32.u64.compose %v7284, %v7283
    %v7286 = vextract.low.u32 %v7285
    %v7287 = vextract.high.u32 %v7285
    %v7288 = vmul.u32.u64.compose %v7284, %v7279
    %v7289 = vextract.low.u32 %v7288
    %v7290 = vextract.high.u32 %v7288
    %v7291 = vmul.u32 %v7284, %v7275
    %v7292 = vadd.s32 %v7287, %v7289
    %vm7293 = vc.u32 %v7287, %v7289
    %v7294 = vadd.s32 %v7290, 1
    %v7295 = vsel %vm7293, %v7294, %v7290
    %v7296 = vadd.s32 %v7291, %v7295
    %v7297 = vadd.s32 %v7296, 536870912
    %v7298 = vshrl.u32 %v7297, 30
    %v7299 = vshll.u32 %v7298, 30
    %v7300 = vsub.s32 %v7296, %v7299
    %vm7301 = vcmp.lt.s32.totalorder %v7300, 0
    %v7302 = vsub.s32 0, %v7300
    %v7303 = vsel %vm7301, %v7302, %v7300
    %v7304 = vclz %v7303
    %v7305 = vsub.s32 %v7304, 2
    %vm7306 = vcmp.gt.s32.totalorder 0, %v7305
    %v7307 = vsel %vm7306, 0, %v7305
    %v7308 = vsub.s32 32, %v7307
    %v7309 = vshll.u32 %v7300, %v7307
    %v7310 = vshrl.u32 %v7292, %v7308
    %v7311 = vor.u32 %v7309, %v7310
    %v7312 = vsub.s32 4294967266, %v7307
    %v7313 = vadd.s32 %v7312, 127
    %v7314 = vshll.u32 %v7313, 23
    %v7315 = vor.u32 4788187, %v7314
    %v7316 = vand.u32 2147483647, %v7315
    %v7318 = vcvt.s32.f32 %v7311
    %v7319 = vmul.f32 %v7318, %v7316
    %v7320 = vxor.u32 %v7319, 2147483648
    %v7321 = vsel %vm7238, %v7320, %v7319
    %v7322 = vsub.s32 4, %v7298
    %v7323 = vsel %vm7238, %v7322, %v7298
    %v7324 = vsel %vm7237, %v5762, %v7321
    %v7325 = vsel %vm7237, 0, %v7323
    %v7326 = vcosq.f32.pop %v7324
    %v7327 = vsinq.f32.pop %v7324
    %vm7328 = vweird.f32 %v5762
    %v7329 = vadd.s32 %v7325, 3
    %v7330 = vand.u32 %v7329, 3
    %vm7331 = vcmp.lt.s32.totalorder %v7330, 2
    %vm7332 = vcmp.eq.s32.totalorder %v7330, 0
    %v7333 = vxor.u32 %v7327, 2147483648
    %v7334 = vsel %vm7332, %v7326, %v7333
    %vm7335 = vcmp.eq.s32.totalorder %v7330, 2
    %v7336 = vxor.u32 %v7326, 2147483648
    %v7337 = vsel %vm7335, %v7336, %v7327
    %v7338 = vsel %vm7331, %v7334, %v7337
    %v7339 = vsel %vm7328, nan, %v7338
    %v7340 = vand.u32 2147483647, %v5763
    %vm7341 = vcmp.le.f32.partialorder %v7340, 0.7853982
    %vm7342 = vcmp.lt.s32.totalorder %v5763, 0
    %v7343 = vand.u32 %v5763, 2139095040
    %v7344 = vshrl.u32 %v7343, 23
    %v7345 = vsub.s32 %v7344, 127
    %v7346 = vand.u32 2147483647, %v5763
    %v7347 = vand.u32 %v7346, 8388607
    %v7348 = vor.u32 %v7347, 8388608
    %v7349 = vsub.s32 0, %v7348
    %v7350 = vadd.s32 %v7345, 1
    %vm7351 = vcmp.gt.s32.totalorder %v7350, 0
    %v7352 = vsel %vm7351, %v7350, 0
    %v7353 = vshrl.u32 %v7352, 5
    %v7354 = vand.u32 %v7352, 31
    %v7355 = vsub.s32 32, %v7354
    %v7356 = vshrl.u32 683565275, %v7355
    %v7357 = vshll.u32 683565275, %v7354
    %v7358 = vshrl.u32 2475754826, %v7355
    %v7359 = vor.u32 %v7357, %v7358
    %v7360 = vshll.u32 2475754826, %v7354
    %v7361 = vshrl.u32 2131351028, %v7355
    %v7362 = vor.u32 %v7360, %v7361
    %v7363 = vshll.u32 2131351028, %v7354
    %v7364 = vshrl.u32 2102212464, %v7355
    %v7365 = vor.u32 %v7363, %v7364
    %v7366 = vshll.u32 2102212464, %v7354
    %v7367 = vshrl.u32 920167782, %v7355
    %v7368 = vor.u32 %v7366, %v7367
    %v7369 = vshll.u32 920167782, %v7354
    %v7370 = vshrl.u32 1326507024, %v7355
    %v7371 = vor.u32 %v7369, %v7370
    %vm7372 = vcmp.lt.s32.totalorder %v7353, 1
    %vm7373 = vcmp.lt.s32.totalorder %v7353, 2
    %vm7374 = vcmp.lt.s32.totalorder %v7353, 3
    %vm7375 = vcmp.lt.s32.totalorder %v7353, 4
    %v7376 = vsel %vm7372, %v7356, %v7359
    %v7377 = vsel %vm7375, %v7365, 2102212464
    %v7378 = vsel %vm7374, %v7362, %v7377
    %v7379 = vsel %vm7373, %v7376, %v7378
    %v7380 = vsel %vm7372, %v7359, %v7362
    %v7381 = vsel %vm7375, %v7368, 920167782
    %v7382 = vsel %vm7374, %v7365, %v7381
    %v7383 = vsel %vm7373, %v7380, %v7382
    %v7384 = vsel %vm7372, %v7362, %v7365
    %v7385 = vsel %vm7375, %v7371, 1326507024
    %v7386 = vsel %vm7374, %v7368, %v7385
    %v7387 = vsel %vm7373, %v7384, %v7386
    %v7388 = vshll.u32 %v7348, 8
    %v7389 = vmul.u32.u64.compose %v7388, %v7387
    %v7390 = vextract.low.u32 %v7389
    %v7391 = vextract.high.u32 %v7389
    %v7392 = vmul.u32.u64.compose %v7388, %v7383
    %v7393 = vextract.low.u32 %v7392
    %v7394 = vextract.high.u32 %v7392
    %v7395 = vmul.u32 %v7388, %v7379
    %v7396 = vadd.s32 %v7391, %v7393
    %vm7397 = vc.u32 %v7391, %v7393
    %v7398 = vadd.s32 %v7394, 1
    %v7399 = vsel %vm7397, %v7398, %v7394
    %v7400 = vadd.s32 %v7395, %v7399
    %v7401 = vadd.s32 %v7400, 536870912
    %v7402 = vshrl.u32 %v7401, 30
    %v7403 = vshll.u32 %v7402, 30
    %v7404 = vsub.s32 %v7400, %v7403
    %vm7405 = vcmp.lt.s32.totalorder %v7404, 0
    %v7406 = vsub.s32 0, %v7404
    %v7407 = vsel %vm7405, %v7406, %v7404
    %v7408 = vclz %v7407
    %v7409 = vsub.s32 %v7408, 2
    %vm7410 = vcmp.gt.s32.totalorder 0, %v7409
    %v7411 = vsel %vm7410, 0, %v7409
    %v7412 = vsub.s32 32, %v7411
    %v7413 = vshll.u32 %v7404, %v7411
    %v7414 = vshrl.u32 %v7396, %v7412
    %v7415 = vor.u32 %v7413, %v7414
    %v7416 = vsub.s32 4294967266, %v7411
    %v7417 = vadd.s32 %v7416, 127
    %v7418 = vshll.u32 %v7417, 23
    %v7419 = vor.u32 4788187, %v7418
    %v7420 = vand.u32 2147483647, %v7419
    %v7422 = vcvt.s32.f32 %v7415
    %v7423 = vmul.f32 %v7422, %v7420
    %v7424 = vxor.u32 %v7423, 2147483648
    %v7425 = vsel %vm7342, %v7424, %v7423
    %v7426 = vsub.s32 4, %v7402
    %v7427 = vsel %vm7342, %v7426, %v7402
    %v7428 = vsel %vm7341, %v5763, %v7425
    %v7429 = vsel %vm7341, 0, %v7427
    %v7430 = vcosq.f32.pop %v7428
    %v7431 = vsinq.f32.pop %v7428
    %vm7432 = vweird.f32 %v5763
    %v7433 = vadd.s32 %v7429, 3
    %v7434 = vand.u32 %v7433, 3
    %vm7435 = vcmp.lt.s32.totalorder %v7434, 2
    %vm7436 = vcmp.eq.s32.totalorder %v7434, 0
    %v7437 = vxor.u32 %v7431, 2147483648
    %v7438 = vsel %vm7436, %v7430, %v7437
    %vm7439 = vcmp.eq.s32.totalorder %v7434, 2
    %v7440 = vxor.u32 %v7430, 2147483648
    %v7441 = vsel %vm7439, %v7440, %v7431
    %v7442 = vsel %vm7435, %v7438, %v7441
    %v7443 = vsel %vm7432, nan, %v7442
    %v7444 = vmul.f32 %v5883, %v5764
    %v7445 = vmul.f32 %v5987, %v5765
    %v7446 = vmul.f32 %v6091, %v5766
    %v7447 = vmul.f32 %v6195, %v5767
    %v7448 = vmul.f32 %v6299, %v5768
    %v7449 = vmul.f32 %v6403, %v5769
    %v7450 = vmul.f32 %v6507, %v5770
    %v7451 = vmul.f32 %v6611, %v5771
    %v7452 = vmul.f32 %v6715, %v5772
    %v7453 = vmul.f32 %v6819, %v5773
    %v7454 = vmul.f32 %v6923, %v5774
    %v7455 = vmul.f32 %v7027, %v5775
    %v7456 = vmul.f32 %v7131, %v5776
    %v7457 = vmul.f32 %v7235, %v5777
    %v7458 = vmul.f32 %v7339, %v5778
    %v7459 = vmul.f32 %v7443, %v5779
    %vm7460 = vcmp.lt.f32.partialorder %v4797, 1.0
    %vm7461 = vcmp.lt.f32.partialorder %v4799, 1.0
    %vm7462 = vcmp.lt.f32.partialorder %v4920, 1.0
    %vm7463 = vcmp.lt.f32.partialorder %v4922, 1.0
    %vm7464 = vcmp.lt.f32.partialorder %v5043, 1.0
    %vm7465 = vcmp.lt.f32.partialorder %v5045, 1.0
    %vm7466 = vcmp.lt.f32.partialorder %v5166, 1.0
    %vm7467 = vcmp.lt.f32.partialorder %v5168, 1.0
    %vm7468 = vcmp.lt.f32.partialorder %v5289, 1.0
    %vm7469 = vcmp.lt.f32.partialorder %v5291, 1.0
    %vm7470 = vcmp.lt.f32.partialorder %v5412, 1.0
    %vm7471 = vcmp.lt.f32.partialorder %v5414, 1.0
    %vm7472 = vcmp.lt.f32.partialorder %v5535, 1.0
    %vm7473 = vcmp.lt.f32.partialorder %v5537, 1.0
    %vm7474 = vcmp.lt.f32.partialorder %v5658, 1.0
    %vm7475 = vcmp.lt.f32.partialorder %v5660, 1.0
    %v7476 = vsel %vm7460, %v7444, 0.0
    %v7477 = vsel %vm7461, %v7445, 0.0
    %v7478 = vsel %vm7462, %v7446, 0.0
    %v7479 = vsel %vm7463, %v7447, 0.0
    %v7480 = vsel %vm7464, %v7448, 0.0
    %v7481 = vsel %vm7465, %v7449, 0.0
    %v7482 = vsel %vm7466, %v7450, 0.0
    %v7483 = vsel %vm7467, %v7451, 0.0
    %v7484 = vsel %vm7468, %v7452, 0.0
    %v7485 = vsel %vm7469, %v7453, 0.0
    %v7486 = vsel %vm7470, %v7454, 0.0
    %v7487 = vsel %vm7471, %v7455, 0.0
    %v7488 = vsel %vm7472, %v7456, 0.0
    %v7489 = vsel %vm7473, %v7457, 0.0
    %v7490 = vsel %vm7474, %v7458, 0.0
    %v7491 = vsel %vm7475, %v7459, 0.0
    %7492 = vst [vmem:[#allocation8] sm:$0xff] %v7476
    %7493 = vst [vmem:[#allocation8 + $0x8] sm:$0xff] %v7477
    %7494 = vst [vmem:[#allocation8 + $0x10] sm:$0xff] %v7478
    %7495 = vst [vmem:[#allocation8 + $0x18] sm:$0xff] %v7479
    %7496 = vst [vmem:[#allocation8 + $0x20] sm:$0xff] %v7480
    %7497 = vst [vmem:[#allocation8 + $0x28] sm:$0xff] %v7481
    %7498 = vst [vmem:[#allocation8 + $0x30] sm:$0xff] %v7482
    %7499 = vst [vmem:[#allocation8 + $0x38] sm:$0xff] %v7483
    %7500 = vst [vmem:[#allocation8 + $0x40] sm:$0xff] %v7484
    %7501 = vst [vmem:[#allocation8 + $0x48] sm:$0xff] %v7485
    %7502 = vst [vmem:[#allocation8 + $0x50] sm:$0xff] %v7486
    %7503 = vst [vmem:[#allocation8 + $0x58] sm:$0xff] %v7487
    %7504 = vst [vmem:[#allocation8 + $0x60] sm:$0xff] %v7488
    %7505 = vst [vmem:[#allocation8 + $0x68] sm:$0xff] %v7489
    %7506 = vst [vmem:[#allocation8 + $0x70] sm:$0xff] %v7490
    %7507 = vst [vmem:[#allocation8 + $0x78] sm:$0xff] %v7491
    // Predicated region
    $region26: #{tpu_custom_call.1} parent=1 // pred_check
      _
    $region27: #{tpu_custom_call.1} parent=1 // pred_check_branch
      %7509 = sbr.rel (0) target = $region29
    $region28: #{tpu_custom_call.1} parent=1 // pred_region
      %s7511 = ssub.s32 2048, 2048
      %7512 = vsyncadd [#allocation4], %s7511
      %s7514 = sshll.u32 [#allocation8], 4
      %s7515 = int_to_ptr.vmem [resolvable:$true] %s7514
      %7517 = dma.vmem_to_hbm [thread:$0]  %s7515, 2048, %s3, [#allocation4]
    $region29: #{tpu_custom_call.1} parent=1 // pred_fallthru
      _
    // Predicated region
    $region30: #{tpu_custom_call.1} parent=1 // pred_check
      _
    $region31: #{tpu_custom_call.1} parent=1 // pred_check_branch
      %7519 = sbr.rel (0) target = $region33
    $region32: #{tpu_custom_call.1} parent=1 // pred_region
      %7520 = dma.done [#allocation4], 2048
    $region33: #{tpu_custom_call.1} parent=1 // pred_fallthru
      _
    %7521 = vsyncpa [#allocation3], 1
    %7522 = vsyncpa [#allocation6], 1
    %7523 = vsyncpa [#allocation4], 1

</llo_original>
